<compile_context>
chip_gen: v5e
topology: v5e:2x2
jax: 0.10.0
libtpu: 0.0.40
codegen_flags: <defaults>
</compile_context>

<pallas_src>
import functools

import jax
import jax.numpy as jnp
import numpy as np
from jax.experimental import pallas as pl
from jax.experimental.pallas import tpu as pltpu


_TAPS = tuple((dh, dw) for dh in (-1, 0, 1) for dw in (-1, 0, 1))  # t = (dh+1)*3 + (dw+1)


def _meta_aec_kernel(x_ref, masks_ref, we_ref, be_ref, wd_ref, bd_ref,
                     wc_ref, bc_ref, xhat_ref, logits_ref, xenc_ref,
                     *, B, H, W, Cin, Cenc, classes):
    """Fused encoder->decoder / encoder->classifier for the whole (small) batch.

    Block shapes (single grid step):
      x_ref      : (B*Cin, H*W)          flattened NCHW images, batch*channel on sublanes
      masks_ref  : (9, 1, H*W)           0/1 halo masks, one per 3x3 tap
      we_ref     : (9, Cin, Cenc, 1)     encoder weights, tap-major, Cout on sublanes
      be_ref     : (Cenc, 1)
      wd_ref     : (9, Cenc, Cin, 1)     decoder weights
      bd_ref     : (Cin, 1)
      wc_ref     : (classes, Cenc, H*W)  classifier weights in NCHW flatten order
      bc_ref     : (1, classes)
      xhat_ref   : (B*Cin, H*W)
      logits_ref : (B, classes)
      xenc_ref   : (B*Cenc, H*W)
    """
    HW = H * W

    def conv3x3(inp, w_ref_, b_ref_, cin, cout, relu):
        # inp: (B*cin, HW) -> (B*cout, HW)
        # out[b*cout + o, p] = b[o] + sum_{tap,i} w[tap, i, o] * inp[b*cin + i, p + s(tap)]
        bias_tile = jnp.broadcast_to(b_ref_[...], (cout, HW))   # hoisted, shared by all b
        accs = [bias_tile] * B                                  # bias folded into acc init
        for t, (dh, dw) in enumerate(_TAPS):
            s = dh * W + dw                          # flattened shift of this tap
            if s == 0:
                xs = inp
            else:
                # One lane rotation on the XLU per tap, shared across the whole batch;
                # wrap-around / zero-padding halo positions killed by the static 0/1 mask.
                xs = pltpu.roll(inp, shift=(-s) % HW, axis=1)
                xs = xs * masks_ref[t]               # (1, HW) -> sublane broadcast
            for ci in range(cin):
                wcol = w_ref_[t, ci]                 # (cout, 1) -> lane broadcast (load once)
                for b in range(B):
                    row = xs[b * cin + ci: b * cin + ci + 1, :]   # (1, HW)
                    accs[b] = accs[b] + wcol * row   # VPU broadcast-MAC, lane-dense
        out = jnp.concatenate(accs, axis=0) if B > 1 else accs[0]   # (B*cout, HW)
        if relu:
            out = jnp.maximum(out, 0.0)
        return out

    x = x_ref[...]                                                  # (B*Cin, HW)

    enc = conv3x3(x, we_ref, be_ref, Cin, Cenc, relu=True)          # encoder, stays in VMEM
    xenc_ref[...] = enc
    xhat_ref[...] = conv3x3(enc, wd_ref, bd_ref, Cenc, Cin, relu=False)  # decoder

    # Classifier on the VMEM-resident encoding: logits[b, c] = sum(enc_b * wc[c]) + bc[c]
    rows = []
    for b in range(B):
        enc_b = enc[b * Cenc:(b + 1) * Cenc, :]                     # (Cenc, HW), 8-aligned
        cols = []
        for c in range(classes):
            prod = enc_b * wc_ref[c]                                # (Cenc, HW) VPU mul
            lane_sum = jnp.sum(prod, axis=1, keepdims=True)         # (Cenc, 1)  lane reduce
            cols.append(jnp.sum(lane_sum, axis=0, keepdims=True))   # (1, 1)     sublane reduce
        rows.append(jnp.concatenate(cols, axis=1) + bc_ref[...])    # (1, classes)
    logits_ref[...] = jnp.concatenate(rows, axis=0) if B > 1 else rows[0]


def _make_tap_masks(H, W):
    """Static 0/1 validity mask per 3x3 tap over the flattened H*W positions."""
    p = np.arange(H * W)
    h, w = p // W, p % W
    masks = []
    for dh, dw in _TAPS:
        valid = (h + dh >= 0) & (h + dh < H) & (w + dw >= 0) & (w + dw < W)
        masks.append(valid.astype(np.float32))
    return np.stack(masks)[:, None, :]                              # (9, 1, H*W)


def meta_aec_forward(x_nchw, params):
    """x_nchw: (B, Cin, H, W) float32.  Returns (x_hat, x_out, x_enc) like MetaAEC.forward."""
    B, Cin, H, W = x_nchw.shape
    HW = H * W
    Cenc = params["w_enc"].shape[2]
    classes = params["w_cls"].shape[0]

    x2d = x_nchw.reshape(B * Cin, HW)              # contiguous merge -> free, lane-dense
    masks = jnp.asarray(_make_tap_masks(H, W))

    kern = functools.partial(_meta_aec_kernel, B=B, H=H, W=W, Cin=Cin,
                             Cenc=Cenc, classes=classes)

    x_hat, logits, x_enc = pl.pallas_call(
        kern,
        out_shape=(
            jax.ShapeDtypeStruct((B * Cin, HW), jnp.float32),       # x_hat (flattened)
            jax.ShapeDtypeStruct((B, classes), jnp.float32),        # x_out
            jax.ShapeDtypeStruct((B * Cenc, HW), jnp.float32),      # x_enc (flattened)
        ),
        grid_spec=pltpu.PrefetchScalarGridSpec(
            num_scalar_prefetch=0,
            grid=(1,),                                              # whole batch in one step
            in_specs=[
                pl.BlockSpec((B * Cin, HW), lambda i: (0, 0)),
                pl.BlockSpec((9, 1, HW), lambda i: (0, 0, 0)),
                pl.BlockSpec((9, Cin, Cenc, 1), lambda i: (0, 0, 0, 0)),
                pl.BlockSpec((Cenc, 1), lambda i: (0, 0)),
                pl.BlockSpec((9, Cenc, Cin, 1), lambda i: (0, 0, 0, 0)),
                pl.BlockSpec((Cin, 1), lambda i: (0, 0)),
                pl.BlockSpec((classes, Cenc, HW), lambda i: (0, 0, 0)),
                pl.BlockSpec((1, classes), lambda i: (0, 0)),
            ],
            out_specs=[
                pl.BlockSpec((B * Cin, HW), lambda i: (0, 0)),
                pl.BlockSpec((B, classes), lambda i: (0, 0)),
                pl.BlockSpec((B * Cenc, HW), lambda i: (0, 0)),
            ],
        ),
        compiler_params=pltpu.CompilerParams(
            dimension_semantics=("arbitrary",)),
    )(x2d, masks, params["w_enc"], params["b_enc"], params["w_dec"],
      params["b_dec"], params["w_cls"], params["b_cls"])

    return (x_hat.reshape(B, Cin, H, W), logits, x_enc.reshape(B, Cenc, H, W))


def prepare_params(w_enc_oihw, b_enc, w_dec_oihw, b_dec, w_cls, b_cls):
    """One-time conversion of PyTorch-layout weights into the kernel's layouts."""
    def conv_w(w_oihw):                            # (O, I, 3, 3) -> (9, I, O, 1)
        o, i = w_oihw.shape[:2]
        return jnp.transpose(w_oihw, (2, 3, 1, 0)).reshape(9, i, o)[..., None]
    cenc = w_enc_oihw.shape[0]
    cin = w_dec_oihw.shape[0]
    classes = w_cls.shape[0]
    return {
        "w_enc": conv_w(w_enc_oihw),
        "b_enc": b_enc.reshape(cenc, 1),
        "w_dec": conv_w(w_dec_oihw),
        "b_dec": b_dec.reshape(cin, 1),
        "w_cls": w_cls.reshape(classes, cenc, -1),  # NCHW flatten order preserved
        "b_cls": b_cls.reshape(1, classes),
    }


# ----------------------------------------------------------------------------
# Pure-JAX reference (correctness check)
# ----------------------------------------------------------------------------
def meta_aec_ref(x_nchw, w_enc, b_enc, w_dec, b_dec, w_cls, b_cls):
    def conv(x, w, b):
        y = jax.lax.conv_general_dilated(
            x, w, window_strides=(1, 1), padding="SAME",
            dimension_numbers=("NCHW", "OIHW", "NCHW"))
        return y + b[None, :, None, None]
    enc = jnp.maximum(conv(x_nchw, w_enc, b_enc), 0.0)
    dec = conv(enc, w_dec, b_dec)
    logits = enc.reshape(enc.shape[0], -1) @ w_cls.T + b_cls
    return dec, logits, enc


if __name__ == "__main__":
    B, Cin, H, W = 2, 4, 16, 16
    Cenc, classes = 8, 4

    key = jax.random.PRNGKey(0)
    k_x, k_we, k_be, k_wd, k_bd, k_wc, k_bc = jax.random.split(key, 7)

    x = jax.random.normal(k_x, (B, Cin, H, W), jnp.float32)          # NCHW input

    # Deterministic synthetic parameters in PyTorch shapes.
    w_enc = jax.random.normal(k_we, (Cenc, Cin, 3, 3), jnp.float32) * 0.1
    b_enc = jax.random.normal(k_be, (Cenc,), jnp.float32) * 0.1
    w_dec = jax.random.normal(k_wd, (Cin, Cenc, 3, 3), jnp.float32) * 0.1
    b_dec = jax.random.normal(k_bd, (Cin,), jnp.float32) * 0.1
    w_cls = jax.random.normal(k_wc, (classes, Cenc * H * W), jnp.float32) * 0.02
    b_cls = jax.random.normal(k_bc, (classes,), jnp.float32) * 0.1

    params = prepare_params(w_enc, b_enc, w_dec, b_dec, w_cls, b_cls)

    fwd = jax.jit(meta_aec_forward)
    x_hat, x_out, x_enc = jax.block_until_ready(fwd(x, params))

    r_hat, r_out, r_enc = jax.block_until_ready(
        meta_aec_ref(x, w_enc, b_enc, w_dec, b_dec, w_cls, b_cls))

    assert x_hat.shape == (B, Cin, H, W)
    assert x_out.shape == (B, classes)
    assert x_enc.shape == (B, Cenc, H, W)
    np.testing.assert_allclose(np.asarray(x_enc), np.asarray(r_enc), rtol=1e-3, atol=1e-3)
    np.testing.assert_allclose(np.asarray(x_hat), np.asarray(r_hat), rtol=1e-3, atol=1e-3)
    np.testing.assert_allclose(np.asarray(x_out), np.asarray(r_out), rtol=1e-3, atol=1e-3)

    print("KERNEL_OK")
</pallas_src>

<mosaic_0001>
module attributes {stable_mosaic.version = 11 : i64} {
  func.func @_meta_aec_kernel(%arg0: i32, %arg1: memref<8x256xf32, #tpu.memory_space<vmem>>, %arg2: memref<9x1x256xf32, #tpu.memory_space<vmem>>, %arg3: memref<9x4x8x1xf32, #tpu.memory_space<vmem>>, %arg4: memref<8x1xf32, #tpu.memory_space<vmem>>, %arg5: memref<9x8x4x1xf32, #tpu.memory_space<vmem>>, %arg6: memref<4x1xf32, #tpu.memory_space<vmem>>, %arg7: memref<4x8x256xf32, #tpu.memory_space<vmem>>, %arg8: memref<1x4xf32, #tpu.memory_space<vmem>>, %arg9: memref<8x256xf32, #tpu.memory_space<vmem>>, %arg10: memref<2x4xf32, #tpu.memory_space<vmem>>, %arg11: memref<16x256xf32, #tpu.memory_space<vmem>>) attributes {dimension_semantics = [#tpu.dimension_semantics<arbitrary>], iteration_bounds = array<i64: 1>, scalar_prefetch = 0 : i64, scratch_operands = 0 : i64, tpu.core_type = #tpu.core_type<tc>, window_params = [{pipeline_mode = #tpu.pipeline_mode<synchronous>, transform_indices = @transform_0, window_bounds = array<i64: 8, 256>}, {pipeline_mode = #tpu.pipeline_mode<synchronous>, transform_indices = @transform_1, window_bounds = array<i64: 9, 1, 256>}, {pipeline_mode = #tpu.pipeline_mode<synchronous>, transform_indices = @transform_2, window_bounds = array<i64: 9, 4, 8, 1>}, {pipeline_mode = #tpu.pipeline_mode<synchronous>, transform_indices = @transform_3, window_bounds = array<i64: 8, 1>}, {pipeline_mode = #tpu.pipeline_mode<synchronous>, transform_indices = @transform_4, window_bounds = array<i64: 9, 8, 4, 1>}, {pipeline_mode = #tpu.pipeline_mode<synchronous>, transform_indices = @transform_5, window_bounds = array<i64: 4, 1>}, {pipeline_mode = #tpu.pipeline_mode<synchronous>, transform_indices = @transform_6, window_bounds = array<i64: 4, 8, 256>}, {pipeline_mode = #tpu.pipeline_mode<synchronous>, transform_indices = @transform_7, window_bounds = array<i64: 1, 4>}, {pipeline_mode = #tpu.pipeline_mode<synchronous>, transform_indices = @transform_8, window_bounds = array<i64: 8, 256>}, {pipeline_mode = #tpu.pipeline_mode<synchronous>, transform_indices = @transform_9, window_bounds = array<i64: 2, 4>}, {pipeline_mode = #tpu.pipeline_mode<synchronous>, transform_indices = @transform_10, window_bounds = array<i64: 16, 256>}]} {
    %c0 = arith.constant 0 : index
    %c0_0 = arith.constant 0 : index
    %0 = vector.load %arg1[%c0, %c0_0] : memref<8x256xf32, #tpu.memory_space<vmem>>, vector<8x256xf32>
    %c0_1 = arith.constant 0 : index
    %c0_2 = arith.constant 0 : index
    %1 = vector.load %arg4[%c0_1, %c0_2] : memref<8x1xf32, #tpu.memory_space<vmem>>, vector<8x1xf32>
    %2 = vector.shape_cast %1 : vector<8x1xf32> to vector<8x1xf32>
    %3 = vector.broadcast %2 : vector<8x1xf32> to vector<8x256xf32>
    %c17_i32 = arith.constant 17 : i32
    %4 = tpu.dynamic_rotate %0 by %c17_i32 dim 1 : vector<8x256xf32>, i32 -> vector<8x256xf32>
    %c0_3 = arith.constant 0 : index
    %c0_4 = arith.constant 0 : index
    %c0_5 = arith.constant 0 : index
    %5 = vector.load %arg2[%c0_3, %c0_4, %c0_5] : memref<9x1x256xf32, #tpu.memory_space<vmem>>, vector<1x1x256xf32>
    %6 = vector.shape_cast %5 : vector<1x1x256xf32> to vector<1x256xf32>
    %7 = vector.broadcast %6 : vector<1x256xf32> to vector<8x256xf32>
    %8 = arith.mulf %4, %7 : vector<8x256xf32>
    %c0_6 = arith.constant 0 : index
    %c0_7 = arith.constant 0 : index
    %c0_8 = arith.constant 0 : index
    %c0_9 = arith.constant 0 : index
    %9 = vector.load %arg3[%c0_6, %c0_7, %c0_8, %c0_9] : memref<9x4x8x1xf32, #tpu.memory_space<vmem>>, vector<1x1x8x1xf32>
    %10 = vector.shape_cast %9 : vector<1x1x8x1xf32> to vector<8x1xf32>
    %11 = vector.extract_strided_slice %8 {offsets = [0, 0], sizes = [1, 256], strides = [1, 1]} : vector<8x256xf32> to vector<1x256xf32>
    %12 = vector.broadcast %10 : vector<8x1xf32> to vector<8x256xf32>
    %13 = vector.broadcast %11 : vector<1x256xf32> to vector<8x256xf32>
    %14 = arith.mulf %12, %13 : vector<8x256xf32>
    %15 = arith.addf %3, %14 : vector<8x256xf32>
    %16 = vector.extract_strided_slice %8 {offsets = [4, 0], sizes = [1, 256], strides = [1, 1]} : vector<8x256xf32> to vector<1x256xf32>
    %17 = vector.broadcast %10 : vector<8x1xf32> to vector<8x256xf32>
    %18 = vector.broadcast %16 : vector<1x256xf32> to vector<8x256xf32>
    %19 = arith.mulf %17, %18 : vector<8x256xf32>
    %20 = arith.addf %3, %19 : vector<8x256xf32>
    %c0_10 = arith.constant 0 : index
    %c1 = arith.constant 1 : index
    %c0_11 = arith.constant 0 : index
    %c0_12 = arith.constant 0 : index
    %21 = vector.load %arg3[%c0_10, %c1, %c0_11, %c0_12] : memref<9x4x8x1xf32, #tpu.memory_space<vmem>>, vector<1x1x8x1xf32>
    %22 = vector.shape_cast %21 : vector<1x1x8x1xf32> to vector<8x1xf32>
    %23 = vector.extract_strided_slice %8 {offsets = [1, 0], sizes = [1, 256], strides = [1, 1]} : vector<8x256xf32> to vector<1x256xf32>
    %24 = vector.broadcast %22 : vector<8x1xf32> to vector<8x256xf32>
    %25 = vector.broadcast %23 : vector<1x256xf32> to vector<8x256xf32>
    %26 = arith.mulf %24, %25 : vector<8x256xf32>
    %27 = arith.addf %15, %26 : vector<8x256xf32>
    %28 = vector.extract_strided_slice %8 {offsets = [5, 0], sizes = [1, 256], strides = [1, 1]} : vector<8x256xf32> to vector<1x256xf32>
    %29 = vector.broadcast %22 : vector<8x1xf32> to vector<8x256xf32>
    %30 = vector.broadcast %28 : vector<1x256xf32> to vector<8x256xf32>
    %31 = arith.mulf %29, %30 : vector<8x256xf32>
    %32 = arith.addf %20, %31 : vector<8x256xf32>
    %c0_13 = arith.constant 0 : index
    %c2 = arith.constant 2 : index
    %c0_14 = arith.constant 0 : index
    %c0_15 = arith.constant 0 : index
    %33 = vector.load %arg3[%c0_13, %c2, %c0_14, %c0_15] : memref<9x4x8x1xf32, #tpu.memory_space<vmem>>, vector<1x1x8x1xf32>
    %34 = vector.shape_cast %33 : vector<1x1x8x1xf32> to vector<8x1xf32>
    %35 = vector.extract_strided_slice %8 {offsets = [2, 0], sizes = [1, 256], strides = [1, 1]} : vector<8x256xf32> to vector<1x256xf32>
    %36 = vector.broadcast %34 : vector<8x1xf32> to vector<8x256xf32>
    %37 = vector.broadcast %35 : vector<1x256xf32> to vector<8x256xf32>
    %38 = arith.mulf %36, %37 : vector<8x256xf32>
    %39 = arith.addf %27, %38 : vector<8x256xf32>
    %40 = vector.extract_strided_slice %8 {offsets = [6, 0], sizes = [1, 256], strides = [1, 1]} : vector<8x256xf32> to vector<1x256xf32>
    %41 = vector.broadcast %34 : vector<8x1xf32> to vector<8x256xf32>
    %42 = vector.broadcast %40 : vector<1x256xf32> to vector<8x256xf32>
    %43 = arith.mulf %41, %42 : vector<8x256xf32>
    %44 = arith.addf %32, %43 : vector<8x256xf32>
    %c0_16 = arith.constant 0 : index
    %c3 = arith.constant 3 : index
    %c0_17 = arith.constant 0 : index
    %c0_18 = arith.constant 0 : index
    %45 = vector.load %arg3[%c0_16, %c3, %c0_17, %c0_18] : memref<9x4x8x1xf32, #tpu.memory_space<vmem>>, vector<1x1x8x1xf32>
    %46 = vector.shape_cast %45 : vector<1x1x8x1xf32> to vector<8x1xf32>
    %47 = vector.extract_strided_slice %8 {offsets = [3, 0], sizes = [1, 256], strides = [1, 1]} : vector<8x256xf32> to vector<1x256xf32>
    %48 = vector.broadcast %46 : vector<8x1xf32> to vector<8x256xf32>
    %49 = vector.broadcast %47 : vector<1x256xf32> to vector<8x256xf32>
    %50 = arith.mulf %48, %49 : vector<8x256xf32>
    %51 = arith.addf %39, %50 : vector<8x256xf32>
    %52 = vector.extract_strided_slice %8 {offsets = [7, 0], sizes = [1, 256], strides = [1, 1]} : vector<8x256xf32> to vector<1x256xf32>
    %53 = vector.broadcast %46 : vector<8x1xf32> to vector<8x256xf32>
    %54 = vector.broadcast %52 : vector<1x256xf32> to vector<8x256xf32>
    %55 = arith.mulf %53, %54 : vector<8x256xf32>
    %56 = arith.addf %44, %55 : vector<8x256xf32>
    %c16_i32 = arith.constant 16 : i32
    %57 = tpu.dynamic_rotate %0 by %c16_i32 dim 1 : vector<8x256xf32>, i32 -> vector<8x256xf32>
    %c1_19 = arith.constant 1 : index
    %c0_20 = arith.constant 0 : index
    %c0_21 = arith.constant 0 : index
    %58 = vector.load %arg2[%c1_19, %c0_20, %c0_21] : memref<9x1x256xf32, #tpu.memory_space<vmem>>, vector<1x1x256xf32>
    %59 = vector.shape_cast %58 : vector<1x1x256xf32> to vector<1x256xf32>
    %60 = vector.broadcast %59 : vector<1x256xf32> to vector<8x256xf32>
    %61 = arith.mulf %57, %60 : vector<8x256xf32>
    %c1_22 = arith.constant 1 : index
    %c0_23 = arith.constant 0 : index
    %c0_24 = arith.constant 0 : index
    %c0_25 = arith.constant 0 : index
    %62 = vector.load %arg3[%c1_22, %c0_23, %c0_24, %c0_25] : memref<9x4x8x1xf32, #tpu.memory_space<vmem>>, vector<1x1x8x1xf32>
    %63 = vector.shape_cast %62 : vector<1x1x8x1xf32> to vector<8x1xf32>
    %64 = vector.extract_strided_slice %61 {offsets = [0, 0], sizes = [1, 256], strides = [1, 1]} : vector<8x256xf32> to vector<1x256xf32>
    %65 = vector.broadcast %63 : vector<8x1xf32> to vector<8x256xf32>
    %66 = vector.broadcast %64 : vector<1x256xf32> to vector<8x256xf32>
    %67 = arith.mulf %65, %66 : vector<8x256xf32>
    %68 = arith.addf %51, %67 : vector<8x256xf32>
    %69 = vector.extract_strided_slice %61 {offsets = [4, 0], sizes = [1, 256], strides = [1, 1]} : vector<8x256xf32> to vector<1x256xf32>
    %70 = vector.broadcast %63 : vector<8x1xf32> to vector<8x256xf32>
    %71 = vector.broadcast %69 : vector<1x256xf32> to vector<8x256xf32>
    %72 = arith.mulf %70, %71 : vector<8x256xf32>
    %73 = arith.addf %56, %72 : vector<8x256xf32>
    %c1_26 = arith.constant 1 : index
    %c1_27 = arith.constant 1 : index
    %c0_28 = arith.constant 0 : index
    %c0_29 = arith.constant 0 : index
    %74 = vector.load %arg3[%c1_26, %c1_27, %c0_28, %c0_29] : memref<9x4x8x1xf32, #tpu.memory_space<vmem>>, vector<1x1x8x1xf32>
    %75 = vector.shape_cast %74 : vector<1x1x8x1xf32> to vector<8x1xf32>
    %76 = vector.extract_strided_slice %61 {offsets = [1, 0], sizes = [1, 256], strides = [1, 1]} : vector<8x256xf32> to vector<1x256xf32>
    %77 = vector.broadcast %75 : vector<8x1xf32> to vector<8x256xf32>
    %78 = vector.broadcast %76 : vector<1x256xf32> to vector<8x256xf32>
    %79 = arith.mulf %77, %78 : vector<8x256xf32>
    %80 = arith.addf %68, %79 : vector<8x256xf32>
    %81 = vector.extract_strided_slice %61 {offsets = [5, 0], sizes = [1, 256], strides = [1, 1]} : vector<8x256xf32> to vector<1x256xf32>
    %82 = vector.broadcast %75 : vector<8x1xf32> to vector<8x256xf32>
    %83 = vector.broadcast %81 : vector<1x256xf32> to vector<8x256xf32>
    %84 = arith.mulf %82, %83 : vector<8x256xf32>
    %85 = arith.addf %73, %84 : vector<8x256xf32>
    %c1_30 = arith.constant 1 : index
    %c2_31 = arith.constant 2 : index
    %c0_32 = arith.constant 0 : index
    %c0_33 = arith.constant 0 : index
    %86 = vector.load %arg3[%c1_30, %c2_31, %c0_32, %c0_33] : memref<9x4x8x1xf32, #tpu.memory_space<vmem>>, vector<1x1x8x1xf32>
    %87 = vector.shape_cast %86 : vector<1x1x8x1xf32> to vector<8x1xf32>
    %88 = vector.extract_strided_slice %61 {offsets = [2, 0], sizes = [1, 256], strides = [1, 1]} : vector<8x256xf32> to vector<1x256xf32>
    %89 = vector.broadcast %87 : vector<8x1xf32> to vector<8x256xf32>
    %90 = vector.broadcast %88 : vector<1x256xf32> to vector<8x256xf32>
    %91 = arith.mulf %89, %90 : vector<8x256xf32>
    %92 = arith.addf %80, %91 : vector<8x256xf32>
    %93 = vector.extract_strided_slice %61 {offsets = [6, 0], sizes = [1, 256], strides = [1, 1]} : vector<8x256xf32> to vector<1x256xf32>
    %94 = vector.broadcast %87 : vector<8x1xf32> to vector<8x256xf32>
    %95 = vector.broadcast %93 : vector<1x256xf32> to vector<8x256xf32>
    %96 = arith.mulf %94, %95 : vector<8x256xf32>
    %97 = arith.addf %85, %96 : vector<8x256xf32>
    %c1_34 = arith.constant 1 : index
    %c3_35 = arith.constant 3 : index
    %c0_36 = arith.constant 0 : index
    %c0_37 = arith.constant 0 : index
    %98 = vector.load %arg3[%c1_34, %c3_35, %c0_36, %c0_37] : memref<9x4x8x1xf32, #tpu.memory_space<vmem>>, vector<1x1x8x1xf32>
    %99 = vector.shape_cast %98 : vector<1x1x8x1xf32> to vector<8x1xf32>
    %100 = vector.extract_strided_slice %61 {offsets = [3, 0], sizes = [1, 256], strides = [1, 1]} : vector<8x256xf32> to vector<1x256xf32>
    %101 = vector.broadcast %99 : vector<8x1xf32> to vector<8x256xf32>
    %102 = vector.broadcast %100 : vector<1x256xf32> to vector<8x256xf32>
    %103 = arith.mulf %101, %102 : vector<8x256xf32>
    %104 = arith.addf %92, %103 : vector<8x256xf32>
    %105 = vector.extract_strided_slice %61 {offsets = [7, 0], sizes = [1, 256], strides = [1, 1]} : vector<8x256xf32> to vector<1x256xf32>
    %106 = vector.broadcast %99 : vector<8x1xf32> to vector<8x256xf32>
    %107 = vector.broadcast %105 : vector<1x256xf32> to vector<8x256xf32>
    %108 = arith.mulf %106, %107 : vector<8x256xf32>
    %109 = arith.addf %97, %108 : vector<8x256xf32>
    %c15_i32 = arith.constant 15 : i32
    %110 = tpu.dynamic_rotate %0 by %c15_i32 dim 1 : vector<8x256xf32>, i32 -> vector<8x256xf32>
    %c2_38 = arith.constant 2 : index
    %c0_39 = arith.constant 0 : index
    %c0_40 = arith.constant 0 : index
    %111 = vector.load %arg2[%c2_38, %c0_39, %c0_40] : memref<9x1x256xf32, #tpu.memory_space<vmem>>, vector<1x1x256xf32>
    %112 = vector.shape_cast %111 : vector<1x1x256xf32> to vector<1x256xf32>
    %113 = vector.broadcast %112 : vector<1x256xf32> to vector<8x256xf32>
    %114 = arith.mulf %110, %113 : vector<8x256xf32>
    %c2_41 = arith.constant 2 : index
    %c0_42 = arith.constant 0 : index
    %c0_43 = arith.constant 0 : index
    %c0_44 = arith.constant 0 : index
    %115 = vector.load %arg3[%c2_41, %c0_42, %c0_43, %c0_44] : memref<9x4x8x1xf32, #tpu.memory_space<vmem>>, vector<1x1x8x1xf32>
    %116 = vector.shape_cast %115 : vector<1x1x8x1xf32> to vector<8x1xf32>
    %117 = vector.extract_strided_slice %114 {offsets = [0, 0], sizes = [1, 256], strides = [1, 1]} : vector<8x256xf32> to vector<1x256xf32>
    %118 = vector.broadcast %116 : vector<8x1xf32> to vector<8x256xf32>
    %119 = vector.broadcast %117 : vector<1x256xf32> to vector<8x256xf32>
    %120 = arith.mulf %118, %119 : vector<8x256xf32>
    %121 = arith.addf %104, %120 : vector<8x256xf32>
    %122 = vector.extract_strided_slice %114 {offsets = [4, 0], sizes = [1, 256], strides = [1, 1]} : vector<8x256xf32> to vector<1x256xf32>
    %123 = vector.broadcast %116 : vector<8x1xf32> to vector<8x256xf32>
    %124 = vector.broadcast %122 : vector<1x256xf32> to vector<8x256xf32>
    %125 = arith.mulf %123, %124 : vector<8x256xf32>
    %126 = arith.addf %109, %125 : vector<8x256xf32>
    %c2_45 = arith.constant 2 : index
    %c1_46 = arith.constant 1 : index
    %c0_47 = arith.constant 0 : index
    %c0_48 = arith.constant 0 : index
    %127 = vector.load %arg3[%c2_45, %c1_46, %c0_47, %c0_48] : memref<9x4x8x1xf32, #tpu.memory_space<vmem>>, vector<1x1x8x1xf32>
    %128 = vector.shape_cast %127 : vector<1x1x8x1xf32> to vector<8x1xf32>
    %129 = vector.extract_strided_slice %114 {offsets = [1, 0], sizes = [1, 256], strides = [1, 1]} : vector<8x256xf32> to vector<1x256xf32>
    %130 = vector.broadcast %128 : vector<8x1xf32> to vector<8x256xf32>
    %131 = vector.broadcast %129 : vector<1x256xf32> to vector<8x256xf32>
    %132 = arith.mulf %130, %131 : vector<8x256xf32>
    %133 = arith.addf %121, %132 : vector<8x256xf32>
    %134 = vector.extract_strided_slice %114 {offsets = [5, 0], sizes = [1, 256], strides = [1, 1]} : vector<8x256xf32> to vector<1x256xf32>
    %135 = vector.broadcast %128 : vector<8x1xf32> to vector<8x256xf32>
    %136 = vector.broadcast %134 : vector<1x256xf32> to vector<8x256xf32>
    %137 = arith.mulf %135, %136 : vector<8x256xf32>
    %138 = arith.addf %126, %137 : vector<8x256xf32>
    %c2_49 = arith.constant 2 : index
    %c2_50 = arith.constant 2 : index
    %c0_51 = arith.constant 0 : index
    %c0_52 = arith.constant 0 : index
    %139 = vector.load %arg3[%c2_49, %c2_50, %c0_51, %c0_52] : memref<9x4x8x1xf32, #tpu.memory_space<vmem>>, vector<1x1x8x1xf32>
    %140 = vector.shape_cast %139 : vector<1x1x8x1xf32> to vector<8x1xf32>
    %141 = vector.extract_strided_slice %114 {offsets = [2, 0], sizes = [1, 256], strides = [1, 1]} : vector<8x256xf32> to vector<1x256xf32>
    %142 = vector.broadcast %140 : vector<8x1xf32> to vector<8x256xf32>
    %143 = vector.broadcast %141 : vector<1x256xf32> to vector<8x256xf32>
    %144 = arith.mulf %142, %143 : vector<8x256xf32>
    %145 = arith.addf %133, %144 : vector<8x256xf32>
    %146 = vector.extract_strided_slice %114 {offsets = [6, 0], sizes = [1, 256], strides = [1, 1]} : vector<8x256xf32> to vector<1x256xf32>
    %147 = vector.broadcast %140 : vector<8x1xf32> to vector<8x256xf32>
    %148 = vector.broadcast %146 : vector<1x256xf32> to vector<8x256xf32>
    %149 = arith.mulf %147, %148 : vector<8x256xf32>
    %150 = arith.addf %138, %149 : vector<8x256xf32>
    %c2_53 = arith.constant 2 : index
    %c3_54 = arith.constant 3 : index
    %c0_55 = arith.constant 0 : index
    %c0_56 = arith.constant 0 : index
    %151 = vector.load %arg3[%c2_53, %c3_54, %c0_55, %c0_56] : memref<9x4x8x1xf32, #tpu.memory_space<vmem>>, vector<1x1x8x1xf32>
    %152 = vector.shape_cast %151 : vector<1x1x8x1xf32> to vector<8x1xf32>
    %153 = vector.extract_strided_slice %114 {offsets = [3, 0], sizes = [1, 256], strides = [1, 1]} : vector<8x256xf32> to vector<1x256xf32>
    %154 = vector.broadcast %152 : vector<8x1xf32> to vector<8x256xf32>
    %155 = vector.broadcast %153 : vector<1x256xf32> to vector<8x256xf32>
    %156 = arith.mulf %154, %155 : vector<8x256xf32>
    %157 = arith.addf %145, %156 : vector<8x256xf32>
    %158 = vector.extract_strided_slice %114 {offsets = [7, 0], sizes = [1, 256], strides = [1, 1]} : vector<8x256xf32> to vector<1x256xf32>
    %159 = vector.broadcast %152 : vector<8x1xf32> to vector<8x256xf32>
    %160 = vector.broadcast %158 : vector<1x256xf32> to vector<8x256xf32>
    %161 = arith.mulf %159, %160 : vector<8x256xf32>
    %162 = arith.addf %150, %161 : vector<8x256xf32>
    %c1_i32 = arith.constant 1 : i32
    %163 = tpu.dynamic_rotate %0 by %c1_i32 dim 1 : vector<8x256xf32>, i32 -> vector<8x256xf32>
    %c3_57 = arith.constant 3 : index
    %c0_58 = arith.constant 0 : index
    %c0_59 = arith.constant 0 : index
    %164 = vector.load %arg2[%c3_57, %c0_58, %c0_59] : memref<9x1x256xf32, #tpu.memory_space<vmem>>, vector<1x1x256xf32>
    %165 = vector.shape_cast %164 : vector<1x1x256xf32> to vector<1x256xf32>
    %166 = vector.broadcast %165 : vector<1x256xf32> to vector<8x256xf32>
    %167 = arith.mulf %163, %166 : vector<8x256xf32>
    %c3_60 = arith.constant 3 : index
    %c0_61 = arith.constant 0 : index
    %c0_62 = arith.constant 0 : index
    %c0_63 = arith.constant 0 : index
    %168 = vector.load %arg3[%c3_60, %c0_61, %c0_62, %c0_63] : memref<9x4x8x1xf32, #tpu.memory_space<vmem>>, vector<1x1x8x1xf32>
    %169 = vector.shape_cast %168 : vector<1x1x8x1xf32> to vector<8x1xf32>
    %170 = vector.extract_strided_slice %167 {offsets = [0, 0], sizes = [1, 256], strides = [1, 1]} : vector<8x256xf32> to vector<1x256xf32>
    %171 = vector.broadcast %169 : vector<8x1xf32> to vector<8x256xf32>
    %172 = vector.broadcast %170 : vector<1x256xf32> to vector<8x256xf32>
    %173 = arith.mulf %171, %172 : vector<8x256xf32>
    %174 = arith.addf %157, %173 : vector<8x256xf32>
    %175 = vector.extract_strided_slice %167 {offsets = [4, 0], sizes = [1, 256], strides = [1, 1]} : vector<8x256xf32> to vector<1x256xf32>
    %176 = vector.broadcast %169 : vector<8x1xf32> to vector<8x256xf32>
    %177 = vector.broadcast %175 : vector<1x256xf32> to vector<8x256xf32>
    %178 = arith.mulf %176, %177 : vector<8x256xf32>
    %179 = arith.addf %162, %178 : vector<8x256xf32>
    %c3_64 = arith.constant 3 : index
    %c1_65 = arith.constant 1 : index
    %c0_66 = arith.constant 0 : index
    %c0_67 = arith.constant 0 : index
    %180 = vector.load %arg3[%c3_64, %c1_65, %c0_66, %c0_67] : memref<9x4x8x1xf32, #tpu.memory_space<vmem>>, vector<1x1x8x1xf32>
    %181 = vector.shape_cast %180 : vector<1x1x8x1xf32> to vector<8x1xf32>
    %182 = vector.extract_strided_slice %167 {offsets = [1, 0], sizes = [1, 256], strides = [1, 1]} : vector<8x256xf32> to vector<1x256xf32>
    %183 = vector.broadcast %181 : vector<8x1xf32> to vector<8x256xf32>
    %184 = vector.broadcast %182 : vector<1x256xf32> to vector<8x256xf32>
    %185 = arith.mulf %183, %184 : vector<8x256xf32>
    %186 = arith.addf %174, %185 : vector<8x256xf32>
    %187 = vector.extract_strided_slice %167 {offsets = [5, 0], sizes = [1, 256], strides = [1, 1]} : vector<8x256xf32> to vector<1x256xf32>
    %188 = vector.broadcast %181 : vector<8x1xf32> to vector<8x256xf32>
    %189 = vector.broadcast %187 : vector<1x256xf32> to vector<8x256xf32>
    %190 = arith.mulf %188, %189 : vector<8x256xf32>
    %191 = arith.addf %179, %190 : vector<8x256xf32>
    %c3_68 = arith.constant 3 : index
    %c2_69 = arith.constant 2 : index
    %c0_70 = arith.constant 0 : index
    %c0_71 = arith.constant 0 : index
    %192 = vector.load %arg3[%c3_68, %c2_69, %c0_70, %c0_71] : memref<9x4x8x1xf32, #tpu.memory_space<vmem>>, vector<1x1x8x1xf32>
    %193 = vector.shape_cast %192 : vector<1x1x8x1xf32> to vector<8x1xf32>
    %194 = vector.extract_strided_slice %167 {offsets = [2, 0], sizes = [1, 256], strides = [1, 1]} : vector<8x256xf32> to vector<1x256xf32>
    %195 = vector.broadcast %193 : vector<8x1xf32> to vector<8x256xf32>
    %196 = vector.broadcast %194 : vector<1x256xf32> to vector<8x256xf32>
    %197 = arith.mulf %195, %196 : vector<8x256xf32>
    %198 = arith.addf %186, %197 : vector<8x256xf32>
    %199 = vector.extract_strided_slice %167 {offsets = [6, 0], sizes = [1, 256], strides = [1, 1]} : vector<8x256xf32> to vector<1x256xf32>
    %200 = vector.broadcast %193 : vector<8x1xf32> to vector<8x256xf32>
    %201 = vector.broadcast %199 : vector<1x256xf32> to vector<8x256xf32>
    %202 = arith.mulf %200, %201 : vector<8x256xf32>
    %203 = arith.addf %191, %202 : vector<8x256xf32>
    %c3_72 = arith.constant 3 : index
    %c3_73 = arith.constant 3 : index
    %c0_74 = arith.constant 0 : index
    %c0_75 = arith.constant 0 : index
    %204 = vector.load %arg3[%c3_72, %c3_73, %c0_74, %c0_75] : memref<9x4x8x1xf32, #tpu.memory_space<vmem>>, vector<1x1x8x1xf32>
    %205 = vector.shape_cast %204 : vector<1x1x8x1xf32> to vector<8x1xf32>
    %206 = vector.extract_strided_slice %167 {offsets = [3, 0], sizes = [1, 256], strides = [1, 1]} : vector<8x256xf32> to vector<1x256xf32>
    %207 = vector.broadcast %205 : vector<8x1xf32> to vector<8x256xf32>
    %208 = vector.broadcast %206 : vector<1x256xf32> to vector<8x256xf32>
    %209 = arith.mulf %207, %208 : vector<8x256xf32>
    %210 = arith.addf %198, %209 : vector<8x256xf32>
    %211 = vector.extract_strided_slice %167 {offsets = [7, 0], sizes = [1, 256], strides = [1, 1]} : vector<8x256xf32> to vector<1x256xf32>
    %212 = vector.broadcast %205 : vector<8x1xf32> to vector<8x256xf32>
    %213 = vector.broadcast %211 : vector<1x256xf32> to vector<8x256xf32>
    %214 = arith.mulf %212, %213 : vector<8x256xf32>
    %215 = arith.addf %203, %214 : vector<8x256xf32>
    %c4 = arith.constant 4 : index
    %c0_76 = arith.constant 0 : index
    %c0_77 = arith.constant 0 : index
    %c0_78 = arith.constant 0 : index
    %216 = vector.load %arg3[%c4, %c0_76, %c0_77, %c0_78] : memref<9x4x8x1xf32, #tpu.memory_space<vmem>>, vector<1x1x8x1xf32>
    %217 = vector.shape_cast %216 : vector<1x1x8x1xf32> to vector<8x1xf32>
    %218 = vector.extract_strided_slice %0 {offsets = [0, 0], sizes = [1, 256], strides = [1, 1]} : vector<8x256xf32> to vector<1x256xf32>
    %219 = vector.broadcast %217 : vector<8x1xf32> to vector<8x256xf32>
    %220 = vector.broadcast %218 : vector<1x256xf32> to vector<8x256xf32>
    %221 = arith.mulf %219, %220 : vector<8x256xf32>
    %222 = arith.addf %210, %221 : vector<8x256xf32>
    %223 = vector.extract_strided_slice %0 {offsets = [4, 0], sizes = [1, 256], strides = [1, 1]} : vector<8x256xf32> to vector<1x256xf32>
    %224 = vector.broadcast %217 : vector<8x1xf32> to vector<8x256xf32>
    %225 = vector.broadcast %223 : vector<1x256xf32> to vector<8x256xf32>
    %226 = arith.mulf %224, %225 : vector<8x256xf32>
    %227 = arith.addf %215, %226 : vector<8x256xf32>
    %c4_79 = arith.constant 4 : index
    %c1_80 = arith.constant 1 : index
    %c0_81 = arith.constant 0 : index
    %c0_82 = arith.constant 0 : index
    %228 = vector.load %arg3[%c4_79, %c1_80, %c0_81, %c0_82] : memref<9x4x8x1xf32, #tpu.memory_space<vmem>>, vector<1x1x8x1xf32>
    %229 = vector.shape_cast %228 : vector<1x1x8x1xf32> to vector<8x1xf32>
    %230 = vector.extract_strided_slice %0 {offsets = [1, 0], sizes = [1, 256], strides = [1, 1]} : vector<8x256xf32> to vector<1x256xf32>
    %231 = vector.broadcast %229 : vector<8x1xf32> to vector<8x256xf32>
    %232 = vector.broadcast %230 : vector<1x256xf32> to vector<8x256xf32>
    %233 = arith.mulf %231, %232 : vector<8x256xf32>
    %234 = arith.addf %222, %233 : vector<8x256xf32>
    %235 = vector.extract_strided_slice %0 {offsets = [5, 0], sizes = [1, 256], strides = [1, 1]} : vector<8x256xf32> to vector<1x256xf32>
    %236 = vector.broadcast %229 : vector<8x1xf32> to vector<8x256xf32>
    %237 = vector.broadcast %235 : vector<1x256xf32> to vector<8x256xf32>
    %238 = arith.mulf %236, %237 : vector<8x256xf32>
    %239 = arith.addf %227, %238 : vector<8x256xf32>
    %c4_83 = arith.constant 4 : index
    %c2_84 = arith.constant 2 : index
    %c0_85 = arith.constant 0 : index
    %c0_86 = arith.constant 0 : index
    %240 = vector.load %arg3[%c4_83, %c2_84, %c0_85, %c0_86] : memref<9x4x8x1xf32, #tpu.memory_space<vmem>>, vector<1x1x8x1xf32>
    %241 = vector.shape_cast %240 : vector<1x1x8x1xf32> to vector<8x1xf32>
    %242 = vector.extract_strided_slice %0 {offsets = [2, 0], sizes = [1, 256], strides = [1, 1]} : vector<8x256xf32> to vector<1x256xf32>
    %243 = vector.broadcast %241 : vector<8x1xf32> to vector<8x256xf32>
    %244 = vector.broadcast %242 : vector<1x256xf32> to vector<8x256xf32>
    %245 = arith.mulf %243, %244 : vector<8x256xf32>
    %246 = arith.addf %234, %245 : vector<8x256xf32>
    %247 = vector.extract_strided_slice %0 {offsets = [6, 0], sizes = [1, 256], strides = [1, 1]} : vector<8x256xf32> to vector<1x256xf32>
    %248 = vector.broadcast %241 : vector<8x1xf32> to vector<8x256xf32>
    %249 = vector.broadcast %247 : vector<1x256xf32> to vector<8x256xf32>
    %250 = arith.mulf %248, %249 : vector<8x256xf32>
    %251 = arith.addf %239, %250 : vector<8x256xf32>
    %c4_87 = arith.constant 4 : index
    %c3_88 = arith.constant 3 : index
    %c0_89 = arith.constant 0 : index
    %c0_90 = arith.constant 0 : index
    %252 = vector.load %arg3[%c4_87, %c3_88, %c0_89, %c0_90] : memref<9x4x8x1xf32, #tpu.memory_space<vmem>>, vector<1x1x8x1xf32>
    %253 = vector.shape_cast %252 : vector<1x1x8x1xf32> to vector<8x1xf32>
    %254 = vector.extract_strided_slice %0 {offsets = [3, 0], sizes = [1, 256], strides = [1, 1]} : vector<8x256xf32> to vector<1x256xf32>
    %255 = vector.broadcast %253 : vector<8x1xf32> to vector<8x256xf32>
    %256 = vector.broadcast %254 : vector<1x256xf32> to vector<8x256xf32>
    %257 = arith.mulf %255, %256 : vector<8x256xf32>
    %258 = arith.addf %246, %257 : vector<8x256xf32>
    %259 = vector.extract_strided_slice %0 {offsets = [7, 0], sizes = [1, 256], strides = [1, 1]} : vector<8x256xf32> to vector<1x256xf32>
    %260 = vector.broadcast %253 : vector<8x1xf32> to vector<8x256xf32>
    %261 = vector.broadcast %259 : vector<1x256xf32> to vector<8x256xf32>
    %262 = arith.mulf %260, %261 : vector<8x256xf32>
    %263 = arith.addf %251, %262 : vector<8x256xf32>
    %c255_i32 = arith.constant 255 : i32
    %264 = tpu.dynamic_rotate %0 by %c255_i32 dim 1 : vector<8x256xf32>, i32 -> vector<8x256xf32>
    %c5 = arith.constant 5 : index
    %c0_91 = arith.constant 0 : index
    %c0_92 = arith.constant 0 : index
    %265 = vector.load %arg2[%c5, %c0_91, %c0_92] : memref<9x1x256xf32, #tpu.memory_space<vmem>>, vector<1x1x256xf32>
    %266 = vector.shape_cast %265 : vector<1x1x256xf32> to vector<1x256xf32>
    %267 = vector.broadcast %266 : vector<1x256xf32> to vector<8x256xf32>
    %268 = arith.mulf %264, %267 : vector<8x256xf32>
    %c5_93 = arith.constant 5 : index
    %c0_94 = arith.constant 0 : index
    %c0_95 = arith.constant 0 : index
    %c0_96 = arith.constant 0 : index
    %269 = vector.load %arg3[%c5_93, %c0_94, %c0_95, %c0_96] : memref<9x4x8x1xf32, #tpu.memory_space<vmem>>, vector<1x1x8x1xf32>
    %270 = vector.shape_cast %269 : vector<1x1x8x1xf32> to vector<8x1xf32>
    %271 = vector.extract_strided_slice %268 {offsets = [0, 0], sizes = [1, 256], strides = [1, 1]} : vector<8x256xf32> to vector<1x256xf32>
    %272 = vector.broadcast %270 : vector<8x1xf32> to vector<8x256xf32>
    %273 = vector.broadcast %271 : vector<1x256xf32> to vector<8x256xf32>
    %274 = arith.mulf %272, %273 : vector<8x256xf32>
    %275 = arith.addf %258, %274 : vector<8x256xf32>
    %276 = vector.extract_strided_slice %268 {offsets = [4, 0], sizes = [1, 256], strides = [1, 1]} : vector<8x256xf32> to vector<1x256xf32>
    %277 = vector.broadcast %270 : vector<8x1xf32> to vector<8x256xf32>
    %278 = vector.broadcast %276 : vector<1x256xf32> to vector<8x256xf32>
    %279 = arith.mulf %277, %278 : vector<8x256xf32>
    %280 = arith.addf %263, %279 : vector<8x256xf32>
    %c5_97 = arith.constant 5 : index
    %c1_98 = arith.constant 1 : index
    %c0_99 = arith.constant 0 : index
    %c0_100 = arith.constant 0 : index
    %281 = vector.load %arg3[%c5_97, %c1_98, %c0_99, %c0_100] : memref<9x4x8x1xf32, #tpu.memory_space<vmem>>, vector<1x1x8x1xf32>
    %282 = vector.shape_cast %281 : vector<1x1x8x1xf32> to vector<8x1xf32>
    %283 = vector.extract_strided_slice %268 {offsets = [1, 0], sizes = [1, 256], strides = [1, 1]} : vector<8x256xf32> to vector<1x256xf32>
    %284 = vector.broadcast %282 : vector<8x1xf32> to vector<8x256xf32>
    %285 = vector.broadcast %283 : vector<1x256xf32> to vector<8x256xf32>
    %286 = arith.mulf %284, %285 : vector<8x256xf32>
    %287 = arith.addf %275, %286 : vector<8x256xf32>
    %288 = vector.extract_strided_slice %268 {offsets = [5, 0], sizes = [1, 256], strides = [1, 1]} : vector<8x256xf32> to vector<1x256xf32>
    %289 = vector.broadcast %282 : vector<8x1xf32> to vector<8x256xf32>
    %290 = vector.broadcast %288 : vector<1x256xf32> to vector<8x256xf32>
    %291 = arith.mulf %289, %290 : vector<8x256xf32>
    %292 = arith.addf %280, %291 : vector<8x256xf32>
    %c5_101 = arith.constant 5 : index
    %c2_102 = arith.constant 2 : index
    %c0_103 = arith.constant 0 : index
    %c0_104 = arith.constant 0 : index
    %293 = vector.load %arg3[%c5_101, %c2_102, %c0_103, %c0_104] : memref<9x4x8x1xf32, #tpu.memory_space<vmem>>, vector<1x1x8x1xf32>
    %294 = vector.shape_cast %293 : vector<1x1x8x1xf32> to vector<8x1xf32>
    %295 = vector.extract_strided_slice %268 {offsets = [2, 0], sizes = [1, 256], strides = [1, 1]} : vector<8x256xf32> to vector<1x256xf32>
    %296 = vector.broadcast %294 : vector<8x1xf32> to vector<8x256xf32>
    %297 = vector.broadcast %295 : vector<1x256xf32> to vector<8x256xf32>
    %298 = arith.mulf %296, %297 : vector<8x256xf32>
    %299 = arith.addf %287, %298 : vector<8x256xf32>
    %300 = vector.extract_strided_slice %268 {offsets = [6, 0], sizes = [1, 256], strides = [1, 1]} : vector<8x256xf32> to vector<1x256xf32>
    %301 = vector.broadcast %294 : vector<8x1xf32> to vector<8x256xf32>
    %302 = vector.broadcast %300 : vector<1x256xf32> to vector<8x256xf32>
    %303 = arith.mulf %301, %302 : vector<8x256xf32>
    %304 = arith.addf %292, %303 : vector<8x256xf32>
    %c5_105 = arith.constant 5 : index
    %c3_106 = arith.constant 3 : index
    %c0_107 = arith.constant 0 : index
    %c0_108 = arith.constant 0 : index
    %305 = vector.load %arg3[%c5_105, %c3_106, %c0_107, %c0_108] : memref<9x4x8x1xf32, #tpu.memory_space<vmem>>, vector<1x1x8x1xf32>
    %306 = vector.shape_cast %305 : vector<1x1x8x1xf32> to vector<8x1xf32>
    %307 = vector.extract_strided_slice %268 {offsets = [3, 0], sizes = [1, 256], strides = [1, 1]} : vector<8x256xf32> to vector<1x256xf32>
    %308 = vector.broadcast %306 : vector<8x1xf32> to vector<8x256xf32>
    %309 = vector.broadcast %307 : vector<1x256xf32> to vector<8x256xf32>
    %310 = arith.mulf %308, %309 : vector<8x256xf32>
    %311 = arith.addf %299, %310 : vector<8x256xf32>
    %312 = vector.extract_strided_slice %268 {offsets = [7, 0], sizes = [1, 256], strides = [1, 1]} : vector<8x256xf32> to vector<1x256xf32>
    %313 = vector.broadcast %306 : vector<8x1xf32> to vector<8x256xf32>
    %314 = vector.broadcast %312 : vector<1x256xf32> to vector<8x256xf32>
    %315 = arith.mulf %313, %314 : vector<8x256xf32>
    %316 = arith.addf %304, %315 : vector<8x256xf32>
    %c241_i32 = arith.constant 241 : i32
    %317 = tpu.dynamic_rotate %0 by %c241_i32 dim 1 : vector<8x256xf32>, i32 -> vector<8x256xf32>
    %c6 = arith.constant 6 : index
    %c0_109 = arith.constant 0 : index
    %c0_110 = arith.constant 0 : index
    %318 = vector.load %arg2[%c6, %c0_109, %c0_110] : memref<9x1x256xf32, #tpu.memory_space<vmem>>, vector<1x1x256xf32>
    %319 = vector.shape_cast %318 : vector<1x1x256xf32> to vector<1x256xf32>
    %320 = vector.broadcast %319 : vector<1x256xf32> to vector<8x256xf32>
    %321 = arith.mulf %317, %320 : vector<8x256xf32>
    %c6_111 = arith.constant 6 : index
    %c0_112 = arith.constant 0 : index
    %c0_113 = arith.constant 0 : index
    %c0_114 = arith.constant 0 : index
    %322 = vector.load %arg3[%c6_111, %c0_112, %c0_113, %c0_114] : memref<9x4x8x1xf32, #tpu.memory_space<vmem>>, vector<1x1x8x1xf32>
    %323 = vector.shape_cast %322 : vector<1x1x8x1xf32> to vector<8x1xf32>
    %324 = vector.extract_strided_slice %321 {offsets = [0, 0], sizes = [1, 256], strides = [1, 1]} : vector<8x256xf32> to vector<1x256xf32>
    %325 = vector.broadcast %323 : vector<8x1xf32> to vector<8x256xf32>
    %326 = vector.broadcast %324 : vector<1x256xf32> to vector<8x256xf32>
    %327 = arith.mulf %325, %326 : vector<8x256xf32>
    %328 = arith.addf %311, %327 : vector<8x256xf32>
    %329 = vector.extract_strided_slice %321 {offsets = [4, 0], sizes = [1, 256], strides = [1, 1]} : vector<8x256xf32> to vector<1x256xf32>
    %330 = vector.broadcast %323 : vector<8x1xf32> to vector<8x256xf32>
    %331 = vector.broadcast %329 : vector<1x256xf32> to vector<8x256xf32>
    %332 = arith.mulf %330, %331 : vector<8x256xf32>
    %333 = arith.addf %316, %332 : vector<8x256xf32>
    %c6_115 = arith.constant 6 : index
    %c1_116 = arith.constant 1 : index
    %c0_117 = arith.constant 0 : index
    %c0_118 = arith.constant 0 : index
    %334 = vector.load %arg3[%c6_115, %c1_116, %c0_117, %c0_118] : memref<9x4x8x1xf32, #tpu.memory_space<vmem>>, vector<1x1x8x1xf32>
    %335 = vector.shape_cast %334 : vector<1x1x8x1xf32> to vector<8x1xf32>
    %336 = vector.extract_strided_slice %321 {offsets = [1, 0], sizes = [1, 256], strides = [1, 1]} : vector<8x256xf32> to vector<1x256xf32>
    %337 = vector.broadcast %335 : vector<8x1xf32> to vector<8x256xf32>
    %338 = vector.broadcast %336 : vector<1x256xf32> to vector<8x256xf32>
    %339 = arith.mulf %337, %338 : vector<8x256xf32>
    %340 = arith.addf %328, %339 : vector<8x256xf32>
    %341 = vector.extract_strided_slice %321 {offsets = [5, 0], sizes = [1, 256], strides = [1, 1]} : vector<8x256xf32> to vector<1x256xf32>
    %342 = vector.broadcast %335 : vector<8x1xf32> to vector<8x256xf32>
    %343 = vector.broadcast %341 : vector<1x256xf32> to vector<8x256xf32>
    %344 = arith.mulf %342, %343 : vector<8x256xf32>
    %345 = arith.addf %333, %344 : vector<8x256xf32>
    %c6_119 = arith.constant 6 : index
    %c2_120 = arith.constant 2 : index
    %c0_121 = arith.constant 0 : index
    %c0_122 = arith.constant 0 : index
    %346 = vector.load %arg3[%c6_119, %c2_120, %c0_121, %c0_122] : memref<9x4x8x1xf32, #tpu.memory_space<vmem>>, vector<1x1x8x1xf32>
    %347 = vector.shape_cast %346 : vector<1x1x8x1xf32> to vector<8x1xf32>
    %348 = vector.extract_strided_slice %321 {offsets = [2, 0], sizes = [1, 256], strides = [1, 1]} : vector<8x256xf32> to vector<1x256xf32>
    %349 = vector.broadcast %347 : vector<8x1xf32> to vector<8x256xf32>
    %350 = vector.broadcast %348 : vector<1x256xf32> to vector<8x256xf32>
    %351 = arith.mulf %349, %350 : vector<8x256xf32>
    %352 = arith.addf %340, %351 : vector<8x256xf32>
    %353 = vector.extract_strided_slice %321 {offsets = [6, 0], sizes = [1, 256], strides = [1, 1]} : vector<8x256xf32> to vector<1x256xf32>
    %354 = vector.broadcast %347 : vector<8x1xf32> to vector<8x256xf32>
    %355 = vector.broadcast %353 : vector<1x256xf32> to vector<8x256xf32>
    %356 = arith.mulf %354, %355 : vector<8x256xf32>
    %357 = arith.addf %345, %356 : vector<8x256xf32>
    %c6_123 = arith.constant 6 : index
    %c3_124 = arith.constant 3 : index
    %c0_125 = arith.constant 0 : index
    %c0_126 = arith.constant 0 : index
    %358 = vector.load %arg3[%c6_123, %c3_124, %c0_125, %c0_126] : memref<9x4x8x1xf32, #tpu.memory_space<vmem>>, vector<1x1x8x1xf32>
    %359 = vector.shape_cast %358 : vector<1x1x8x1xf32> to vector<8x1xf32>
    %360 = vector.extract_strided_slice %321 {offsets = [3, 0], sizes = [1, 256], strides = [1, 1]} : vector<8x256xf32> to vector<1x256xf32>
    %361 = vector.broadcast %359 : vector<8x1xf32> to vector<8x256xf32>
    %362 = vector.broadcast %360 : vector<1x256xf32> to vector<8x256xf32>
    %363 = arith.mulf %361, %362 : vector<8x256xf32>
    %364 = arith.addf %352, %363 : vector<8x256xf32>
    %365 = vector.extract_strided_slice %321 {offsets = [7, 0], sizes = [1, 256], strides = [1, 1]} : vector<8x256xf32> to vector<1x256xf32>
    %366 = vector.broadcast %359 : vector<8x1xf32> to vector<8x256xf32>
    %367 = vector.broadcast %365 : vector<1x256xf32> to vector<8x256xf32>
    %368 = arith.mulf %366, %367 : vector<8x256xf32>
    %369 = arith.addf %357, %368 : vector<8x256xf32>
    %c240_i32 = arith.constant 240 : i32
    %370 = tpu.dynamic_rotate %0 by %c240_i32 dim 1 : vector<8x256xf32>, i32 -> vector<8x256xf32>
    %c7 = arith.constant 7 : index
    %c0_127 = arith.constant 0 : index
    %c0_128 = arith.constant 0 : index
    %371 = vector.load %arg2[%c7, %c0_127, %c0_128] : memref<9x1x256xf32, #tpu.memory_space<vmem>>, vector<1x1x256xf32>
    %372 = vector.shape_cast %371 : vector<1x1x256xf32> to vector<1x256xf32>
    %373 = vector.broadcast %372 : vector<1x256xf32> to vector<8x256xf32>
    %374 = arith.mulf %370, %373 : vector<8x256xf32>
    %c7_129 = arith.constant 7 : index
    %c0_130 = arith.constant 0 : index
    %c0_131 = arith.constant 0 : index
    %c0_132 = arith.constant 0 : index
    %375 = vector.load %arg3[%c7_129, %c0_130, %c0_131, %c0_132] : memref<9x4x8x1xf32, #tpu.memory_space<vmem>>, vector<1x1x8x1xf32>
    %376 = vector.shape_cast %375 : vector<1x1x8x1xf32> to vector<8x1xf32>
    %377 = vector.extract_strided_slice %374 {offsets = [0, 0], sizes = [1, 256], strides = [1, 1]} : vector<8x256xf32> to vector<1x256xf32>
    %378 = vector.broadcast %376 : vector<8x1xf32> to vector<8x256xf32>
    %379 = vector.broadcast %377 : vector<1x256xf32> to vector<8x256xf32>
    %380 = arith.mulf %378, %379 : vector<8x256xf32>
    %381 = arith.addf %364, %380 : vector<8x256xf32>
    %382 = vector.extract_strided_slice %374 {offsets = [4, 0], sizes = [1, 256], strides = [1, 1]} : vector<8x256xf32> to vector<1x256xf32>
    %383 = vector.broadcast %376 : vector<8x1xf32> to vector<8x256xf32>
    %384 = vector.broadcast %382 : vector<1x256xf32> to vector<8x256xf32>
    %385 = arith.mulf %383, %384 : vector<8x256xf32>
    %386 = arith.addf %369, %385 : vector<8x256xf32>
    %c7_133 = arith.constant 7 : index
    %c1_134 = arith.constant 1 : index
    %c0_135 = arith.constant 0 : index
    %c0_136 = arith.constant 0 : index
    %387 = vector.load %arg3[%c7_133, %c1_134, %c0_135, %c0_136] : memref<9x4x8x1xf32, #tpu.memory_space<vmem>>, vector<1x1x8x1xf32>
    %388 = vector.shape_cast %387 : vector<1x1x8x1xf32> to vector<8x1xf32>
    %389 = vector.extract_strided_slice %374 {offsets = [1, 0], sizes = [1, 256], strides = [1, 1]} : vector<8x256xf32> to vector<1x256xf32>
    %390 = vector.broadcast %388 : vector<8x1xf32> to vector<8x256xf32>
    %391 = vector.broadcast %389 : vector<1x256xf32> to vector<8x256xf32>
    %392 = arith.mulf %390, %391 : vector<8x256xf32>
    %393 = arith.addf %381, %392 : vector<8x256xf32>
    %394 = vector.extract_strided_slice %374 {offsets = [5, 0], sizes = [1, 256], strides = [1, 1]} : vector<8x256xf32> to vector<1x256xf32>
    %395 = vector.broadcast %388 : vector<8x1xf32> to vector<8x256xf32>
    %396 = vector.broadcast %394 : vector<1x256xf32> to vector<8x256xf32>
    %397 = arith.mulf %395, %396 : vector<8x256xf32>
    %398 = arith.addf %386, %397 : vector<8x256xf32>
    %c7_137 = arith.constant 7 : index
    %c2_138 = arith.constant 2 : index
    %c0_139 = arith.constant 0 : index
    %c0_140 = arith.constant 0 : index
    %399 = vector.load %arg3[%c7_137, %c2_138, %c0_139, %c0_140] : memref<9x4x8x1xf32, #tpu.memory_space<vmem>>, vector<1x1x8x1xf32>
    %400 = vector.shape_cast %399 : vector<1x1x8x1xf32> to vector<8x1xf32>
    %401 = vector.extract_strided_slice %374 {offsets = [2, 0], sizes = [1, 256], strides = [1, 1]} : vector<8x256xf32> to vector<1x256xf32>
    %402 = vector.broadcast %400 : vector<8x1xf32> to vector<8x256xf32>
    %403 = vector.broadcast %401 : vector<1x256xf32> to vector<8x256xf32>
    %404 = arith.mulf %402, %403 : vector<8x256xf32>
    %405 = arith.addf %393, %404 : vector<8x256xf32>
    %406 = vector.extract_strided_slice %374 {offsets = [6, 0], sizes = [1, 256], strides = [1, 1]} : vector<8x256xf32> to vector<1x256xf32>
    %407 = vector.broadcast %400 : vector<8x1xf32> to vector<8x256xf32>
    %408 = vector.broadcast %406 : vector<1x256xf32> to vector<8x256xf32>
    %409 = arith.mulf %407, %408 : vector<8x256xf32>
    %410 = arith.addf %398, %409 : vector<8x256xf32>
    %c7_141 = arith.constant 7 : index
    %c3_142 = arith.constant 3 : index
    %c0_143 = arith.constant 0 : index
    %c0_144 = arith.constant 0 : index
    %411 = vector.load %arg3[%c7_141, %c3_142, %c0_143, %c0_144] : memref<9x4x8x1xf32, #tpu.memory_space<vmem>>, vector<1x1x8x1xf32>
    %412 = vector.shape_cast %411 : vector<1x1x8x1xf32> to vector<8x1xf32>
    %413 = vector.extract_strided_slice %374 {offsets = [3, 0], sizes = [1, 256], strides = [1, 1]} : vector<8x256xf32> to vector<1x256xf32>
    %414 = vector.broadcast %412 : vector<8x1xf32> to vector<8x256xf32>
    %415 = vector.broadcast %413 : vector<1x256xf32> to vector<8x256xf32>
    %416 = arith.mulf %414, %415 : vector<8x256xf32>
    %417 = arith.addf %405, %416 : vector<8x256xf32>
    %418 = vector.extract_strided_slice %374 {offsets = [7, 0], sizes = [1, 256], strides = [1, 1]} : vector<8x256xf32> to vector<1x256xf32>
    %419 = vector.broadcast %412 : vector<8x1xf32> to vector<8x256xf32>
    %420 = vector.broadcast %418 : vector<1x256xf32> to vector<8x256xf32>
    %421 = arith.mulf %419, %420 : vector<8x256xf32>
    %422 = arith.addf %410, %421 : vector<8x256xf32>
    %c239_i32 = arith.constant 239 : i32
    %423 = tpu.dynamic_rotate %0 by %c239_i32 dim 1 : vector<8x256xf32>, i32 -> vector<8x256xf32>
    %c8 = arith.constant 8 : index
    %c0_145 = arith.constant 0 : index
    %c0_146 = arith.constant 0 : index
    %424 = vector.load %arg2[%c8, %c0_145, %c0_146] : memref<9x1x256xf32, #tpu.memory_space<vmem>>, vector<1x1x256xf32>
    %425 = vector.shape_cast %424 : vector<1x1x256xf32> to vector<1x256xf32>
    %426 = vector.broadcast %425 : vector<1x256xf32> to vector<8x256xf32>
    %427 = arith.mulf %423, %426 : vector<8x256xf32>
    %c8_147 = arith.constant 8 : index
    %c0_148 = arith.constant 0 : index
    %c0_149 = arith.constant 0 : index
    %c0_150 = arith.constant 0 : index
    %428 = vector.load %arg3[%c8_147, %c0_148, %c0_149, %c0_150] : memref<9x4x8x1xf32, #tpu.memory_space<vmem>>, vector<1x1x8x1xf32>
    %429 = vector.shape_cast %428 : vector<1x1x8x1xf32> to vector<8x1xf32>
    %430 = vector.extract_strided_slice %427 {offsets = [0, 0], sizes = [1, 256], strides = [1, 1]} : vector<8x256xf32> to vector<1x256xf32>
    %431 = vector.broadcast %429 : vector<8x1xf32> to vector<8x256xf32>
    %432 = vector.broadcast %430 : vector<1x256xf32> to vector<8x256xf32>
    %433 = arith.mulf %431, %432 : vector<8x256xf32>
    %434 = arith.addf %417, %433 : vector<8x256xf32>
    %435 = vector.extract_strided_slice %427 {offsets = [4, 0], sizes = [1, 256], strides = [1, 1]} : vector<8x256xf32> to vector<1x256xf32>
    %436 = vector.broadcast %429 : vector<8x1xf32> to vector<8x256xf32>
    %437 = vector.broadcast %435 : vector<1x256xf32> to vector<8x256xf32>
    %438 = arith.mulf %436, %437 : vector<8x256xf32>
    %439 = arith.addf %422, %438 : vector<8x256xf32>
    %c8_151 = arith.constant 8 : index
    %c1_152 = arith.constant 1 : index
    %c0_153 = arith.constant 0 : index
    %c0_154 = arith.constant 0 : index
    %440 = vector.load %arg3[%c8_151, %c1_152, %c0_153, %c0_154] : memref<9x4x8x1xf32, #tpu.memory_space<vmem>>, vector<1x1x8x1xf32>
    %441 = vector.shape_cast %440 : vector<1x1x8x1xf32> to vector<8x1xf32>
    %442 = vector.extract_strided_slice %427 {offsets = [1, 0], sizes = [1, 256], strides = [1, 1]} : vector<8x256xf32> to vector<1x256xf32>
    %443 = vector.broadcast %441 : vector<8x1xf32> to vector<8x256xf32>
    %444 = vector.broadcast %442 : vector<1x256xf32> to vector<8x256xf32>
    %445 = arith.mulf %443, %444 : vector<8x256xf32>
    %446 = arith.addf %434, %445 : vector<8x256xf32>
    %447 = vector.extract_strided_slice %427 {offsets = [5, 0], sizes = [1, 256], strides = [1, 1]} : vector<8x256xf32> to vector<1x256xf32>
    %448 = vector.broadcast %441 : vector<8x1xf32> to vector<8x256xf32>
    %449 = vector.broadcast %447 : vector<1x256xf32> to vector<8x256xf32>
    %450 = arith.mulf %448, %449 : vector<8x256xf32>
    %451 = arith.addf %439, %450 : vector<8x256xf32>
    %c8_155 = arith.constant 8 : index
    %c2_156 = arith.constant 2 : index
    %c0_157 = arith.constant 0 : index
    %c0_158 = arith.constant 0 : index
    %452 = vector.load %arg3[%c8_155, %c2_156, %c0_157, %c0_158] : memref<9x4x8x1xf32, #tpu.memory_space<vmem>>, vector<1x1x8x1xf32>
    %453 = vector.shape_cast %452 : vector<1x1x8x1xf32> to vector<8x1xf32>
    %454 = vector.extract_strided_slice %427 {offsets = [2, 0], sizes = [1, 256], strides = [1, 1]} : vector<8x256xf32> to vector<1x256xf32>
    %455 = vector.broadcast %453 : vector<8x1xf32> to vector<8x256xf32>
    %456 = vector.broadcast %454 : vector<1x256xf32> to vector<8x256xf32>
    %457 = arith.mulf %455, %456 : vector<8x256xf32>
    %458 = arith.addf %446, %457 : vector<8x256xf32>
    %459 = vector.extract_strided_slice %427 {offsets = [6, 0], sizes = [1, 256], strides = [1, 1]} : vector<8x256xf32> to vector<1x256xf32>
    %460 = vector.broadcast %453 : vector<8x1xf32> to vector<8x256xf32>
    %461 = vector.broadcast %459 : vector<1x256xf32> to vector<8x256xf32>
    %462 = arith.mulf %460, %461 : vector<8x256xf32>
    %463 = arith.addf %451, %462 : vector<8x256xf32>
    %c8_159 = arith.constant 8 : index
    %c3_160 = arith.constant 3 : index
    %c0_161 = arith.constant 0 : index
    %c0_162 = arith.constant 0 : index
    %464 = vector.load %arg3[%c8_159, %c3_160, %c0_161, %c0_162] : memref<9x4x8x1xf32, #tpu.memory_space<vmem>>, vector<1x1x8x1xf32>
    %465 = vector.shape_cast %464 : vector<1x1x8x1xf32> to vector<8x1xf32>
    %466 = vector.extract_strided_slice %427 {offsets = [3, 0], sizes = [1, 256], strides = [1, 1]} : vector<8x256xf32> to vector<1x256xf32>
    %467 = vector.broadcast %465 : vector<8x1xf32> to vector<8x256xf32>
    %468 = vector.broadcast %466 : vector<1x256xf32> to vector<8x256xf32>
    %469 = arith.mulf %467, %468 : vector<8x256xf32>
    %470 = arith.addf %458, %469 : vector<8x256xf32>
    %471 = vector.extract_strided_slice %427 {offsets = [7, 0], sizes = [1, 256], strides = [1, 1]} : vector<8x256xf32> to vector<1x256xf32>
    %472 = vector.broadcast %465 : vector<8x1xf32> to vector<8x256xf32>
    %473 = vector.broadcast %471 : vector<1x256xf32> to vector<8x256xf32>
    %474 = arith.mulf %472, %473 : vector<8x256xf32>
    %475 = arith.addf %463, %474 : vector<8x256xf32>
    %476 = tpu.concatenate %470, %475 in 0 : vector<8x256xf32>, vector<8x256xf32> -> vector<16x256xf32>
    %cst = arith.constant 0.000000e+00 : f32
    %477 = vector.broadcast %cst : f32 to vector<16x256xf32>
    %478 = arith.maximumf %476, %477 : vector<16x256xf32>
    %c0_163 = arith.constant 0 : index
    %c0_164 = arith.constant 0 : index
    %479 = vector.load %arg11[%c0_163, %c0_164] : memref<16x256xf32, #tpu.memory_space<vmem>>, vector<16x256xf32>
    tpu.vector_store %arg11[%c0_163, %c0_164], %478 {strides = array<i32>} : memref<16x256xf32, #tpu.memory_space<vmem>>, vector<16x256xf32>,
    %c0_165 = arith.constant 0 : index
    %c0_166 = arith.constant 0 : index
    %480 = vector.load %arg6[%c0_165, %c0_166] : memref<4x1xf32, #tpu.memory_space<vmem>>, vector<4x1xf32>
    %481 = vector.shape_cast %480 : vector<4x1xf32> to vector<4x1xf32>
    %482 = vector.broadcast %481 : vector<4x1xf32> to vector<4x256xf32>
    %c17_i32_167 = arith.constant 17 : i32
    %483 = tpu.dynamic_rotate %478 by %c17_i32_167 dim 1 : vector<16x256xf32>, i32 -> vector<16x256xf32>
    %c0_168 = arith.constant 0 : index
    %c0_169 = arith.constant 0 : index
    %c0_170 = arith.constant 0 : index
    %484 = vector.load %arg2[%c0_168, %c0_169, %c0_170] : memref<9x1x256xf32, #tpu.memory_space<vmem>>, vector<1x1x256xf32>
    %485 = vector.shape_cast %484 : vector<1x1x256xf32> to vector<1x256xf32>
    %486 = vector.broadcast %485 : vector<1x256xf32> to vector<16x256xf32>
    %487 = arith.mulf %483, %486 : vector<16x256xf32>
    %c0_171 = arith.constant 0 : index
    %c0_172 = arith.constant 0 : index
    %c0_173 = arith.constant 0 : index
    %c0_174 = arith.constant 0 : index
    %488 = vector.load %arg5[%c0_171, %c0_172, %c0_173, %c0_174] : memref<9x8x4x1xf32, #tpu.memory_space<vmem>>, vector<1x1x4x1xf32>
    %489 = vector.shape_cast %488 : vector<1x1x4x1xf32> to vector<4x1xf32>
    %490 = vector.extract_strided_slice %487 {offsets = [0, 0], sizes = [1, 256], strides = [1, 1]} : vector<16x256xf32> to vector<1x256xf32>
    %491 = vector.broadcast %489 : vector<4x1xf32> to vector<4x256xf32>
    %492 = vector.broadcast %490 : vector<1x256xf32> to vector<4x256xf32>
    %493 = arith.mulf %491, %492 : vector<4x256xf32>
    %494 = arith.addf %482, %493 : vector<4x256xf32>
    %495 = vector.extract_strided_slice %487 {offsets = [8, 0], sizes = [1, 256], strides = [1, 1]} : vector<16x256xf32> to vector<1x256xf32>
    %496 = vector.broadcast %489 : vector<4x1xf32> to vector<4x256xf32>
    %497 = vector.broadcast %495 : vector<1x256xf32> to vector<4x256xf32>
    %498 = arith.mulf %496, %497 : vector<4x256xf32>
    %499 = arith.addf %482, %498 : vector<4x256xf32>
    %c0_175 = arith.constant 0 : index
    %c1_176 = arith.constant 1 : index
    %c0_177 = arith.constant 0 : index
    %c0_178 = arith.constant 0 : index
    %500 = vector.load %arg5[%c0_175, %c1_176, %c0_177, %c0_178] : memref<9x8x4x1xf32, #tpu.memory_space<vmem>>, vector<1x1x4x1xf32>
    %501 = vector.shape_cast %500 : vector<1x1x4x1xf32> to vector<4x1xf32>
    %502 = vector.extract_strided_slice %487 {offsets = [1, 0], sizes = [1, 256], strides = [1, 1]} : vector<16x256xf32> to vector<1x256xf32>
    %503 = vector.broadcast %501 : vector<4x1xf32> to vector<4x256xf32>
    %504 = vector.broadcast %502 : vector<1x256xf32> to vector<4x256xf32>
    %505 = arith.mulf %503, %504 : vector<4x256xf32>
    %506 = arith.addf %494, %505 : vector<4x256xf32>
    %507 = vector.extract_strided_slice %487 {offsets = [9, 0], sizes = [1, 256], strides = [1, 1]} : vector<16x256xf32> to vector<1x256xf32>
    %508 = vector.broadcast %501 : vector<4x1xf32> to vector<4x256xf32>
    %509 = vector.broadcast %507 : vector<1x256xf32> to vector<4x256xf32>
    %510 = arith.mulf %508, %509 : vector<4x256xf32>
    %511 = arith.addf %499, %510 : vector<4x256xf32>
    %c0_179 = arith.constant 0 : index
    %c2_180 = arith.constant 2 : index
    %c0_181 = arith.constant 0 : index
    %c0_182 = arith.constant 0 : index
    %512 = vector.load %arg5[%c0_179, %c2_180, %c0_181, %c0_182] : memref<9x8x4x1xf32, #tpu.memory_space<vmem>>, vector<1x1x4x1xf32>
    %513 = vector.shape_cast %512 : vector<1x1x4x1xf32> to vector<4x1xf32>
    %514 = vector.extract_strided_slice %487 {offsets = [2, 0], sizes = [1, 256], strides = [1, 1]} : vector<16x256xf32> to vector<1x256xf32>
    %515 = vector.broadcast %513 : vector<4x1xf32> to vector<4x256xf32>
    %516 = vector.broadcast %514 : vector<1x256xf32> to vector<4x256xf32>
    %517 = arith.mulf %515, %516 : vector<4x256xf32>
    %518 = arith.addf %506, %517 : vector<4x256xf32>
    %519 = vector.extract_strided_slice %487 {offsets = [10, 0], sizes = [1, 256], strides = [1, 1]} : vector<16x256xf32> to vector<1x256xf32>
    %520 = vector.broadcast %513 : vector<4x1xf32> to vector<4x256xf32>
    %521 = vector.broadcast %519 : vector<1x256xf32> to vector<4x256xf32>
    %522 = arith.mulf %520, %521 : vector<4x256xf32>
    %523 = arith.addf %511, %522 : vector<4x256xf32>
    %c0_183 = arith.constant 0 : index
    %c3_184 = arith.constant 3 : index
    %c0_185 = arith.constant 0 : index
    %c0_186 = arith.constant 0 : index
    %524 = vector.load %arg5[%c0_183, %c3_184, %c0_185, %c0_186] : memref<9x8x4x1xf32, #tpu.memory_space<vmem>>, vector<1x1x4x1xf32>
    %525 = vector.shape_cast %524 : vector<1x1x4x1xf32> to vector<4x1xf32>
    %526 = vector.extract_strided_slice %487 {offsets = [3, 0], sizes = [1, 256], strides = [1, 1]} : vector<16x256xf32> to vector<1x256xf32>
    %527 = vector.broadcast %525 : vector<4x1xf32> to vector<4x256xf32>
    %528 = vector.broadcast %526 : vector<1x256xf32> to vector<4x256xf32>
    %529 = arith.mulf %527, %528 : vector<4x256xf32>
    %530 = arith.addf %518, %529 : vector<4x256xf32>
    %531 = vector.extract_strided_slice %487 {offsets = [11, 0], sizes = [1, 256], strides = [1, 1]} : vector<16x256xf32> to vector<1x256xf32>
    %532 = vector.broadcast %525 : vector<4x1xf32> to vector<4x256xf32>
    %533 = vector.broadcast %531 : vector<1x256xf32> to vector<4x256xf32>
    %534 = arith.mulf %532, %533 : vector<4x256xf32>
    %535 = arith.addf %523, %534 : vector<4x256xf32>
    %c0_187 = arith.constant 0 : index
    %c4_188 = arith.constant 4 : index
    %c0_189 = arith.constant 0 : index
    %c0_190 = arith.constant 0 : index
    %536 = vector.load %arg5[%c0_187, %c4_188, %c0_189, %c0_190] : memref<9x8x4x1xf32, #tpu.memory_space<vmem>>, vector<1x1x4x1xf32>
    %537 = vector.shape_cast %536 : vector<1x1x4x1xf32> to vector<4x1xf32>
    %538 = vector.extract_strided_slice %487 {offsets = [4, 0], sizes = [1, 256], strides = [1, 1]} : vector<16x256xf32> to vector<1x256xf32>
    %539 = vector.broadcast %537 : vector<4x1xf32> to vector<4x256xf32>
    %540 = vector.broadcast %538 : vector<1x256xf32> to vector<4x256xf32>
    %541 = arith.mulf %539, %540 : vector<4x256xf32>
    %542 = arith.addf %530, %541 : vector<4x256xf32>
    %543 = vector.extract_strided_slice %487 {offsets = [12, 0], sizes = [1, 256], strides = [1, 1]} : vector<16x256xf32> to vector<1x256xf32>
    %544 = vector.broadcast %537 : vector<4x1xf32> to vector<4x256xf32>
    %545 = vector.broadcast %543 : vector<1x256xf32> to vector<4x256xf32>
    %546 = arith.mulf %544, %545 : vector<4x256xf32>
    %547 = arith.addf %535, %546 : vector<4x256xf32>
    %c0_191 = arith.constant 0 : index
    %c5_192 = arith.constant 5 : index
    %c0_193 = arith.constant 0 : index
    %c0_194 = arith.constant 0 : index
    %548 = vector.load %arg5[%c0_191, %c5_192, %c0_193, %c0_194] : memref<9x8x4x1xf32, #tpu.memory_space<vmem>>, vector<1x1x4x1xf32>
    %549 = vector.shape_cast %548 : vector<1x1x4x1xf32> to vector<4x1xf32>
    %550 = vector.extract_strided_slice %487 {offsets = [5, 0], sizes = [1, 256], strides = [1, 1]} : vector<16x256xf32> to vector<1x256xf32>
    %551 = vector.broadcast %549 : vector<4x1xf32> to vector<4x256xf32>
    %552 = vector.broadcast %550 : vector<1x256xf32> to vector<4x256xf32>
    %553 = arith.mulf %551, %552 : vector<4x256xf32>
    %554 = arith.addf %542, %553 : vector<4x256xf32>
    %555 = vector.extract_strided_slice %487 {offsets = [13, 0], sizes = [1, 256], strides = [1, 1]} : vector<16x256xf32> to vector<1x256xf32>
    %556 = vector.broadcast %549 : vector<4x1xf32> to vector<4x256xf32>
    %557 = vector.broadcast %555 : vector<1x256xf32> to vector<4x256xf32>
    %558 = arith.mulf %556, %557 : vector<4x256xf32>
    %559 = arith.addf %547, %558 : vector<4x256xf32>
    %c0_195 = arith.constant 0 : index
    %c6_196 = arith.constant 6 : index
    %c0_197 = arith.constant 0 : index
    %c0_198 = arith.constant 0 : index
    %560 = vector.load %arg5[%c0_195, %c6_196, %c0_197, %c0_198] : memref<9x8x4x1xf32, #tpu.memory_space<vmem>>, vector<1x1x4x1xf32>
    %561 = vector.shape_cast %560 : vector<1x1x4x1xf32> to vector<4x1xf32>
    %562 = vector.extract_strided_slice %487 {offsets = [6, 0], sizes = [1, 256], strides = [1, 1]} : vector<16x256xf32> to vector<1x256xf32>
    %563 = vector.broadcast %561 : vector<4x1xf32> to vector<4x256xf32>
    %564 = vector.broadcast %562 : vector<1x256xf32> to vector<4x256xf32>
    %565 = arith.mulf %563, %564 : vector<4x256xf32>
    %566 = arith.addf %554, %565 : vector<4x256xf32>
    %567 = vector.extract_strided_slice %487 {offsets = [14, 0], sizes = [1, 256], strides = [1, 1]} : vector<16x256xf32> to vector<1x256xf32>
    %568 = vector.broadcast %561 : vector<4x1xf32> to vector<4x256xf32>
    %569 = vector.broadcast %567 : vector<1x256xf32> to vector<4x256xf32>
    %570 = arith.mulf %568, %569 : vector<4x256xf32>
    %571 = arith.addf %559, %570 : vector<4x256xf32>
    %c0_199 = arith.constant 0 : index
    %c7_200 = arith.constant 7 : index
    %c0_201 = arith.constant 0 : index
    %c0_202 = arith.constant 0 : index
    %572 = vector.load %arg5[%c0_199, %c7_200, %c0_201, %c0_202] : memref<9x8x4x1xf32, #tpu.memory_space<vmem>>, vector<1x1x4x1xf32>
    %573 = vector.shape_cast %572 : vector<1x1x4x1xf32> to vector<4x1xf32>
    %574 = vector.extract_strided_slice %487 {offsets = [7, 0], sizes = [1, 256], strides = [1, 1]} : vector<16x256xf32> to vector<1x256xf32>
    %575 = vector.broadcast %573 : vector<4x1xf32> to vector<4x256xf32>
    %576 = vector.broadcast %574 : vector<1x256xf32> to vector<4x256xf32>
    %577 = arith.mulf %575, %576 : vector<4x256xf32>
    %578 = arith.addf %566, %577 : vector<4x256xf32>
    %579 = vector.extract_strided_slice %487 {offsets = [15, 0], sizes = [1, 256], strides = [1, 1]} : vector<16x256xf32> to vector<1x256xf32>
    %580 = vector.broadcast %573 : vector<4x1xf32> to vector<4x256xf32>
    %581 = vector.broadcast %579 : vector<1x256xf32> to vector<4x256xf32>
    %582 = arith.mulf %580, %581 : vector<4x256xf32>
    %583 = arith.addf %571, %582 : vector<4x256xf32>
    %c16_i32_203 = arith.constant 16 : i32
    %584 = tpu.dynamic_rotate %478 by %c16_i32_203 dim 1 : vector<16x256xf32>, i32 -> vector<16x256xf32>
    %c1_204 = arith.constant 1 : index
    %c0_205 = arith.constant 0 : index
    %c0_206 = arith.constant 0 : index
    %585 = vector.load %arg2[%c1_204, %c0_205, %c0_206] : memref<9x1x256xf32, #tpu.memory_space<vmem>>, vector<1x1x256xf32>
    %586 = vector.shape_cast %585 : vector<1x1x256xf32> to vector<1x256xf32>
    %587 = vector.broadcast %586 : vector<1x256xf32> to vector<16x256xf32>
    %588 = arith.mulf %584, %587 : vector<16x256xf32>
    %c1_207 = arith.constant 1 : index
    %c0_208 = arith.constant 0 : index
    %c0_209 = arith.constant 0 : index
    %c0_210 = arith.constant 0 : index
    %589 = vector.load %arg5[%c1_207, %c0_208, %c0_209, %c0_210] : memref<9x8x4x1xf32, #tpu.memory_space<vmem>>, vector<1x1x4x1xf32>
    %590 = vector.shape_cast %589 : vector<1x1x4x1xf32> to vector<4x1xf32>
    %591 = vector.extract_strided_slice %588 {offsets = [0, 0], sizes = [1, 256], strides = [1, 1]} : vector<16x256xf32> to vector<1x256xf32>
    %592 = vector.broadcast %590 : vector<4x1xf32> to vector<4x256xf32>
    %593 = vector.broadcast %591 : vector<1x256xf32> to vector<4x256xf32>
    %594 = arith.mulf %592, %593 : vector<4x256xf32>
    %595 = arith.addf %578, %594 : vector<4x256xf32>
    %596 = vector.extract_strided_slice %588 {offsets = [8, 0], sizes = [1, 256], strides = [1, 1]} : vector<16x256xf32> to vector<1x256xf32>
    %597 = vector.broadcast %590 : vector<4x1xf32> to vector<4x256xf32>
    %598 = vector.broadcast %596 : vector<1x256xf32> to vector<4x256xf32>
    %599 = arith.mulf %597, %598 : vector<4x256xf32>
    %600 = arith.addf %583, %599 : vector<4x256xf32>
    %c1_211 = arith.constant 1 : index
    %c1_212 = arith.constant 1 : index
    %c0_213 = arith.constant 0 : index
    %c0_214 = arith.constant 0 : index
    %601 = vector.load %arg5[%c1_211, %c1_212, %c0_213, %c0_214] : memref<9x8x4x1xf32, #tpu.memory_space<vmem>>, vector<1x1x4x1xf32>
    %602 = vector.shape_cast %601 : vector<1x1x4x1xf32> to vector<4x1xf32>
    %603 = vector.extract_strided_slice %588 {offsets = [1, 0], sizes = [1, 256], strides = [1, 1]} : vector<16x256xf32> to vector<1x256xf32>
    %604 = vector.broadcast %602 : vector<4x1xf32> to vector<4x256xf32>
    %605 = vector.broadcast %603 : vector<1x256xf32> to vector<4x256xf32>
    %606 = arith.mulf %604, %605 : vector<4x256xf32>
    %607 = arith.addf %595, %606 : vector<4x256xf32>
    %608 = vector.extract_strided_slice %588 {offsets = [9, 0], sizes = [1, 256], strides = [1, 1]} : vector<16x256xf32> to vector<1x256xf32>
    %609 = vector.broadcast %602 : vector<4x1xf32> to vector<4x256xf32>
    %610 = vector.broadcast %608 : vector<1x256xf32> to vector<4x256xf32>
    %611 = arith.mulf %609, %610 : vector<4x256xf32>
    %612 = arith.addf %600, %611 : vector<4x256xf32>
    %c1_215 = arith.constant 1 : index
    %c2_216 = arith.constant 2 : index
    %c0_217 = arith.constant 0 : index
    %c0_218 = arith.constant 0 : index
    %613 = vector.load %arg5[%c1_215, %c2_216, %c0_217, %c0_218] : memref<9x8x4x1xf32, #tpu.memory_space<vmem>>, vector<1x1x4x1xf32>
    %614 = vector.shape_cast %613 : vector<1x1x4x1xf32> to vector<4x1xf32>
    %615 = vector.extract_strided_slice %588 {offsets = [2, 0], sizes = [1, 256], strides = [1, 1]} : vector<16x256xf32> to vector<1x256xf32>
    %616 = vector.broadcast %614 : vector<4x1xf32> to vector<4x256xf32>
    %617 = vector.broadcast %615 : vector<1x256xf32> to vector<4x256xf32>
    %618 = arith.mulf %616, %617 : vector<4x256xf32>
    %619 = arith.addf %607, %618 : vector<4x256xf32>
    %620 = vector.extract_strided_slice %588 {offsets = [10, 0], sizes = [1, 256], strides = [1, 1]} : vector<16x256xf32> to vector<1x256xf32>
    %621 = vector.broadcast %614 : vector<4x1xf32> to vector<4x256xf32>
    %622 = vector.broadcast %620 : vector<1x256xf32> to vector<4x256xf32>
    %623 = arith.mulf %621, %622 : vector<4x256xf32>
    %624 = arith.addf %612, %623 : vector<4x256xf32>
    %c1_219 = arith.constant 1 : index
    %c3_220 = arith.constant 3 : index
    %c0_221 = arith.constant 0 : index
    %c0_222 = arith.constant 0 : index
    %625 = vector.load %arg5[%c1_219, %c3_220, %c0_221, %c0_222] : memref<9x8x4x1xf32, #tpu.memory_space<vmem>>, vector<1x1x4x1xf32>
    %626 = vector.shape_cast %625 : vector<1x1x4x1xf32> to vector<4x1xf32>
    %627 = vector.extract_strided_slice %588 {offsets = [3, 0], sizes = [1, 256], strides = [1, 1]} : vector<16x256xf32> to vector<1x256xf32>
    %628 = vector.broadcast %626 : vector<4x1xf32> to vector<4x256xf32>
    %629 = vector.broadcast %627 : vector<1x256xf32> to vector<4x256xf32>
    %630 = arith.mulf %628, %629 : vector<4x256xf32>
    %631 = arith.addf %619, %630 : vector<4x256xf32>
    %632 = vector.extract_strided_slice %588 {offsets = [11, 0], sizes = [1, 256], strides = [1, 1]} : vector<16x256xf32> to vector<1x256xf32>
    %633 = vector.broadcast %626 : vector<4x1xf32> to vector<4x256xf32>
    %634 = vector.broadcast %632 : vector<1x256xf32> to vector<4x256xf32>
    %635 = arith.mulf %633, %634 : vector<4x256xf32>
    %636 = arith.addf %624, %635 : vector<4x256xf32>
    %c1_223 = arith.constant 1 : index
    %c4_224 = arith.constant 4 : index
    %c0_225 = arith.constant 0 : index
    %c0_226 = arith.constant 0 : index
    %637 = vector.load %arg5[%c1_223, %c4_224, %c0_225, %c0_226] : memref<9x8x4x1xf32, #tpu.memory_space<vmem>>, vector<1x1x4x1xf32>
    %638 = vector.shape_cast %637 : vector<1x1x4x1xf32> to vector<4x1xf32>
    %639 = vector.extract_strided_slice %588 {offsets = [4, 0], sizes = [1, 256], strides = [1, 1]} : vector<16x256xf32> to vector<1x256xf32>
    %640 = vector.broadcast %638 : vector<4x1xf32> to vector<4x256xf32>
    %641 = vector.broadcast %639 : vector<1x256xf32> to vector<4x256xf32>
    %642 = arith.mulf %640, %641 : vector<4x256xf32>
    %643 = arith.addf %631, %642 : vector<4x256xf32>
    %644 = vector.extract_strided_slice %588 {offsets = [12, 0], sizes = [1, 256], strides = [1, 1]} : vector<16x256xf32> to vector<1x256xf32>
    %645 = vector.broadcast %638 : vector<4x1xf32> to vector<4x256xf32>
    %646 = vector.broadcast %644 : vector<1x256xf32> to vector<4x256xf32>
    %647 = arith.mulf %645, %646 : vector<4x256xf32>
    %648 = arith.addf %636, %647 : vector<4x256xf32>
    %c1_227 = arith.constant 1 : index
    %c5_228 = arith.constant 5 : index
    %c0_229 = arith.constant 0 : index
    %c0_230 = arith.constant 0 : index
    %649 = vector.load %arg5[%c1_227, %c5_228, %c0_229, %c0_230] : memref<9x8x4x1xf32, #tpu.memory_space<vmem>>, vector<1x1x4x1xf32>
    %650 = vector.shape_cast %649 : vector<1x1x4x1xf32> to vector<4x1xf32>
    %651 = vector.extract_strided_slice %588 {offsets = [5, 0], sizes = [1, 256], strides = [1, 1]} : vector<16x256xf32> to vector<1x256xf32>
    %652 = vector.broadcast %650 : vector<4x1xf32> to vector<4x256xf32>
    %653 = vector.broadcast %651 : vector<1x256xf32> to vector<4x256xf32>
    %654 = arith.mulf %652, %653 : vector<4x256xf32>
    %655 = arith.addf %643, %654 : vector<4x256xf32>
    %656 = vector.extract_strided_slice %588 {offsets = [13, 0], sizes = [1, 256], strides = [1, 1]} : vector<16x256xf32> to vector<1x256xf32>
    %657 = vector.broadcast %650 : vector<4x1xf32> to vector<4x256xf32>
    %658 = vector.broadcast %656 : vector<1x256xf32> to vector<4x256xf32>
    %659 = arith.mulf %657, %658 : vector<4x256xf32>
    %660 = arith.addf %648, %659 : vector<4x256xf32>
    %c1_231 = arith.constant 1 : index
    %c6_232 = arith.constant 6 : index
    %c0_233 = arith.constant 0 : index
    %c0_234 = arith.constant 0 : index
    %661 = vector.load %arg5[%c1_231, %c6_232, %c0_233, %c0_234] : memref<9x8x4x1xf32, #tpu.memory_space<vmem>>, vector<1x1x4x1xf32>
    %662 = vector.shape_cast %661 : vector<1x1x4x1xf32> to vector<4x1xf32>
    %663 = vector.extract_strided_slice %588 {offsets = [6, 0], sizes = [1, 256], strides = [1, 1]} : vector<16x256xf32> to vector<1x256xf32>
    %664 = vector.broadcast %662 : vector<4x1xf32> to vector<4x256xf32>
    %665 = vector.broadcast %663 : vector<1x256xf32> to vector<4x256xf32>
    %666 = arith.mulf %664, %665 : vector<4x256xf32>
    %667 = arith.addf %655, %666 : vector<4x256xf32>
    %668 = vector.extract_strided_slice %588 {offsets = [14, 0], sizes = [1, 256], strides = [1, 1]} : vector<16x256xf32> to vector<1x256xf32>
    %669 = vector.broadcast %662 : vector<4x1xf32> to vector<4x256xf32>
    %670 = vector.broadcast %668 : vector<1x256xf32> to vector<4x256xf32>
    %671 = arith.mulf %669, %670 : vector<4x256xf32>
    %672 = arith.addf %660, %671 : vector<4x256xf32>
    %c1_235 = arith.constant 1 : index
    %c7_236 = arith.constant 7 : index
    %c0_237 = arith.constant 0 : index
    %c0_238 = arith.constant 0 : index
    %673 = vector.load %arg5[%c1_235, %c7_236, %c0_237, %c0_238] : memref<9x8x4x1xf32, #tpu.memory_space<vmem>>, vector<1x1x4x1xf32>
    %674 = vector.shape_cast %673 : vector<1x1x4x1xf32> to vector<4x1xf32>
    %675 = vector.extract_strided_slice %588 {offsets = [7, 0], sizes = [1, 256], strides = [1, 1]} : vector<16x256xf32> to vector<1x256xf32>
    %676 = vector.broadcast %674 : vector<4x1xf32> to vector<4x256xf32>
    %677 = vector.broadcast %675 : vector<1x256xf32> to vector<4x256xf32>
    %678 = arith.mulf %676, %677 : vector<4x256xf32>
    %679 = arith.addf %667, %678 : vector<4x256xf32>
    %680 = vector.extract_strided_slice %588 {offsets = [15, 0], sizes = [1, 256], strides = [1, 1]} : vector<16x256xf32> to vector<1x256xf32>
    %681 = vector.broadcast %674 : vector<4x1xf32> to vector<4x256xf32>
    %682 = vector.broadcast %680 : vector<1x256xf32> to vector<4x256xf32>
    %683 = arith.mulf %681, %682 : vector<4x256xf32>
    %684 = arith.addf %672, %683 : vector<4x256xf32>
    %c15_i32_239 = arith.constant 15 : i32
    %685 = tpu.dynamic_rotate %478 by %c15_i32_239 dim 1 : vector<16x256xf32>, i32 -> vector<16x256xf32>
    %c2_240 = arith.constant 2 : index
    %c0_241 = arith.constant 0 : index
    %c0_242 = arith.constant 0 : index
    %686 = vector.load %arg2[%c2_240, %c0_241, %c0_242] : memref<9x1x256xf32, #tpu.memory_space<vmem>>, vector<1x1x256xf32>
    %687 = vector.shape_cast %686 : vector<1x1x256xf32> to vector<1x256xf32>
    %688 = vector.broadcast %687 : vector<1x256xf32> to vector<16x256xf32>
    %689 = arith.mulf %685, %688 : vector<16x256xf32>
    %c2_243 = arith.constant 2 : index
    %c0_244 = arith.constant 0 : index
    %c0_245 = arith.constant 0 : index
    %c0_246 = arith.constant 0 : index
    %690 = vector.load %arg5[%c2_243, %c0_244, %c0_245, %c0_246] : memref<9x8x4x1xf32, #tpu.memory_space<vmem>>, vector<1x1x4x1xf32>
    %691 = vector.shape_cast %690 : vector<1x1x4x1xf32> to vector<4x1xf32>
    %692 = vector.extract_strided_slice %689 {offsets = [0, 0], sizes = [1, 256], strides = [1, 1]} : vector<16x256xf32> to vector<1x256xf32>
    %693 = vector.broadcast %691 : vector<4x1xf32> to vector<4x256xf32>
    %694 = vector.broadcast %692 : vector<1x256xf32> to vector<4x256xf32>
    %695 = arith.mulf %693, %694 : vector<4x256xf32>
    %696 = arith.addf %679, %695 : vector<4x256xf32>
    %697 = vector.extract_strided_slice %689 {offsets = [8, 0], sizes = [1, 256], strides = [1, 1]} : vector<16x256xf32> to vector<1x256xf32>
    %698 = vector.broadcast %691 : vector<4x1xf32> to vector<4x256xf32>
    %699 = vector.broadcast %697 : vector<1x256xf32> to vector<4x256xf32>
    %700 = arith.mulf %698, %699 : vector<4x256xf32>
    %701 = arith.addf %684, %700 : vector<4x256xf32>
    %c2_247 = arith.constant 2 : index
    %c1_248 = arith.constant 1 : index
    %c0_249 = arith.constant 0 : index
    %c0_250 = arith.constant 0 : index
    %702 = vector.load %arg5[%c2_247, %c1_248, %c0_249, %c0_250] : memref<9x8x4x1xf32, #tpu.memory_space<vmem>>, vector<1x1x4x1xf32>
    %703 = vector.shape_cast %702 : vector<1x1x4x1xf32> to vector<4x1xf32>
    %704 = vector.extract_strided_slice %689 {offsets = [1, 0], sizes = [1, 256], strides = [1, 1]} : vector<16x256xf32> to vector<1x256xf32>
    %705 = vector.broadcast %703 : vector<4x1xf32> to vector<4x256xf32>
    %706 = vector.broadcast %704 : vector<1x256xf32> to vector<4x256xf32>
    %707 = arith.mulf %705, %706 : vector<4x256xf32>
    %708 = arith.addf %696, %707 : vector<4x256xf32>
    %709 = vector.extract_strided_slice %689 {offsets = [9, 0], sizes = [1, 256], strides = [1, 1]} : vector<16x256xf32> to vector<1x256xf32>
    %710 = vector.broadcast %703 : vector<4x1xf32> to vector<4x256xf32>
    %711 = vector.broadcast %709 : vector<1x256xf32> to vector<4x256xf32>
    %712 = arith.mulf %710, %711 : vector<4x256xf32>
    %713 = arith.addf %701, %712 : vector<4x256xf32>
    %c2_251 = arith.constant 2 : index
    %c2_252 = arith.constant 2 : index
    %c0_253 = arith.constant 0 : index
    %c0_254 = arith.constant 0 : index
    %714 = vector.load %arg5[%c2_251, %c2_252, %c0_253, %c0_254] : memref<9x8x4x1xf32, #tpu.memory_space<vmem>>, vector<1x1x4x1xf32>
    %715 = vector.shape_cast %714 : vector<1x1x4x1xf32> to vector<4x1xf32>
    %716 = vector.extract_strided_slice %689 {offsets = [2, 0], sizes = [1, 256], strides = [1, 1]} : vector<16x256xf32> to vector<1x256xf32>
    %717 = vector.broadcast %715 : vector<4x1xf32> to vector<4x256xf32>
    %718 = vector.broadcast %716 : vector<1x256xf32> to vector<4x256xf32>
    %719 = arith.mulf %717, %718 : vector<4x256xf32>
    %720 = arith.addf %708, %719 : vector<4x256xf32>
    %721 = vector.extract_strided_slice %689 {offsets = [10, 0], sizes = [1, 256], strides = [1, 1]} : vector<16x256xf32> to vector<1x256xf32>
    %722 = vector.broadcast %715 : vector<4x1xf32> to vector<4x256xf32>
    %723 = vector.broadcast %721 : vector<1x256xf32> to vector<4x256xf32>
    %724 = arith.mulf %722, %723 : vector<4x256xf32>
    %725 = arith.addf %713, %724 : vector<4x256xf32>
    %c2_255 = arith.constant 2 : index
    %c3_256 = arith.constant 3 : index
    %c0_257 = arith.constant 0 : index
    %c0_258 = arith.constant 0 : index
    %726 = vector.load %arg5[%c2_255, %c3_256, %c0_257, %c0_258] : memref<9x8x4x1xf32, #tpu.memory_space<vmem>>, vector<1x1x4x1xf32>
    %727 = vector.shape_cast %726 : vector<1x1x4x1xf32> to vector<4x1xf32>
    %728 = vector.extract_strided_slice %689 {offsets = [3, 0], sizes = [1, 256], strides = [1, 1]} : vector<16x256xf32> to vector<1x256xf32>
    %729 = vector.broadcast %727 : vector<4x1xf32> to vector<4x256xf32>
    %730 = vector.broadcast %728 : vector<1x256xf32> to vector<4x256xf32>
    %731 = arith.mulf %729, %730 : vector<4x256xf32>
    %732 = arith.addf %720, %731 : vector<4x256xf32>
    %733 = vector.extract_strided_slice %689 {offsets = [11, 0], sizes = [1, 256], strides = [1, 1]} : vector<16x256xf32> to vector<1x256xf32>
    %734 = vector.broadcast %727 : vector<4x1xf32> to vector<4x256xf32>
    %735 = vector.broadcast %733 : vector<1x256xf32> to vector<4x256xf32>
    %736 = arith.mulf %734, %735 : vector<4x256xf32>
    %737 = arith.addf %725, %736 : vector<4x256xf32>
    %c2_259 = arith.constant 2 : index
    %c4_260 = arith.constant 4 : index
    %c0_261 = arith.constant 0 : index
    %c0_262 = arith.constant 0 : index
    %738 = vector.load %arg5[%c2_259, %c4_260, %c0_261, %c0_262] : memref<9x8x4x1xf32, #tpu.memory_space<vmem>>, vector<1x1x4x1xf32>
    %739 = vector.shape_cast %738 : vector<1x1x4x1xf32> to vector<4x1xf32>
    %740 = vector.extract_strided_slice %689 {offsets = [4, 0], sizes = [1, 256], strides = [1, 1]} : vector<16x256xf32> to vector<1x256xf32>
    %741 = vector.broadcast %739 : vector<4x1xf32> to vector<4x256xf32>
    %742 = vector.broadcast %740 : vector<1x256xf32> to vector<4x256xf32>
    %743 = arith.mulf %741, %742 : vector<4x256xf32>
    %744 = arith.addf %732, %743 : vector<4x256xf32>
    %745 = vector.extract_strided_slice %689 {offsets = [12, 0], sizes = [1, 256], strides = [1, 1]} : vector<16x256xf32> to vector<1x256xf32>
    %746 = vector.broadcast %739 : vector<4x1xf32> to vector<4x256xf32>
    %747 = vector.broadcast %745 : vector<1x256xf32> to vector<4x256xf32>
    %748 = arith.mulf %746, %747 : vector<4x256xf32>
    %749 = arith.addf %737, %748 : vector<4x256xf32>
    %c2_263 = arith.constant 2 : index
    %c5_264 = arith.constant 5 : index
    %c0_265 = arith.constant 0 : index
    %c0_266 = arith.constant 0 : index
    %750 = vector.load %arg5[%c2_263, %c5_264, %c0_265, %c0_266] : memref<9x8x4x1xf32, #tpu.memory_space<vmem>>, vector<1x1x4x1xf32>
    %751 = vector.shape_cast %750 : vector<1x1x4x1xf32> to vector<4x1xf32>
    %752 = vector.extract_strided_slice %689 {offsets = [5, 0], sizes = [1, 256], strides = [1, 1]} : vector<16x256xf32> to vector<1x256xf32>
    %753 = vector.broadcast %751 : vector<4x1xf32> to vector<4x256xf32>
    %754 = vector.broadcast %752 : vector<1x256xf32> to vector<4x256xf32>
    %755 = arith.mulf %753, %754 : vector<4x256xf32>
    %756 = arith.addf %744, %755 : vector<4x256xf32>
    %757 = vector.extract_strided_slice %689 {offsets = [13, 0], sizes = [1, 256], strides = [1, 1]} : vector<16x256xf32> to vector<1x256xf32>
    %758 = vector.broadcast %751 : vector<4x1xf32> to vector<4x256xf32>
    %759 = vector.broadcast %757 : vector<1x256xf32> to vector<4x256xf32>
    %760 = arith.mulf %758, %759 : vector<4x256xf32>
    %761 = arith.addf %749, %760 : vector<4x256xf32>
    %c2_267 = arith.constant 2 : index
    %c6_268 = arith.constant 6 : index
    %c0_269 = arith.constant 0 : index
    %c0_270 = arith.constant 0 : index
    %762 = vector.load %arg5[%c2_267, %c6_268, %c0_269, %c0_270] : memref<9x8x4x1xf32, #tpu.memory_space<vmem>>, vector<1x1x4x1xf32>
    %763 = vector.shape_cast %762 : vector<1x1x4x1xf32> to vector<4x1xf32>
    %764 = vector.extract_strided_slice %689 {offsets = [6, 0], sizes = [1, 256], strides = [1, 1]} : vector<16x256xf32> to vector<1x256xf32>
    %765 = vector.broadcast %763 : vector<4x1xf32> to vector<4x256xf32>
    %766 = vector.broadcast %764 : vector<1x256xf32> to vector<4x256xf32>
    %767 = arith.mulf %765, %766 : vector<4x256xf32>
    %768 = arith.addf %756, %767 : vector<4x256xf32>
    %769 = vector.extract_strided_slice %689 {offsets = [14, 0], sizes = [1, 256], strides = [1, 1]} : vector<16x256xf32> to vector<1x256xf32>
    %770 = vector.broadcast %763 : vector<4x1xf32> to vector<4x256xf32>
    %771 = vector.broadcast %769 : vector<1x256xf32> to vector<4x256xf32>
    %772 = arith.mulf %770, %771 : vector<4x256xf32>
    %773 = arith.addf %761, %772 : vector<4x256xf32>
    %c2_271 = arith.constant 2 : index
    %c7_272 = arith.constant 7 : index
    %c0_273 = arith.constant 0 : index
    %c0_274 = arith.constant 0 : index
    %774 = vector.load %arg5[%c2_271, %c7_272, %c0_273, %c0_274] : memref<9x8x4x1xf32, #tpu.memory_space<vmem>>, vector<1x1x4x1xf32>
    %775 = vector.shape_cast %774 : vector<1x1x4x1xf32> to vector<4x1xf32>
    %776 = vector.extract_strided_slice %689 {offsets = [7, 0], sizes = [1, 256], strides = [1, 1]} : vector<16x256xf32> to vector<1x256xf32>
    %777 = vector.broadcast %775 : vector<4x1xf32> to vector<4x256xf32>
    %778 = vector.broadcast %776 : vector<1x256xf32> to vector<4x256xf32>
    %779 = arith.mulf %777, %778 : vector<4x256xf32>
    %780 = arith.addf %768, %779 : vector<4x256xf32>
    %781 = vector.extract_strided_slice %689 {offsets = [15, 0], sizes = [1, 256], strides = [1, 1]} : vector<16x256xf32> to vector<1x256xf32>
    %782 = vector.broadcast %775 : vector<4x1xf32> to vector<4x256xf32>
    %783 = vector.broadcast %781 : vector<1x256xf32> to vector<4x256xf32>
    %784 = arith.mulf %782, %783 : vector<4x256xf32>
    %785 = arith.addf %773, %784 : vector<4x256xf32>
    %c1_i32_275 = arith.constant 1 : i32
    %786 = tpu.dynamic_rotate %478 by %c1_i32_275 dim 1 : vector<16x256xf32>, i32 -> vector<16x256xf32>
    %c3_276 = arith.constant 3 : index
    %c0_277 = arith.constant 0 : index
    %c0_278 = arith.constant 0 : index
    %787 = vector.load %arg2[%c3_276, %c0_277, %c0_278] : memref<9x1x256xf32, #tpu.memory_space<vmem>>, vector<1x1x256xf32>
    %788 = vector.shape_cast %787 : vector<1x1x256xf32> to vector<1x256xf32>
    %789 = vector.broadcast %788 : vector<1x256xf32> to vector<16x256xf32>
    %790 = arith.mulf %786, %789 : vector<16x256xf32>
    %c3_279 = arith.constant 3 : index
    %c0_280 = arith.constant 0 : index
    %c0_281 = arith.constant 0 : index
    %c0_282 = arith.constant 0 : index
    %791 = vector.load %arg5[%c3_279, %c0_280, %c0_281, %c0_282] : memref<9x8x4x1xf32, #tpu.memory_space<vmem>>, vector<1x1x4x1xf32>
    %792 = vector.shape_cast %791 : vector<1x1x4x1xf32> to vector<4x1xf32>
    %793 = vector.extract_strided_slice %790 {offsets = [0, 0], sizes = [1, 256], strides = [1, 1]} : vector<16x256xf32> to vector<1x256xf32>
    %794 = vector.broadcast %792 : vector<4x1xf32> to vector<4x256xf32>
    %795 = vector.broadcast %793 : vector<1x256xf32> to vector<4x256xf32>
    %796 = arith.mulf %794, %795 : vector<4x256xf32>
    %797 = arith.addf %780, %796 : vector<4x256xf32>
    %798 = vector.extract_strided_slice %790 {offsets = [8, 0], sizes = [1, 256], strides = [1, 1]} : vector<16x256xf32> to vector<1x256xf32>
    %799 = vector.broadcast %792 : vector<4x1xf32> to vector<4x256xf32>
    %800 = vector.broadcast %798 : vector<1x256xf32> to vector<4x256xf32>
    %801 = arith.mulf %799, %800 : vector<4x256xf32>
    %802 = arith.addf %785, %801 : vector<4x256xf32>
    %c3_283 = arith.constant 3 : index
    %c1_284 = arith.constant 1 : index
    %c0_285 = arith.constant 0 : index
    %c0_286 = arith.constant 0 : index
    %803 = vector.load %arg5[%c3_283, %c1_284, %c0_285, %c0_286] : memref<9x8x4x1xf32, #tpu.memory_space<vmem>>, vector<1x1x4x1xf32>
    %804 = vector.shape_cast %803 : vector<1x1x4x1xf32> to vector<4x1xf32>
    %805 = vector.extract_strided_slice %790 {offsets = [1, 0], sizes = [1, 256], strides = [1, 1]} : vector<16x256xf32> to vector<1x256xf32>
    %806 = vector.broadcast %804 : vector<4x1xf32> to vector<4x256xf32>
    %807 = vector.broadcast %805 : vector<1x256xf32> to vector<4x256xf32>
    %808 = arith.mulf %806, %807 : vector<4x256xf32>
    %809 = arith.addf %797, %808 : vector<4x256xf32>
    %810 = vector.extract_strided_slice %790 {offsets = [9, 0], sizes = [1, 256], strides = [1, 1]} : vector<16x256xf32> to vector<1x256xf32>
    %811 = vector.broadcast %804 : vector<4x1xf32> to vector<4x256xf32>
    %812 = vector.broadcast %810 : vector<1x256xf32> to vector<4x256xf32>
    %813 = arith.mulf %811, %812 : vector<4x256xf32>
    %814 = arith.addf %802, %813 : vector<4x256xf32>
    %c3_287 = arith.constant 3 : index
    %c2_288 = arith.constant 2 : index
    %c0_289 = arith.constant 0 : index
    %c0_290 = arith.constant 0 : index
    %815 = vector.load %arg5[%c3_287, %c2_288, %c0_289, %c0_290] : memref<9x8x4x1xf32, #tpu.memory_space<vmem>>, vector<1x1x4x1xf32>
    %816 = vector.shape_cast %815 : vector<1x1x4x1xf32> to vector<4x1xf32>
    %817 = vector.extract_strided_slice %790 {offsets = [2, 0], sizes = [1, 256], strides = [1, 1]} : vector<16x256xf32> to vector<1x256xf32>
    %818 = vector.broadcast %816 : vector<4x1xf32> to vector<4x256xf32>
    %819 = vector.broadcast %817 : vector<1x256xf32> to vector<4x256xf32>
    %820 = arith.mulf %818, %819 : vector<4x256xf32>
    %821 = arith.addf %809, %820 : vector<4x256xf32>
    %822 = vector.extract_strided_slice %790 {offsets = [10, 0], sizes = [1, 256], strides = [1, 1]} : vector<16x256xf32> to vector<1x256xf32>
    %823 = vector.broadcast %816 : vector<4x1xf32> to vector<4x256xf32>
    %824 = vector.broadcast %822 : vector<1x256xf32> to vector<4x256xf32>
    %825 = arith.mulf %823, %824 : vector<4x256xf32>
    %826 = arith.addf %814, %825 : vector<4x256xf32>
    %c3_291 = arith.constant 3 : index
    %c3_292 = arith.constant 3 : index
    %c0_293 = arith.constant 0 : index
    %c0_294 = arith.constant 0 : index
    %827 = vector.load %arg5[%c3_291, %c3_292, %c0_293, %c0_294] : memref<9x8x4x1xf32, #tpu.memory_space<vmem>>, vector<1x1x4x1xf32>
    %828 = vector.shape_cast %827 : vector<1x1x4x1xf32> to vector<4x1xf32>
    %829 = vector.extract_strided_slice %790 {offsets = [3, 0], sizes = [1, 256], strides = [1, 1]} : vector<16x256xf32> to vector<1x256xf32>
    %830 = vector.broadcast %828 : vector<4x1xf32> to vector<4x256xf32>
    %831 = vector.broadcast %829 : vector<1x256xf32> to vector<4x256xf32>
    %832 = arith.mulf %830, %831 : vector<4x256xf32>
    %833 = arith.addf %821, %832 : vector<4x256xf32>
    %834 = vector.extract_strided_slice %790 {offsets = [11, 0], sizes = [1, 256], strides = [1, 1]} : vector<16x256xf32> to vector<1x256xf32>
    %835 = vector.broadcast %828 : vector<4x1xf32> to vector<4x256xf32>
    %836 = vector.broadcast %834 : vector<1x256xf32> to vector<4x256xf32>
    %837 = arith.mulf %835, %836 : vector<4x256xf32>
    %838 = arith.addf %826, %837 : vector<4x256xf32>
    %c3_295 = arith.constant 3 : index
    %c4_296 = arith.constant 4 : index
    %c0_297 = arith.constant 0 : index
    %c0_298 = arith.constant 0 : index
    %839 = vector.load %arg5[%c3_295, %c4_296, %c0_297, %c0_298] : memref<9x8x4x1xf32, #tpu.memory_space<vmem>>, vector<1x1x4x1xf32>
    %840 = vector.shape_cast %839 : vector<1x1x4x1xf32> to vector<4x1xf32>
    %841 = vector.extract_strided_slice %790 {offsets = [4, 0], sizes = [1, 256], strides = [1, 1]} : vector<16x256xf32> to vector<1x256xf32>
    %842 = vector.broadcast %840 : vector<4x1xf32> to vector<4x256xf32>
    %843 = vector.broadcast %841 : vector<1x256xf32> to vector<4x256xf32>
    %844 = arith.mulf %842, %843 : vector<4x256xf32>
    %845 = arith.addf %833, %844 : vector<4x256xf32>
    %846 = vector.extract_strided_slice %790 {offsets = [12, 0], sizes = [1, 256], strides = [1, 1]} : vector<16x256xf32> to vector<1x256xf32>
    %847 = vector.broadcast %840 : vector<4x1xf32> to vector<4x256xf32>
    %848 = vector.broadcast %846 : vector<1x256xf32> to vector<4x256xf32>
    %849 = arith.mulf %847, %848 : vector<4x256xf32>
    %850 = arith.addf %838, %849 : vector<4x256xf32>
    %c3_299 = arith.constant 3 : index
    %c5_300 = arith.constant 5 : index
    %c0_301 = arith.constant 0 : index
    %c0_302 = arith.constant 0 : index
    %851 = vector.load %arg5[%c3_299, %c5_300, %c0_301, %c0_302] : memref<9x8x4x1xf32, #tpu.memory_space<vmem>>, vector<1x1x4x1xf32>
    %852 = vector.shape_cast %851 : vector<1x1x4x1xf32> to vector<4x1xf32>
    %853 = vector.extract_strided_slice %790 {offsets = [5, 0], sizes = [1, 256], strides = [1, 1]} : vector<16x256xf32> to vector<1x256xf32>
    %854 = vector.broadcast %852 : vector<4x1xf32> to vector<4x256xf32>
    %855 = vector.broadcast %853 : vector<1x256xf32> to vector<4x256xf32>
    %856 = arith.mulf %854, %855 : vector<4x256xf32>
    %857 = arith.addf %845, %856 : vector<4x256xf32>
    %858 = vector.extract_strided_slice %790 {offsets = [13, 0], sizes = [1, 256], strides = [1, 1]} : vector<16x256xf32> to vector<1x256xf32>
    %859 = vector.broadcast %852 : vector<4x1xf32> to vector<4x256xf32>
    %860 = vector.broadcast %858 : vector<1x256xf32> to vector<4x256xf32>
    %861 = arith.mulf %859, %860 : vector<4x256xf32>
    %862 = arith.addf %850, %861 : vector<4x256xf32>
    %c3_303 = arith.constant 3 : index
    %c6_304 = arith.constant 6 : index
    %c0_305 = arith.constant 0 : index
    %c0_306 = arith.constant 0 : index
    %863 = vector.load %arg5[%c3_303, %c6_304, %c0_305, %c0_306] : memref<9x8x4x1xf32, #tpu.memory_space<vmem>>, vector<1x1x4x1xf32>
    %864 = vector.shape_cast %863 : vector<1x1x4x1xf32> to vector<4x1xf32>
    %865 = vector.extract_strided_slice %790 {offsets = [6, 0], sizes = [1, 256], strides = [1, 1]} : vector<16x256xf32> to vector<1x256xf32>
    %866 = vector.broadcast %864 : vector<4x1xf32> to vector<4x256xf32>
    %867 = vector.broadcast %865 : vector<1x256xf32> to vector<4x256xf32>
    %868 = arith.mulf %866, %867 : vector<4x256xf32>
    %869 = arith.addf %857, %868 : vector<4x256xf32>
    %870 = vector.extract_strided_slice %790 {offsets = [14, 0], sizes = [1, 256], strides = [1, 1]} : vector<16x256xf32> to vector<1x256xf32>
    %871 = vector.broadcast %864 : vector<4x1xf32> to vector<4x256xf32>
    %872 = vector.broadcast %870 : vector<1x256xf32> to vector<4x256xf32>
    %873 = arith.mulf %871, %872 : vector<4x256xf32>
    %874 = arith.addf %862, %873 : vector<4x256xf32>
    %c3_307 = arith.constant 3 : index
    %c7_308 = arith.constant 7 : index
    %c0_309 = arith.constant 0 : index
    %c0_310 = arith.constant 0 : index
    %875 = vector.load %arg5[%c3_307, %c7_308, %c0_309, %c0_310] : memref<9x8x4x1xf32, #tpu.memory_space<vmem>>, vector<1x1x4x1xf32>
    %876 = vector.shape_cast %875 : vector<1x1x4x1xf32> to vector<4x1xf32>
    %877 = vector.extract_strided_slice %790 {offsets = [7, 0], sizes = [1, 256], strides = [1, 1]} : vector<16x256xf32> to vector<1x256xf32>
    %878 = vector.broadcast %876 : vector<4x1xf32> to vector<4x256xf32>
    %879 = vector.broadcast %877 : vector<1x256xf32> to vector<4x256xf32>
    %880 = arith.mulf %878, %879 : vector<4x256xf32>
    %881 = arith.addf %869, %880 : vector<4x256xf32>
    %882 = vector.extract_strided_slice %790 {offsets = [15, 0], sizes = [1, 256], strides = [1, 1]} : vector<16x256xf32> to vector<1x256xf32>
    %883 = vector.broadcast %876 : vector<4x1xf32> to vector<4x256xf32>
    %884 = vector.broadcast %882 : vector<1x256xf32> to vector<4x256xf32>
    %885 = arith.mulf %883, %884 : vector<4x256xf32>
    %886 = arith.addf %874, %885 : vector<4x256xf32>
    %c4_311 = arith.constant 4 : index
    %c0_312 = arith.constant 0 : index
    %c0_313 = arith.constant 0 : index
    %c0_314 = arith.constant 0 : index
    %887 = vector.load %arg5[%c4_311, %c0_312, %c0_313, %c0_314] : memref<9x8x4x1xf32, #tpu.memory_space<vmem>>, vector<1x1x4x1xf32>
    %888 = vector.shape_cast %887 : vector<1x1x4x1xf32> to vector<4x1xf32>
    %889 = vector.extract_strided_slice %478 {offsets = [0, 0], sizes = [1, 256], strides = [1, 1]} : vector<16x256xf32> to vector<1x256xf32>
    %890 = vector.broadcast %888 : vector<4x1xf32> to vector<4x256xf32>
    %891 = vector.broadcast %889 : vector<1x256xf32> to vector<4x256xf32>
    %892 = arith.mulf %890, %891 : vector<4x256xf32>
    %893 = arith.addf %881, %892 : vector<4x256xf32>
    %894 = vector.extract_strided_slice %478 {offsets = [8, 0], sizes = [1, 256], strides = [1, 1]} : vector<16x256xf32> to vector<1x256xf32>
    %895 = vector.broadcast %888 : vector<4x1xf32> to vector<4x256xf32>
    %896 = vector.broadcast %894 : vector<1x256xf32> to vector<4x256xf32>
    %897 = arith.mulf %895, %896 : vector<4x256xf32>
    %898 = arith.addf %886, %897 : vector<4x256xf32>
    %c4_315 = arith.constant 4 : index
    %c1_316 = arith.constant 1 : index
    %c0_317 = arith.constant 0 : index
    %c0_318 = arith.constant 0 : index
    %899 = vector.load %arg5[%c4_315, %c1_316, %c0_317, %c0_318] : memref<9x8x4x1xf32, #tpu.memory_space<vmem>>, vector<1x1x4x1xf32>
    %900 = vector.shape_cast %899 : vector<1x1x4x1xf32> to vector<4x1xf32>
    %901 = vector.extract_strided_slice %478 {offsets = [1, 0], sizes = [1, 256], strides = [1, 1]} : vector<16x256xf32> to vector<1x256xf32>
    %902 = vector.broadcast %900 : vector<4x1xf32> to vector<4x256xf32>
    %903 = vector.broadcast %901 : vector<1x256xf32> to vector<4x256xf32>
    %904 = arith.mulf %902, %903 : vector<4x256xf32>
    %905 = arith.addf %893, %904 : vector<4x256xf32>
    %906 = vector.extract_strided_slice %478 {offsets = [9, 0], sizes = [1, 256], strides = [1, 1]} : vector<16x256xf32> to vector<1x256xf32>
    %907 = vector.broadcast %900 : vector<4x1xf32> to vector<4x256xf32>
    %908 = vector.broadcast %906 : vector<1x256xf32> to vector<4x256xf32>
    %909 = arith.mulf %907, %908 : vector<4x256xf32>
    %910 = arith.addf %898, %909 : vector<4x256xf32>
    %c4_319 = arith.constant 4 : index
    %c2_320 = arith.constant 2 : index
    %c0_321 = arith.constant 0 : index
    %c0_322 = arith.constant 0 : index
    %911 = vector.load %arg5[%c4_319, %c2_320, %c0_321, %c0_322] : memref<9x8x4x1xf32, #tpu.memory_space<vmem>>, vector<1x1x4x1xf32>
    %912 = vector.shape_cast %911 : vector<1x1x4x1xf32> to vector<4x1xf32>
    %913 = vector.extract_strided_slice %478 {offsets = [2, 0], sizes = [1, 256], strides = [1, 1]} : vector<16x256xf32> to vector<1x256xf32>
    %914 = vector.broadcast %912 : vector<4x1xf32> to vector<4x256xf32>
    %915 = vector.broadcast %913 : vector<1x256xf32> to vector<4x256xf32>
    %916 = arith.mulf %914, %915 : vector<4x256xf32>
    %917 = arith.addf %905, %916 : vector<4x256xf32>
    %918 = vector.extract_strided_slice %478 {offsets = [10, 0], sizes = [1, 256], strides = [1, 1]} : vector<16x256xf32> to vector<1x256xf32>
    %919 = vector.broadcast %912 : vector<4x1xf32> to vector<4x256xf32>
    %920 = vector.broadcast %918 : vector<1x256xf32> to vector<4x256xf32>
    %921 = arith.mulf %919, %920 : vector<4x256xf32>
    %922 = arith.addf %910, %921 : vector<4x256xf32>
    %c4_323 = arith.constant 4 : index
    %c3_324 = arith.constant 3 : index
    %c0_325 = arith.constant 0 : index
    %c0_326 = arith.constant 0 : index
    %923 = vector.load %arg5[%c4_323, %c3_324, %c0_325, %c0_326] : memref<9x8x4x1xf32, #tpu.memory_space<vmem>>, vector<1x1x4x1xf32>
    %924 = vector.shape_cast %923 : vector<1x1x4x1xf32> to vector<4x1xf32>
    %925 = vector.extract_strided_slice %478 {offsets = [3, 0], sizes = [1, 256], strides = [1, 1]} : vector<16x256xf32> to vector<1x256xf32>
    %926 = vector.broadcast %924 : vector<4x1xf32> to vector<4x256xf32>
    %927 = vector.broadcast %925 : vector<1x256xf32> to vector<4x256xf32>
    %928 = arith.mulf %926, %927 : vector<4x256xf32>
    %929 = arith.addf %917, %928 : vector<4x256xf32>
    %930 = vector.extract_strided_slice %478 {offsets = [11, 0], sizes = [1, 256], strides = [1, 1]} : vector<16x256xf32> to vector<1x256xf32>
    %931 = vector.broadcast %924 : vector<4x1xf32> to vector<4x256xf32>
    %932 = vector.broadcast %930 : vector<1x256xf32> to vector<4x256xf32>
    %933 = arith.mulf %931, %932 : vector<4x256xf32>
    %934 = arith.addf %922, %933 : vector<4x256xf32>
    %c4_327 = arith.constant 4 : index
    %c4_328 = arith.constant 4 : index
    %c0_329 = arith.constant 0 : index
    %c0_330 = arith.constant 0 : index
    %935 = vector.load %arg5[%c4_327, %c4_328, %c0_329, %c0_330] : memref<9x8x4x1xf32, #tpu.memory_space<vmem>>, vector<1x1x4x1xf32>
    %936 = vector.shape_cast %935 : vector<1x1x4x1xf32> to vector<4x1xf32>
    %937 = vector.extract_strided_slice %478 {offsets = [4, 0], sizes = [1, 256], strides = [1, 1]} : vector<16x256xf32> to vector<1x256xf32>
    %938 = vector.broadcast %936 : vector<4x1xf32> to vector<4x256xf32>
    %939 = vector.broadcast %937 : vector<1x256xf32> to vector<4x256xf32>
    %940 = arith.mulf %938, %939 : vector<4x256xf32>
    %941 = arith.addf %929, %940 : vector<4x256xf32>
    %942 = vector.extract_strided_slice %478 {offsets = [12, 0], sizes = [1, 256], strides = [1, 1]} : vector<16x256xf32> to vector<1x256xf32>
    %943 = vector.broadcast %936 : vector<4x1xf32> to vector<4x256xf32>
    %944 = vector.broadcast %942 : vector<1x256xf32> to vector<4x256xf32>
    %945 = arith.mulf %943, %944 : vector<4x256xf32>
    %946 = arith.addf %934, %945 : vector<4x256xf32>
    %c4_331 = arith.constant 4 : index
    %c5_332 = arith.constant 5 : index
    %c0_333 = arith.constant 0 : index
    %c0_334 = arith.constant 0 : index
    %947 = vector.load %arg5[%c4_331, %c5_332, %c0_333, %c0_334] : memref<9x8x4x1xf32, #tpu.memory_space<vmem>>, vector<1x1x4x1xf32>
    %948 = vector.shape_cast %947 : vector<1x1x4x1xf32> to vector<4x1xf32>
    %949 = vector.extract_strided_slice %478 {offsets = [5, 0], sizes = [1, 256], strides = [1, 1]} : vector<16x256xf32> to vector<1x256xf32>
    %950 = vector.broadcast %948 : vector<4x1xf32> to vector<4x256xf32>
    %951 = vector.broadcast %949 : vector<1x256xf32> to vector<4x256xf32>
    %952 = arith.mulf %950, %951 : vector<4x256xf32>
    %953 = arith.addf %941, %952 : vector<4x256xf32>
    %954 = vector.extract_strided_slice %478 {offsets = [13, 0], sizes = [1, 256], strides = [1, 1]} : vector<16x256xf32> to vector<1x256xf32>
    %955 = vector.broadcast %948 : vector<4x1xf32> to vector<4x256xf32>
    %956 = vector.broadcast %954 : vector<1x256xf32> to vector<4x256xf32>
    %957 = arith.mulf %955, %956 : vector<4x256xf32>
    %958 = arith.addf %946, %957 : vector<4x256xf32>
    %c4_335 = arith.constant 4 : index
    %c6_336 = arith.constant 6 : index
    %c0_337 = arith.constant 0 : index
    %c0_338 = arith.constant 0 : index
    %959 = vector.load %arg5[%c4_335, %c6_336, %c0_337, %c0_338] : memref<9x8x4x1xf32, #tpu.memory_space<vmem>>, vector<1x1x4x1xf32>
    %960 = vector.shape_cast %959 : vector<1x1x4x1xf32> to vector<4x1xf32>
    %961 = vector.extract_strided_slice %478 {offsets = [6, 0], sizes = [1, 256], strides = [1, 1]} : vector<16x256xf32> to vector<1x256xf32>
    %962 = vector.broadcast %960 : vector<4x1xf32> to vector<4x256xf32>
    %963 = vector.broadcast %961 : vector<1x256xf32> to vector<4x256xf32>
    %964 = arith.mulf %962, %963 : vector<4x256xf32>
    %965 = arith.addf %953, %964 : vector<4x256xf32>
    %966 = vector.extract_strided_slice %478 {offsets = [14, 0], sizes = [1, 256], strides = [1, 1]} : vector<16x256xf32> to vector<1x256xf32>
    %967 = vector.broadcast %960 : vector<4x1xf32> to vector<4x256xf32>
    %968 = vector.broadcast %966 : vector<1x256xf32> to vector<4x256xf32>
    %969 = arith.mulf %967, %968 : vector<4x256xf32>
    %970 = arith.addf %958, %969 : vector<4x256xf32>
    %c4_339 = arith.constant 4 : index
    %c7_340 = arith.constant 7 : index
    %c0_341 = arith.constant 0 : index
    %c0_342 = arith.constant 0 : index
    %971 = vector.load %arg5[%c4_339, %c7_340, %c0_341, %c0_342] : memref<9x8x4x1xf32, #tpu.memory_space<vmem>>, vector<1x1x4x1xf32>
    %972 = vector.shape_cast %971 : vector<1x1x4x1xf32> to vector<4x1xf32>
    %973 = vector.extract_strided_slice %478 {offsets = [7, 0], sizes = [1, 256], strides = [1, 1]} : vector<16x256xf32> to vector<1x256xf32>
    %974 = vector.broadcast %972 : vector<4x1xf32> to vector<4x256xf32>
    %975 = vector.broadcast %973 : vector<1x256xf32> to vector<4x256xf32>
    %976 = arith.mulf %974, %975 : vector<4x256xf32>
    %977 = arith.addf %965, %976 : vector<4x256xf32>
    %978 = vector.extract_strided_slice %478 {offsets = [15, 0], sizes = [1, 256], strides = [1, 1]} : vector<16x256xf32> to vector<1x256xf32>
    %979 = vector.broadcast %972 : vector<4x1xf32> to vector<4x256xf32>
    %980 = vector.broadcast %978 : vector<1x256xf32> to vector<4x256xf32>
    %981 = arith.mulf %979, %980 : vector<4x256xf32>
    %982 = arith.addf %970, %981 : vector<4x256xf32>
    %c255_i32_343 = arith.constant 255 : i32
    %983 = tpu.dynamic_rotate %478 by %c255_i32_343 dim 1 : vector<16x256xf32>, i32 -> vector<16x256xf32>
    %c5_344 = arith.constant 5 : index
    %c0_345 = arith.constant 0 : index
    %c0_346 = arith.constant 0 : index
    %984 = vector.load %arg2[%c5_344, %c0_345, %c0_346] : memref<9x1x256xf32, #tpu.memory_space<vmem>>, vector<1x1x256xf32>
    %985 = vector.shape_cast %984 : vector<1x1x256xf32> to vector<1x256xf32>
    %986 = vector.broadcast %985 : vector<1x256xf32> to vector<16x256xf32>
    %987 = arith.mulf %983, %986 : vector<16x256xf32>
    %c5_347 = arith.constant 5 : index
    %c0_348 = arith.constant 0 : index
    %c0_349 = arith.constant 0 : index
    %c0_350 = arith.constant 0 : index
    %988 = vector.load %arg5[%c5_347, %c0_348, %c0_349, %c0_350] : memref<9x8x4x1xf32, #tpu.memory_space<vmem>>, vector<1x1x4x1xf32>
    %989 = vector.shape_cast %988 : vector<1x1x4x1xf32> to vector<4x1xf32>
    %990 = vector.extract_strided_slice %987 {offsets = [0, 0], sizes = [1, 256], strides = [1, 1]} : vector<16x256xf32> to vector<1x256xf32>
    %991 = vector.broadcast %989 : vector<4x1xf32> to vector<4x256xf32>
    %992 = vector.broadcast %990 : vector<1x256xf32> to vector<4x256xf32>
    %993 = arith.mulf %991, %992 : vector<4x256xf32>
    %994 = arith.addf %977, %993 : vector<4x256xf32>
    %995 = vector.extract_strided_slice %987 {offsets = [8, 0], sizes = [1, 256], strides = [1, 1]} : vector<16x256xf32> to vector<1x256xf32>
    %996 = vector.broadcast %989 : vector<4x1xf32> to vector<4x256xf32>
    %997 = vector.broadcast %995 : vector<1x256xf32> to vector<4x256xf32>
    %998 = arith.mulf %996, %997 : vector<4x256xf32>
    %999 = arith.addf %982, %998 : vector<4x256xf32>
    %c5_351 = arith.constant 5 : index
    %c1_352 = arith.constant 1 : index
    %c0_353 = arith.constant 0 : index
    %c0_354 = arith.constant 0 : index
    %1000 = vector.load %arg5[%c5_351, %c1_352, %c0_353, %c0_354] : memref<9x8x4x1xf32, #tpu.memory_space<vmem>>, vector<1x1x4x1xf32>
    %1001 = vector.shape_cast %1000 : vector<1x1x4x1xf32> to vector<4x1xf32>
    %1002 = vector.extract_strided_slice %987 {offsets = [1, 0], sizes = [1, 256], strides = [1, 1]} : vector<16x256xf32> to vector<1x256xf32>
    %1003 = vector.broadcast %1001 : vector<4x1xf32> to vector<4x256xf32>
    %1004 = vector.broadcast %1002 : vector<1x256xf32> to vector<4x256xf32>
    %1005 = arith.mulf %1003, %1004 : vector<4x256xf32>
    %1006 = arith.addf %994, %1005 : vector<4x256xf32>
    %1007 = vector.extract_strided_slice %987 {offsets = [9, 0], sizes = [1, 256], strides = [1, 1]} : vector<16x256xf32> to vector<1x256xf32>
    %1008 = vector.broadcast %1001 : vector<4x1xf32> to vector<4x256xf32>
    %1009 = vector.broadcast %1007 : vector<1x256xf32> to vector<4x256xf32>
    %1010 = arith.mulf %1008, %1009 : vector<4x256xf32>
    %1011 = arith.addf %999, %1010 : vector<4x256xf32>
    %c5_355 = arith.constant 5 : index
    %c2_356 = arith.constant 2 : index
    %c0_357 = arith.constant 0 : index
    %c0_358 = arith.constant 0 : index
    %1012 = vector.load %arg5[%c5_355, %c2_356, %c0_357, %c0_358] : memref<9x8x4x1xf32, #tpu.memory_space<vmem>>, vector<1x1x4x1xf32>
    %1013 = vector.shape_cast %1012 : vector<1x1x4x1xf32> to vector<4x1xf32>
    %1014 = vector.extract_strided_slice %987 {offsets = [2, 0], sizes = [1, 256], strides = [1, 1]} : vector<16x256xf32> to vector<1x256xf32>
    %1015 = vector.broadcast %1013 : vector<4x1xf32> to vector<4x256xf32>
    %1016 = vector.broadcast %1014 : vector<1x256xf32> to vector<4x256xf32>
    %1017 = arith.mulf %1015, %1016 : vector<4x256xf32>
    %1018 = arith.addf %1006, %1017 : vector<4x256xf32>
    %1019 = vector.extract_strided_slice %987 {offsets = [10, 0], sizes = [1, 256], strides = [1, 1]} : vector<16x256xf32> to vector<1x256xf32>
    %1020 = vector.broadcast %1013 : vector<4x1xf32> to vector<4x256xf32>
    %1021 = vector.broadcast %1019 : vector<1x256xf32> to vector<4x256xf32>
    %1022 = arith.mulf %1020, %1021 : vector<4x256xf32>
    %1023 = arith.addf %1011, %1022 : vector<4x256xf32>
    %c5_359 = arith.constant 5 : index
    %c3_360 = arith.constant 3 : index
    %c0_361 = arith.constant 0 : index
    %c0_362 = arith.constant 0 : index
    %1024 = vector.load %arg5[%c5_359, %c3_360, %c0_361, %c0_362] : memref<9x8x4x1xf32, #tpu.memory_space<vmem>>, vector<1x1x4x1xf32>
    %1025 = vector.shape_cast %1024 : vector<1x1x4x1xf32> to vector<4x1xf32>
    %1026 = vector.extract_strided_slice %987 {offsets = [3, 0], sizes = [1, 256], strides = [1, 1]} : vector<16x256xf32> to vector<1x256xf32>
    %1027 = vector.broadcast %1025 : vector<4x1xf32> to vector<4x256xf32>
    %1028 = vector.broadcast %1026 : vector<1x256xf32> to vector<4x256xf32>
    %1029 = arith.mulf %1027, %1028 : vector<4x256xf32>
    %1030 = arith.addf %1018, %1029 : vector<4x256xf32>
    %1031 = vector.extract_strided_slice %987 {offsets = [11, 0], sizes = [1, 256], strides = [1, 1]} : vector<16x256xf32> to vector<1x256xf32>
    %1032 = vector.broadcast %1025 : vector<4x1xf32> to vector<4x256xf32>
    %1033 = vector.broadcast %1031 : vector<1x256xf32> to vector<4x256xf32>
    %1034 = arith.mulf %1032, %1033 : vector<4x256xf32>
    %1035 = arith.addf %1023, %1034 : vector<4x256xf32>
    %c5_363 = arith.constant 5 : index
    %c4_364 = arith.constant 4 : index
    %c0_365 = arith.constant 0 : index
    %c0_366 = arith.constant 0 : index
    %1036 = vector.load %arg5[%c5_363, %c4_364, %c0_365, %c0_366] : memref<9x8x4x1xf32, #tpu.memory_space<vmem>>, vector<1x1x4x1xf32>
    %1037 = vector.shape_cast %1036 : vector<1x1x4x1xf32> to vector<4x1xf32>
    %1038 = vector.extract_strided_slice %987 {offsets = [4, 0], sizes = [1, 256], strides = [1, 1]} : vector<16x256xf32> to vector<1x256xf32>
    %1039 = vector.broadcast %1037 : vector<4x1xf32> to vector<4x256xf32>
    %1040 = vector.broadcast %1038 : vector<1x256xf32> to vector<4x256xf32>
    %1041 = arith.mulf %1039, %1040 : vector<4x256xf32>
    %1042 = arith.addf %1030, %1041 : vector<4x256xf32>
    %1043 = vector.extract_strided_slice %987 {offsets = [12, 0], sizes = [1, 256], strides = [1, 1]} : vector<16x256xf32> to vector<1x256xf32>
    %1044 = vector.broadcast %1037 : vector<4x1xf32> to vector<4x256xf32>
    %1045 = vector.broadcast %1043 : vector<1x256xf32> to vector<4x256xf32>
    %1046 = arith.mulf %1044, %1045 : vector<4x256xf32>
    %1047 = arith.addf %1035, %1046 : vector<4x256xf32>
    %c5_367 = arith.constant 5 : index
    %c5_368 = arith.constant 5 : index
    %c0_369 = arith.constant 0 : index
    %c0_370 = arith.constant 0 : index
    %1048 = vector.load %arg5[%c5_367, %c5_368, %c0_369, %c0_370] : memref<9x8x4x1xf32, #tpu.memory_space<vmem>>, vector<1x1x4x1xf32>
    %1049 = vector.shape_cast %1048 : vector<1x1x4x1xf32> to vector<4x1xf32>
    %1050 = vector.extract_strided_slice %987 {offsets = [5, 0], sizes = [1, 256], strides = [1, 1]} : vector<16x256xf32> to vector<1x256xf32>
    %1051 = vector.broadcast %1049 : vector<4x1xf32> to vector<4x256xf32>
    %1052 = vector.broadcast %1050 : vector<1x256xf32> to vector<4x256xf32>
    %1053 = arith.mulf %1051, %1052 : vector<4x256xf32>
    %1054 = arith.addf %1042, %1053 : vector<4x256xf32>
    %1055 = vector.extract_strided_slice %987 {offsets = [13, 0], sizes = [1, 256], strides = [1, 1]} : vector<16x256xf32> to vector<1x256xf32>
    %1056 = vector.broadcast %1049 : vector<4x1xf32> to vector<4x256xf32>
    %1057 = vector.broadcast %1055 : vector<1x256xf32> to vector<4x256xf32>
    %1058 = arith.mulf %1056, %1057 : vector<4x256xf32>
    %1059 = arith.addf %1047, %1058 : vector<4x256xf32>
    %c5_371 = arith.constant 5 : index
    %c6_372 = arith.constant 6 : index
    %c0_373 = arith.constant 0 : index
    %c0_374 = arith.constant 0 : index
    %1060 = vector.load %arg5[%c5_371, %c6_372, %c0_373, %c0_374] : memref<9x8x4x1xf32, #tpu.memory_space<vmem>>, vector<1x1x4x1xf32>
    %1061 = vector.shape_cast %1060 : vector<1x1x4x1xf32> to vector<4x1xf32>
    %1062 = vector.extract_strided_slice %987 {offsets = [6, 0], sizes = [1, 256], strides = [1, 1]} : vector<16x256xf32> to vector<1x256xf32>
    %1063 = vector.broadcast %1061 : vector<4x1xf32> to vector<4x256xf32>
    %1064 = vector.broadcast %1062 : vector<1x256xf32> to vector<4x256xf32>
    %1065 = arith.mulf %1063, %1064 : vector<4x256xf32>
    %1066 = arith.addf %1054, %1065 : vector<4x256xf32>
    %1067 = vector.extract_strided_slice %987 {offsets = [14, 0], sizes = [1, 256], strides = [1, 1]} : vector<16x256xf32> to vector<1x256xf32>
    %1068 = vector.broadcast %1061 : vector<4x1xf32> to vector<4x256xf32>
    %1069 = vector.broadcast %1067 : vector<1x256xf32> to vector<4x256xf32>
    %1070 = arith.mulf %1068, %1069 : vector<4x256xf32>
    %1071 = arith.addf %1059, %1070 : vector<4x256xf32>
    %c5_375 = arith.constant 5 : index
    %c7_376 = arith.constant 7 : index
    %c0_377 = arith.constant 0 : index
    %c0_378 = arith.constant 0 : index
    %1072 = vector.load %arg5[%c5_375, %c7_376, %c0_377, %c0_378] : memref<9x8x4x1xf32, #tpu.memory_space<vmem>>, vector<1x1x4x1xf32>
    %1073 = vector.shape_cast %1072 : vector<1x1x4x1xf32> to vector<4x1xf32>
    %1074 = vector.extract_strided_slice %987 {offsets = [7, 0], sizes = [1, 256], strides = [1, 1]} : vector<16x256xf32> to vector<1x256xf32>
    %1075 = vector.broadcast %1073 : vector<4x1xf32> to vector<4x256xf32>
    %1076 = vector.broadcast %1074 : vector<1x256xf32> to vector<4x256xf32>
    %1077 = arith.mulf %1075, %1076 : vector<4x256xf32>
    %1078 = arith.addf %1066, %1077 : vector<4x256xf32>
    %1079 = vector.extract_strided_slice %987 {offsets = [15, 0], sizes = [1, 256], strides = [1, 1]} : vector<16x256xf32> to vector<1x256xf32>
    %1080 = vector.broadcast %1073 : vector<4x1xf32> to vector<4x256xf32>
    %1081 = vector.broadcast %1079 : vector<1x256xf32> to vector<4x256xf32>
    %1082 = arith.mulf %1080, %1081 : vector<4x256xf32>
    %1083 = arith.addf %1071, %1082 : vector<4x256xf32>
    %c241_i32_379 = arith.constant 241 : i32
    %1084 = tpu.dynamic_rotate %478 by %c241_i32_379 dim 1 : vector<16x256xf32>, i32 -> vector<16x256xf32>
    %c6_380 = arith.constant 6 : index
    %c0_381 = arith.constant 0 : index
    %c0_382 = arith.constant 0 : index
    %1085 = vector.load %arg2[%c6_380, %c0_381, %c0_382] : memref<9x1x256xf32, #tpu.memory_space<vmem>>, vector<1x1x256xf32>
    %1086 = vector.shape_cast %1085 : vector<1x1x256xf32> to vector<1x256xf32>
    %1087 = vector.broadcast %1086 : vector<1x256xf32> to vector<16x256xf32>
    %1088 = arith.mulf %1084, %1087 : vector<16x256xf32>
    %c6_383 = arith.constant 6 : index
    %c0_384 = arith.constant 0 : index
    %c0_385 = arith.constant 0 : index
    %c0_386 = arith.constant 0 : index
    %1089 = vector.load %arg5[%c6_383, %c0_384, %c0_385, %c0_386] : memref<9x8x4x1xf32, #tpu.memory_space<vmem>>, vector<1x1x4x1xf32>
    %1090 = vector.shape_cast %1089 : vector<1x1x4x1xf32> to vector<4x1xf32>
    %1091 = vector.extract_strided_slice %1088 {offsets = [0, 0], sizes = [1, 256], strides = [1, 1]} : vector<16x256xf32> to vector<1x256xf32>
    %1092 = vector.broadcast %1090 : vector<4x1xf32> to vector<4x256xf32>
    %1093 = vector.broadcast %1091 : vector<1x256xf32> to vector<4x256xf32>
    %1094 = arith.mulf %1092, %1093 : vector<4x256xf32>
    %1095 = arith.addf %1078, %1094 : vector<4x256xf32>
    %1096 = vector.extract_strided_slice %1088 {offsets = [8, 0], sizes = [1, 256], strides = [1, 1]} : vector<16x256xf32> to vector<1x256xf32>
    %1097 = vector.broadcast %1090 : vector<4x1xf32> to vector<4x256xf32>
    %1098 = vector.broadcast %1096 : vector<1x256xf32> to vector<4x256xf32>
    %1099 = arith.mulf %1097, %1098 : vector<4x256xf32>
    %1100 = arith.addf %1083, %1099 : vector<4x256xf32>
    %c6_387 = arith.constant 6 : index
    %c1_388 = arith.constant 1 : index
    %c0_389 = arith.constant 0 : index
    %c0_390 = arith.constant 0 : index
    %1101 = vector.load %arg5[%c6_387, %c1_388, %c0_389, %c0_390] : memref<9x8x4x1xf32, #tpu.memory_space<vmem>>, vector<1x1x4x1xf32>
    %1102 = vector.shape_cast %1101 : vector<1x1x4x1xf32> to vector<4x1xf32>
    %1103 = vector.extract_strided_slice %1088 {offsets = [1, 0], sizes = [1, 256], strides = [1, 1]} : vector<16x256xf32> to vector<1x256xf32>
    %1104 = vector.broadcast %1102 : vector<4x1xf32> to vector<4x256xf32>
    %1105 = vector.broadcast %1103 : vector<1x256xf32> to vector<4x256xf32>
    %1106 = arith.mulf %1104, %1105 : vector<4x256xf32>
    %1107 = arith.addf %1095, %1106 : vector<4x256xf32>
    %1108 = vector.extract_strided_slice %1088 {offsets = [9, 0], sizes = [1, 256], strides = [1, 1]} : vector<16x256xf32> to vector<1x256xf32>
    %1109 = vector.broadcast %1102 : vector<4x1xf32> to vector<4x256xf32>
    %1110 = vector.broadcast %1108 : vector<1x256xf32> to vector<4x256xf32>
    %1111 = arith.mulf %1109, %1110 : vector<4x256xf32>
    %1112 = arith.addf %1100, %1111 : vector<4x256xf32>
    %c6_391 = arith.constant 6 : index
    %c2_392 = arith.constant 2 : index
    %c0_393 = arith.constant 0 : index
    %c0_394 = arith.constant 0 : index
    %1113 = vector.load %arg5[%c6_391, %c2_392, %c0_393, %c0_394] : memref<9x8x4x1xf32, #tpu.memory_space<vmem>>, vector<1x1x4x1xf32>
    %1114 = vector.shape_cast %1113 : vector<1x1x4x1xf32> to vector<4x1xf32>
    %1115 = vector.extract_strided_slice %1088 {offsets = [2, 0], sizes = [1, 256], strides = [1, 1]} : vector<16x256xf32> to vector<1x256xf32>
    %1116 = vector.broadcast %1114 : vector<4x1xf32> to vector<4x256xf32>
    %1117 = vector.broadcast %1115 : vector<1x256xf32> to vector<4x256xf32>
    %1118 = arith.mulf %1116, %1117 : vector<4x256xf32>
    %1119 = arith.addf %1107, %1118 : vector<4x256xf32>
    %1120 = vector.extract_strided_slice %1088 {offsets = [10, 0], sizes = [1, 256], strides = [1, 1]} : vector<16x256xf32> to vector<1x256xf32>
    %1121 = vector.broadcast %1114 : vector<4x1xf32> to vector<4x256xf32>
    %1122 = vector.broadcast %1120 : vector<1x256xf32> to vector<4x256xf32>
    %1123 = arith.mulf %1121, %1122 : vector<4x256xf32>
    %1124 = arith.addf %1112, %1123 : vector<4x256xf32>
    %c6_395 = arith.constant 6 : index
    %c3_396 = arith.constant 3 : index
    %c0_397 = arith.constant 0 : index
    %c0_398 = arith.constant 0 : index
    %1125 = vector.load %arg5[%c6_395, %c3_396, %c0_397, %c0_398] : memref<9x8x4x1xf32, #tpu.memory_space<vmem>>, vector<1x1x4x1xf32>
    %1126 = vector.shape_cast %1125 : vector<1x1x4x1xf32> to vector<4x1xf32>
    %1127 = vector.extract_strided_slice %1088 {offsets = [3, 0], sizes = [1, 256], strides = [1, 1]} : vector<16x256xf32> to vector<1x256xf32>
    %1128 = vector.broadcast %1126 : vector<4x1xf32> to vector<4x256xf32>
    %1129 = vector.broadcast %1127 : vector<1x256xf32> to vector<4x256xf32>
    %1130 = arith.mulf %1128, %1129 : vector<4x256xf32>
    %1131 = arith.addf %1119, %1130 : vector<4x256xf32>
    %1132 = vector.extract_strided_slice %1088 {offsets = [11, 0], sizes = [1, 256], strides = [1, 1]} : vector<16x256xf32> to vector<1x256xf32>
    %1133 = vector.broadcast %1126 : vector<4x1xf32> to vector<4x256xf32>
    %1134 = vector.broadcast %1132 : vector<1x256xf32> to vector<4x256xf32>
    %1135 = arith.mulf %1133, %1134 : vector<4x256xf32>
    %1136 = arith.addf %1124, %1135 : vector<4x256xf32>
    %c6_399 = arith.constant 6 : index
    %c4_400 = arith.constant 4 : index
    %c0_401 = arith.constant 0 : index
    %c0_402 = arith.constant 0 : index
    %1137 = vector.load %arg5[%c6_399, %c4_400, %c0_401, %c0_402] : memref<9x8x4x1xf32, #tpu.memory_space<vmem>>, vector<1x1x4x1xf32>
    %1138 = vector.shape_cast %1137 : vector<1x1x4x1xf32> to vector<4x1xf32>
    %1139 = vector.extract_strided_slice %1088 {offsets = [4, 0], sizes = [1, 256], strides = [1, 1]} : vector<16x256xf32> to vector<1x256xf32>
    %1140 = vector.broadcast %1138 : vector<4x1xf32> to vector<4x256xf32>
    %1141 = vector.broadcast %1139 : vector<1x256xf32> to vector<4x256xf32>
    %1142 = arith.mulf %1140, %1141 : vector<4x256xf32>
    %1143 = arith.addf %1131, %1142 : vector<4x256xf32>
    %1144 = vector.extract_strided_slice %1088 {offsets = [12, 0], sizes = [1, 256], strides = [1, 1]} : vector<16x256xf32> to vector<1x256xf32>
    %1145 = vector.broadcast %1138 : vector<4x1xf32> to vector<4x256xf32>
    %1146 = vector.broadcast %1144 : vector<1x256xf32> to vector<4x256xf32>
    %1147 = arith.mulf %1145, %1146 : vector<4x256xf32>
    %1148 = arith.addf %1136, %1147 : vector<4x256xf32>
    %c6_403 = arith.constant 6 : index
    %c5_404 = arith.constant 5 : index
    %c0_405 = arith.constant 0 : index
    %c0_406 = arith.constant 0 : index
    %1149 = vector.load %arg5[%c6_403, %c5_404, %c0_405, %c0_406] : memref<9x8x4x1xf32, #tpu.memory_space<vmem>>, vector<1x1x4x1xf32>
    %1150 = vector.shape_cast %1149 : vector<1x1x4x1xf32> to vector<4x1xf32>
    %1151 = vector.extract_strided_slice %1088 {offsets = [5, 0], sizes = [1, 256], strides = [1, 1]} : vector<16x256xf32> to vector<1x256xf32>
    %1152 = vector.broadcast %1150 : vector<4x1xf32> to vector<4x256xf32>
    %1153 = vector.broadcast %1151 : vector<1x256xf32> to vector<4x256xf32>
    %1154 = arith.mulf %1152, %1153 : vector<4x256xf32>
    %1155 = arith.addf %1143, %1154 : vector<4x256xf32>
    %1156 = vector.extract_strided_slice %1088 {offsets = [13, 0], sizes = [1, 256], strides = [1, 1]} : vector<16x256xf32> to vector<1x256xf32>
    %1157 = vector.broadcast %1150 : vector<4x1xf32> to vector<4x256xf32>
    %1158 = vector.broadcast %1156 : vector<1x256xf32> to vector<4x256xf32>
    %1159 = arith.mulf %1157, %1158 : vector<4x256xf32>
    %1160 = arith.addf %1148, %1159 : vector<4x256xf32>
    %c6_407 = arith.constant 6 : index
    %c6_408 = arith.constant 6 : index
    %c0_409 = arith.constant 0 : index
    %c0_410 = arith.constant 0 : index
    %1161 = vector.load %arg5[%c6_407, %c6_408, %c0_409, %c0_410] : memref<9x8x4x1xf32, #tpu.memory_space<vmem>>, vector<1x1x4x1xf32>
    %1162 = vector.shape_cast %1161 : vector<1x1x4x1xf32> to vector<4x1xf32>
    %1163 = vector.extract_strided_slice %1088 {offsets = [6, 0], sizes = [1, 256], strides = [1, 1]} : vector<16x256xf32> to vector<1x256xf32>
    %1164 = vector.broadcast %1162 : vector<4x1xf32> to vector<4x256xf32>
    %1165 = vector.broadcast %1163 : vector<1x256xf32> to vector<4x256xf32>
    %1166 = arith.mulf %1164, %1165 : vector<4x256xf32>
    %1167 = arith.addf %1155, %1166 : vector<4x256xf32>
    %1168 = vector.extract_strided_slice %1088 {offsets = [14, 0], sizes = [1, 256], strides = [1, 1]} : vector<16x256xf32> to vector<1x256xf32>
    %1169 = vector.broadcast %1162 : vector<4x1xf32> to vector<4x256xf32>
    %1170 = vector.broadcast %1168 : vector<1x256xf32> to vector<4x256xf32>
    %1171 = arith.mulf %1169, %1170 : vector<4x256xf32>
    %1172 = arith.addf %1160, %1171 : vector<4x256xf32>
    %c6_411 = arith.constant 6 : index
    %c7_412 = arith.constant 7 : index
    %c0_413 = arith.constant 0 : index
    %c0_414 = arith.constant 0 : index
    %1173 = vector.load %arg5[%c6_411, %c7_412, %c0_413, %c0_414] : memref<9x8x4x1xf32, #tpu.memory_space<vmem>>, vector<1x1x4x1xf32>
    %1174 = vector.shape_cast %1173 : vector<1x1x4x1xf32> to vector<4x1xf32>
    %1175 = vector.extract_strided_slice %1088 {offsets = [7, 0], sizes = [1, 256], strides = [1, 1]} : vector<16x256xf32> to vector<1x256xf32>
    %1176 = vector.broadcast %1174 : vector<4x1xf32> to vector<4x256xf32>
    %1177 = vector.broadcast %1175 : vector<1x256xf32> to vector<4x256xf32>
    %1178 = arith.mulf %1176, %1177 : vector<4x256xf32>
    %1179 = arith.addf %1167, %1178 : vector<4x256xf32>
    %1180 = vector.extract_strided_slice %1088 {offsets = [15, 0], sizes = [1, 256], strides = [1, 1]} : vector<16x256xf32> to vector<1x256xf32>
    %1181 = vector.broadcast %1174 : vector<4x1xf32> to vector<4x256xf32>
    %1182 = vector.broadcast %1180 : vector<1x256xf32> to vector<4x256xf32>
    %1183 = arith.mulf %1181, %1182 : vector<4x256xf32>
    %1184 = arith.addf %1172, %1183 : vector<4x256xf32>
    %c240_i32_415 = arith.constant 240 : i32
    %1185 = tpu.dynamic_rotate %478 by %c240_i32_415 dim 1 : vector<16x256xf32>, i32 -> vector<16x256xf32>
    %c7_416 = arith.constant 7 : index
    %c0_417 = arith.constant 0 : index
    %c0_418 = arith.constant 0 : index
    %1186 = vector.load %arg2[%c7_416, %c0_417, %c0_418] : memref<9x1x256xf32, #tpu.memory_space<vmem>>, vector<1x1x256xf32>
    %1187 = vector.shape_cast %1186 : vector<1x1x256xf32> to vector<1x256xf32>
    %1188 = vector.broadcast %1187 : vector<1x256xf32> to vector<16x256xf32>
    %1189 = arith.mulf %1185, %1188 : vector<16x256xf32>
    %c7_419 = arith.constant 7 : index
    %c0_420 = arith.constant 0 : index
    %c0_421 = arith.constant 0 : index
    %c0_422 = arith.constant 0 : index
    %1190 = vector.load %arg5[%c7_419, %c0_420, %c0_421, %c0_422] : memref<9x8x4x1xf32, #tpu.memory_space<vmem>>, vector<1x1x4x1xf32>
    %1191 = vector.shape_cast %1190 : vector<1x1x4x1xf32> to vector<4x1xf32>
    %1192 = vector.extract_strided_slice %1189 {offsets = [0, 0], sizes = [1, 256], strides = [1, 1]} : vector<16x256xf32> to vector<1x256xf32>
    %1193 = vector.broadcast %1191 : vector<4x1xf32> to vector<4x256xf32>
    %1194 = vector.broadcast %1192 : vector<1x256xf32> to vector<4x256xf32>
    %1195 = arith.mulf %1193, %1194 : vector<4x256xf32>
    %1196 = arith.addf %1179, %1195 : vector<4x256xf32>
    %1197 = vector.extract_strided_slice %1189 {offsets = [8, 0], sizes = [1, 256], strides = [1, 1]} : vector<16x256xf32> to vector<1x256xf32>
    %1198 = vector.broadcast %1191 : vector<4x1xf32> to vector<4x256xf32>
    %1199 = vector.broadcast %1197 : vector<1x256xf32> to vector<4x256xf32>
    %1200 = arith.mulf %1198, %1199 : vector<4x256xf32>
    %1201 = arith.addf %1184, %1200 : vector<4x256xf32>
    %c7_423 = arith.constant 7 : index
    %c1_424 = arith.constant 1 : index
    %c0_425 = arith.constant 0 : index
    %c0_426 = arith.constant 0 : index
    %1202 = vector.load %arg5[%c7_423, %c1_424, %c0_425, %c0_426] : memref<9x8x4x1xf32, #tpu.memory_space<vmem>>, vector<1x1x4x1xf32>
    %1203 = vector.shape_cast %1202 : vector<1x1x4x1xf32> to vector<4x1xf32>
    %1204 = vector.extract_strided_slice %1189 {offsets = [1, 0], sizes = [1, 256], strides = [1, 1]} : vector<16x256xf32> to vector<1x256xf32>
    %1205 = vector.broadcast %1203 : vector<4x1xf32> to vector<4x256xf32>
    %1206 = vector.broadcast %1204 : vector<1x256xf32> to vector<4x256xf32>
    %1207 = arith.mulf %1205, %1206 : vector<4x256xf32>
    %1208 = arith.addf %1196, %1207 : vector<4x256xf32>
    %1209 = vector.extract_strided_slice %1189 {offsets = [9, 0], sizes = [1, 256], strides = [1, 1]} : vector<16x256xf32> to vector<1x256xf32>
    %1210 = vector.broadcast %1203 : vector<4x1xf32> to vector<4x256xf32>
    %1211 = vector.broadcast %1209 : vector<1x256xf32> to vector<4x256xf32>
    %1212 = arith.mulf %1210, %1211 : vector<4x256xf32>
    %1213 = arith.addf %1201, %1212 : vector<4x256xf32>
    %c7_427 = arith.constant 7 : index
    %c2_428 = arith.constant 2 : index
    %c0_429 = arith.constant 0 : index
    %c0_430 = arith.constant 0 : index
    %1214 = vector.load %arg5[%c7_427, %c2_428, %c0_429, %c0_430] : memref<9x8x4x1xf32, #tpu.memory_space<vmem>>, vector<1x1x4x1xf32>
    %1215 = vector.shape_cast %1214 : vector<1x1x4x1xf32> to vector<4x1xf32>
    %1216 = vector.extract_strided_slice %1189 {offsets = [2, 0], sizes = [1, 256], strides = [1, 1]} : vector<16x256xf32> to vector<1x256xf32>
    %1217 = vector.broadcast %1215 : vector<4x1xf32> to vector<4x256xf32>
    %1218 = vector.broadcast %1216 : vector<1x256xf32> to vector<4x256xf32>
    %1219 = arith.mulf %1217, %1218 : vector<4x256xf32>
    %1220 = arith.addf %1208, %1219 : vector<4x256xf32>
    %1221 = vector.extract_strided_slice %1189 {offsets = [10, 0], sizes = [1, 256], strides = [1, 1]} : vector<16x256xf32> to vector<1x256xf32>
    %1222 = vector.broadcast %1215 : vector<4x1xf32> to vector<4x256xf32>
    %1223 = vector.broadcast %1221 : vector<1x256xf32> to vector<4x256xf32>
    %1224 = arith.mulf %1222, %1223 : vector<4x256xf32>
    %1225 = arith.addf %1213, %1224 : vector<4x256xf32>
    %c7_431 = arith.constant 7 : index
    %c3_432 = arith.constant 3 : index
    %c0_433 = arith.constant 0 : index
    %c0_434 = arith.constant 0 : index
    %1226 = vector.load %arg5[%c7_431, %c3_432, %c0_433, %c0_434] : memref<9x8x4x1xf32, #tpu.memory_space<vmem>>, vector<1x1x4x1xf32>
    %1227 = vector.shape_cast %1226 : vector<1x1x4x1xf32> to vector<4x1xf32>
    %1228 = vector.extract_strided_slice %1189 {offsets = [3, 0], sizes = [1, 256], strides = [1, 1]} : vector<16x256xf32> to vector<1x256xf32>
    %1229 = vector.broadcast %1227 : vector<4x1xf32> to vector<4x256xf32>
    %1230 = vector.broadcast %1228 : vector<1x256xf32> to vector<4x256xf32>
    %1231 = arith.mulf %1229, %1230 : vector<4x256xf32>
    %1232 = arith.addf %1220, %1231 : vector<4x256xf32>
    %1233 = vector.extract_strided_slice %1189 {offsets = [11, 0], sizes = [1, 256], strides = [1, 1]} : vector<16x256xf32> to vector<1x256xf32>
    %1234 = vector.broadcast %1227 : vector<4x1xf32> to vector<4x256xf32>
    %1235 = vector.broadcast %1233 : vector<1x256xf32> to vector<4x256xf32>
    %1236 = arith.mulf %1234, %1235 : vector<4x256xf32>
    %1237 = arith.addf %1225, %1236 : vector<4x256xf32>
    %c7_435 = arith.constant 7 : index
    %c4_436 = arith.constant 4 : index
    %c0_437 = arith.constant 0 : index
    %c0_438 = arith.constant 0 : index
    %1238 = vector.load %arg5[%c7_435, %c4_436, %c0_437, %c0_438] : memref<9x8x4x1xf32, #tpu.memory_space<vmem>>, vector<1x1x4x1xf32>
    %1239 = vector.shape_cast %1238 : vector<1x1x4x1xf32> to vector<4x1xf32>
    %1240 = vector.extract_strided_slice %1189 {offsets = [4, 0], sizes = [1, 256], strides = [1, 1]} : vector<16x256xf32> to vector<1x256xf32>
    %1241 = vector.broadcast %1239 : vector<4x1xf32> to vector<4x256xf32>
    %1242 = vector.broadcast %1240 : vector<1x256xf32> to vector<4x256xf32>
    %1243 = arith.mulf %1241, %1242 : vector<4x256xf32>
    %1244 = arith.addf %1232, %1243 : vector<4x256xf32>
    %1245 = vector.extract_strided_slice %1189 {offsets = [12, 0], sizes = [1, 256], strides = [1, 1]} : vector<16x256xf32> to vector<1x256xf32>
    %1246 = vector.broadcast %1239 : vector<4x1xf32> to vector<4x256xf32>
    %1247 = vector.broadcast %1245 : vector<1x256xf32> to vector<4x256xf32>
    %1248 = arith.mulf %1246, %1247 : vector<4x256xf32>
    %1249 = arith.addf %1237, %1248 : vector<4x256xf32>
    %c7_439 = arith.constant 7 : index
    %c5_440 = arith.constant 5 : index
    %c0_441 = arith.constant 0 : index
    %c0_442 = arith.constant 0 : index
    %1250 = vector.load %arg5[%c7_439, %c5_440, %c0_441, %c0_442] : memref<9x8x4x1xf32, #tpu.memory_space<vmem>>, vector<1x1x4x1xf32>
    %1251 = vector.shape_cast %1250 : vector<1x1x4x1xf32> to vector<4x1xf32>
    %1252 = vector.extract_strided_slice %1189 {offsets = [5, 0], sizes = [1, 256], strides = [1, 1]} : vector<16x256xf32> to vector<1x256xf32>
    %1253 = vector.broadcast %1251 : vector<4x1xf32> to vector<4x256xf32>
    %1254 = vector.broadcast %1252 : vector<1x256xf32> to vector<4x256xf32>
    %1255 = arith.mulf %1253, %1254 : vector<4x256xf32>
    %1256 = arith.addf %1244, %1255 : vector<4x256xf32>
    %1257 = vector.extract_strided_slice %1189 {offsets = [13, 0], sizes = [1, 256], strides = [1, 1]} : vector<16x256xf32> to vector<1x256xf32>
    %1258 = vector.broadcast %1251 : vector<4x1xf32> to vector<4x256xf32>
    %1259 = vector.broadcast %1257 : vector<1x256xf32> to vector<4x256xf32>
    %1260 = arith.mulf %1258, %1259 : vector<4x256xf32>
    %1261 = arith.addf %1249, %1260 : vector<4x256xf32>
    %c7_443 = arith.constant 7 : index
    %c6_444 = arith.constant 6 : index
    %c0_445 = arith.constant 0 : index
    %c0_446 = arith.constant 0 : index
    %1262 = vector.load %arg5[%c7_443, %c6_444, %c0_445, %c0_446] : memref<9x8x4x1xf32, #tpu.memory_space<vmem>>, vector<1x1x4x1xf32>
    %1263 = vector.shape_cast %1262 : vector<1x1x4x1xf32> to vector<4x1xf32>
    %1264 = vector.extract_strided_slice %1189 {offsets = [6, 0], sizes = [1, 256], strides = [1, 1]} : vector<16x256xf32> to vector<1x256xf32>
    %1265 = vector.broadcast %1263 : vector<4x1xf32> to vector<4x256xf32>
    %1266 = vector.broadcast %1264 : vector<1x256xf32> to vector<4x256xf32>
    %1267 = arith.mulf %1265, %1266 : vector<4x256xf32>
    %1268 = arith.addf %1256, %1267 : vector<4x256xf32>
    %1269 = vector.extract_strided_slice %1189 {offsets = [14, 0], sizes = [1, 256], strides = [1, 1]} : vector<16x256xf32> to vector<1x256xf32>
    %1270 = vector.broadcast %1263 : vector<4x1xf32> to vector<4x256xf32>
    %1271 = vector.broadcast %1269 : vector<1x256xf32> to vector<4x256xf32>
    %1272 = arith.mulf %1270, %1271 : vector<4x256xf32>
    %1273 = arith.addf %1261, %1272 : vector<4x256xf32>
    %c7_447 = arith.constant 7 : index
    %c7_448 = arith.constant 7 : index
    %c0_449 = arith.constant 0 : index
    %c0_450 = arith.constant 0 : index
    %1274 = vector.load %arg5[%c7_447, %c7_448, %c0_449, %c0_450] : memref<9x8x4x1xf32, #tpu.memory_space<vmem>>, vector<1x1x4x1xf32>
    %1275 = vector.shape_cast %1274 : vector<1x1x4x1xf32> to vector<4x1xf32>
    %1276 = vector.extract_strided_slice %1189 {offsets = [7, 0], sizes = [1, 256], strides = [1, 1]} : vector<16x256xf32> to vector<1x256xf32>
    %1277 = vector.broadcast %1275 : vector<4x1xf32> to vector<4x256xf32>
    %1278 = vector.broadcast %1276 : vector<1x256xf32> to vector<4x256xf32>
    %1279 = arith.mulf %1277, %1278 : vector<4x256xf32>
    %1280 = arith.addf %1268, %1279 : vector<4x256xf32>
    %1281 = vector.extract_strided_slice %1189 {offsets = [15, 0], sizes = [1, 256], strides = [1, 1]} : vector<16x256xf32> to vector<1x256xf32>
    %1282 = vector.broadcast %1275 : vector<4x1xf32> to vector<4x256xf32>
    %1283 = vector.broadcast %1281 : vector<1x256xf32> to vector<4x256xf32>
    %1284 = arith.mulf %1282, %1283 : vector<4x256xf32>
    %1285 = arith.addf %1273, %1284 : vector<4x256xf32>
    %c239_i32_451 = arith.constant 239 : i32
    %1286 = tpu.dynamic_rotate %478 by %c239_i32_451 dim 1 : vector<16x256xf32>, i32 -> vector<16x256xf32>
    %c8_452 = arith.constant 8 : index
    %c0_453 = arith.constant 0 : index
    %c0_454 = arith.constant 0 : index
    %1287 = vector.load %arg2[%c8_452, %c0_453, %c0_454] : memref<9x1x256xf32, #tpu.memory_space<vmem>>, vector<1x1x256xf32>
    %1288 = vector.shape_cast %1287 : vector<1x1x256xf32> to vector<1x256xf32>
    %1289 = vector.broadcast %1288 : vector<1x256xf32> to vector<16x256xf32>
    %1290 = arith.mulf %1286, %1289 : vector<16x256xf32>
    %c8_455 = arith.constant 8 : index
    %c0_456 = arith.constant 0 : index
    %c0_457 = arith.constant 0 : index
    %c0_458 = arith.constant 0 : index
    %1291 = vector.load %arg5[%c8_455, %c0_456, %c0_457, %c0_458] : memref<9x8x4x1xf32, #tpu.memory_space<vmem>>, vector<1x1x4x1xf32>
    %1292 = vector.shape_cast %1291 : vector<1x1x4x1xf32> to vector<4x1xf32>
    %1293 = vector.extract_strided_slice %1290 {offsets = [0, 0], sizes = [1, 256], strides = [1, 1]} : vector<16x256xf32> to vector<1x256xf32>
    %1294 = vector.broadcast %1292 : vector<4x1xf32> to vector<4x256xf32>
    %1295 = vector.broadcast %1293 : vector<1x256xf32> to vector<4x256xf32>
    %1296 = arith.mulf %1294, %1295 : vector<4x256xf32>
    %1297 = arith.addf %1280, %1296 : vector<4x256xf32>
    %1298 = vector.extract_strided_slice %1290 {offsets = [8, 0], sizes = [1, 256], strides = [1, 1]} : vector<16x256xf32> to vector<1x256xf32>
    %1299 = vector.broadcast %1292 : vector<4x1xf32> to vector<4x256xf32>
    %1300 = vector.broadcast %1298 : vector<1x256xf32> to vector<4x256xf32>
    %1301 = arith.mulf %1299, %1300 : vector<4x256xf32>
    %1302 = arith.addf %1285, %1301 : vector<4x256xf32>
    %c8_459 = arith.constant 8 : index
    %c1_460 = arith.constant 1 : index
    %c0_461 = arith.constant 0 : index
    %c0_462 = arith.constant 0 : index
    %1303 = vector.load %arg5[%c8_459, %c1_460, %c0_461, %c0_462] : memref<9x8x4x1xf32, #tpu.memory_space<vmem>>, vector<1x1x4x1xf32>
    %1304 = vector.shape_cast %1303 : vector<1x1x4x1xf32> to vector<4x1xf32>
    %1305 = vector.extract_strided_slice %1290 {offsets = [1, 0], sizes = [1, 256], strides = [1, 1]} : vector<16x256xf32> to vector<1x256xf32>
    %1306 = vector.broadcast %1304 : vector<4x1xf32> to vector<4x256xf32>
    %1307 = vector.broadcast %1305 : vector<1x256xf32> to vector<4x256xf32>
    %1308 = arith.mulf %1306, %1307 : vector<4x256xf32>
    %1309 = arith.addf %1297, %1308 : vector<4x256xf32>
    %1310 = vector.extract_strided_slice %1290 {offsets = [9, 0], sizes = [1, 256], strides = [1, 1]} : vector<16x256xf32> to vector<1x256xf32>
    %1311 = vector.broadcast %1304 : vector<4x1xf32> to vector<4x256xf32>
    %1312 = vector.broadcast %1310 : vector<1x256xf32> to vector<4x256xf32>
    %1313 = arith.mulf %1311, %1312 : vector<4x256xf32>
    %1314 = arith.addf %1302, %1313 : vector<4x256xf32>
    %c8_463 = arith.constant 8 : index
    %c2_464 = arith.constant 2 : index
    %c0_465 = arith.constant 0 : index
    %c0_466 = arith.constant 0 : index
    %1315 = vector.load %arg5[%c8_463, %c2_464, %c0_465, %c0_466] : memref<9x8x4x1xf32, #tpu.memory_space<vmem>>, vector<1x1x4x1xf32>
    %1316 = vector.shape_cast %1315 : vector<1x1x4x1xf32> to vector<4x1xf32>
    %1317 = vector.extract_strided_slice %1290 {offsets = [2, 0], sizes = [1, 256], strides = [1, 1]} : vector<16x256xf32> to vector<1x256xf32>
    %1318 = vector.broadcast %1316 : vector<4x1xf32> to vector<4x256xf32>
    %1319 = vector.broadcast %1317 : vector<1x256xf32> to vector<4x256xf32>
    %1320 = arith.mulf %1318, %1319 : vector<4x256xf32>
    %1321 = arith.addf %1309, %1320 : vector<4x256xf32>
    %1322 = vector.extract_strided_slice %1290 {offsets = [10, 0], sizes = [1, 256], strides = [1, 1]} : vector<16x256xf32> to vector<1x256xf32>
    %1323 = vector.broadcast %1316 : vector<4x1xf32> to vector<4x256xf32>
    %1324 = vector.broadcast %1322 : vector<1x256xf32> to vector<4x256xf32>
    %1325 = arith.mulf %1323, %1324 : vector<4x256xf32>
    %1326 = arith.addf %1314, %1325 : vector<4x256xf32>
    %c8_467 = arith.constant 8 : index
    %c3_468 = arith.constant 3 : index
    %c0_469 = arith.constant 0 : index
    %c0_470 = arith.constant 0 : index
    %1327 = vector.load %arg5[%c8_467, %c3_468, %c0_469, %c0_470] : memref<9x8x4x1xf32, #tpu.memory_space<vmem>>, vector<1x1x4x1xf32>
    %1328 = vector.shape_cast %1327 : vector<1x1x4x1xf32> to vector<4x1xf32>
    %1329 = vector.extract_strided_slice %1290 {offsets = [3, 0], sizes = [1, 256], strides = [1, 1]} : vector<16x256xf32> to vector<1x256xf32>
    %1330 = vector.broadcast %1328 : vector<4x1xf32> to vector<4x256xf32>
    %1331 = vector.broadcast %1329 : vector<1x256xf32> to vector<4x256xf32>
    %1332 = arith.mulf %1330, %1331 : vector<4x256xf32>
    %1333 = arith.addf %1321, %1332 : vector<4x256xf32>
    %1334 = vector.extract_strided_slice %1290 {offsets = [11, 0], sizes = [1, 256], strides = [1, 1]} : vector<16x256xf32> to vector<1x256xf32>
    %1335 = vector.broadcast %1328 : vector<4x1xf32> to vector<4x256xf32>
    %1336 = vector.broadcast %1334 : vector<1x256xf32> to vector<4x256xf32>
    %1337 = arith.mulf %1335, %1336 : vector<4x256xf32>
    %1338 = arith.addf %1326, %1337 : vector<4x256xf32>
    %c8_471 = arith.constant 8 : index
    %c4_472 = arith.constant 4 : index
    %c0_473 = arith.constant 0 : index
    %c0_474 = arith.constant 0 : index
    %1339 = vector.load %arg5[%c8_471, %c4_472, %c0_473, %c0_474] : memref<9x8x4x1xf32, #tpu.memory_space<vmem>>, vector<1x1x4x1xf32>
    %1340 = vector.shape_cast %1339 : vector<1x1x4x1xf32> to vector<4x1xf32>
    %1341 = vector.extract_strided_slice %1290 {offsets = [4, 0], sizes = [1, 256], strides = [1, 1]} : vector<16x256xf32> to vector<1x256xf32>
    %1342 = vector.broadcast %1340 : vector<4x1xf32> to vector<4x256xf32>
    %1343 = vector.broadcast %1341 : vector<1x256xf32> to vector<4x256xf32>
    %1344 = arith.mulf %1342, %1343 : vector<4x256xf32>
    %1345 = arith.addf %1333, %1344 : vector<4x256xf32>
    %1346 = vector.extract_strided_slice %1290 {offsets = [12, 0], sizes = [1, 256], strides = [1, 1]} : vector<16x256xf32> to vector<1x256xf32>
    %1347 = vector.broadcast %1340 : vector<4x1xf32> to vector<4x256xf32>
    %1348 = vector.broadcast %1346 : vector<1x256xf32> to vector<4x256xf32>
    %1349 = arith.mulf %1347, %1348 : vector<4x256xf32>
    %1350 = arith.addf %1338, %1349 : vector<4x256xf32>
    %c8_475 = arith.constant 8 : index
    %c5_476 = arith.constant 5 : index
    %c0_477 = arith.constant 0 : index
    %c0_478 = arith.constant 0 : index
    %1351 = vector.load %arg5[%c8_475, %c5_476, %c0_477, %c0_478] : memref<9x8x4x1xf32, #tpu.memory_space<vmem>>, vector<1x1x4x1xf32>
    %1352 = vector.shape_cast %1351 : vector<1x1x4x1xf32> to vector<4x1xf32>
    %1353 = vector.extract_strided_slice %1290 {offsets = [5, 0], sizes = [1, 256], strides = [1, 1]} : vector<16x256xf32> to vector<1x256xf32>
    %1354 = vector.broadcast %1352 : vector<4x1xf32> to vector<4x256xf32>
    %1355 = vector.broadcast %1353 : vector<1x256xf32> to vector<4x256xf32>
    %1356 = arith.mulf %1354, %1355 : vector<4x256xf32>
    %1357 = arith.addf %1345, %1356 : vector<4x256xf32>
    %1358 = vector.extract_strided_slice %1290 {offsets = [13, 0], sizes = [1, 256], strides = [1, 1]} : vector<16x256xf32> to vector<1x256xf32>
    %1359 = vector.broadcast %1352 : vector<4x1xf32> to vector<4x256xf32>
    %1360 = vector.broadcast %1358 : vector<1x256xf32> to vector<4x256xf32>
    %1361 = arith.mulf %1359, %1360 : vector<4x256xf32>
    %1362 = arith.addf %1350, %1361 : vector<4x256xf32>
    %c8_479 = arith.constant 8 : index
    %c6_480 = arith.constant 6 : index
    %c0_481 = arith.constant 0 : index
    %c0_482 = arith.constant 0 : index
    %1363 = vector.load %arg5[%c8_479, %c6_480, %c0_481, %c0_482] : memref<9x8x4x1xf32, #tpu.memory_space<vmem>>, vector<1x1x4x1xf32>
    %1364 = vector.shape_cast %1363 : vector<1x1x4x1xf32> to vector<4x1xf32>
    %1365 = vector.extract_strided_slice %1290 {offsets = [6, 0], sizes = [1, 256], strides = [1, 1]} : vector<16x256xf32> to vector<1x256xf32>
    %1366 = vector.broadcast %1364 : vector<4x1xf32> to vector<4x256xf32>
    %1367 = vector.broadcast %1365 : vector<1x256xf32> to vector<4x256xf32>
    %1368 = arith.mulf %1366, %1367 : vector<4x256xf32>
    %1369 = arith.addf %1357, %1368 : vector<4x256xf32>
    %1370 = vector.extract_strided_slice %1290 {offsets = [14, 0], sizes = [1, 256], strides = [1, 1]} : vector<16x256xf32> to vector<1x256xf32>
    %1371 = vector.broadcast %1364 : vector<4x1xf32> to vector<4x256xf32>
    %1372 = vector.broadcast %1370 : vector<1x256xf32> to vector<4x256xf32>
    %1373 = arith.mulf %1371, %1372 : vector<4x256xf32>
    %1374 = arith.addf %1362, %1373 : vector<4x256xf32>
    %c8_483 = arith.constant 8 : index
    %c7_484 = arith.constant 7 : index
    %c0_485 = arith.constant 0 : index
    %c0_486 = arith.constant 0 : index
    %1375 = vector.load %arg5[%c8_483, %c7_484, %c0_485, %c0_486] : memref<9x8x4x1xf32, #tpu.memory_space<vmem>>, vector<1x1x4x1xf32>
    %1376 = vector.shape_cast %1375 : vector<1x1x4x1xf32> to vector<4x1xf32>
    %1377 = vector.extract_strided_slice %1290 {offsets = [7, 0], sizes = [1, 256], strides = [1, 1]} : vector<16x256xf32> to vector<1x256xf32>
    %1378 = vector.broadcast %1376 : vector<4x1xf32> to vector<4x256xf32>
    %1379 = vector.broadcast %1377 : vector<1x256xf32> to vector<4x256xf32>
    %1380 = arith.mulf %1378, %1379 : vector<4x256xf32>
    %1381 = arith.addf %1369, %1380 : vector<4x256xf32>
    %1382 = vector.extract_strided_slice %1290 {offsets = [15, 0], sizes = [1, 256], strides = [1, 1]} : vector<16x256xf32> to vector<1x256xf32>
    %1383 = vector.broadcast %1376 : vector<4x1xf32> to vector<4x256xf32>
    %1384 = vector.broadcast %1382 : vector<1x256xf32> to vector<4x256xf32>
    %1385 = arith.mulf %1383, %1384 : vector<4x256xf32>
    %1386 = arith.addf %1374, %1385 : vector<4x256xf32>
    %1387 = tpu.concatenate %1381, %1386 in 0 : vector<4x256xf32>, vector<4x256xf32> -> vector<8x256xf32>
    %c0_487 = arith.constant 0 : index
    %c0_488 = arith.constant 0 : index
    %1388 = vector.load %arg9[%c0_487, %c0_488] : memref<8x256xf32, #tpu.memory_space<vmem>>, vector<8x256xf32>
    tpu.vector_store %arg9[%c0_487, %c0_488], %1387 {strides = array<i32>} : memref<8x256xf32, #tpu.memory_space<vmem>>, vector<8x256xf32>,
    %1389 = vector.extract_strided_slice %478 {offsets = [0, 0], sizes = [8, 256], strides = [1, 1]} : vector<16x256xf32> to vector<8x256xf32>
    %c0_489 = arith.constant 0 : index
    %c0_490 = arith.constant 0 : index
    %c0_491 = arith.constant 0 : index
    %1390 = vector.load %arg7[%c0_489, %c0_490, %c0_491] : memref<4x8x256xf32, #tpu.memory_space<vmem>>, vector<1x8x256xf32>
    %1391 = vector.shape_cast %1390 : vector<1x8x256xf32> to vector<8x256xf32>
    %1392 = arith.mulf %1389, %1391 : vector<8x256xf32>
    %cst_492 = arith.constant dense<0.000000e+00> : vector<8xf32>
    %1393 = vector.multi_reduction <add>, %1392, %cst_492 [1] : vector<8x256xf32> to vector<8xf32>
    %1394 = vector.shape_cast %1393 : vector<8xf32> to vector<8x1xf32>
    %cst_493 = arith.constant dense<0.000000e+00> : vector<1xf32>
    %1395 = vector.multi_reduction <add>, %1394, %cst_493 [0] : vector<8x1xf32> to vector<1xf32>
    %1396 = vector.shape_cast %1395 : vector<1xf32> to vector<1x1xf32>
    %c1_494 = arith.constant 1 : index
    %c0_495 = arith.constant 0 : index
    %c0_496 = arith.constant 0 : index
    %1397 = vector.load %arg7[%c1_494, %c0_495, %c0_496] : memref<4x8x256xf32, #tpu.memory_space<vmem>>, vector<1x8x256xf32>
    %1398 = vector.shape_cast %1397 : vector<1x8x256xf32> to vector<8x256xf32>
    %1399 = arith.mulf %1389, %1398 : vector<8x256xf32>
    %cst_497 = arith.constant dense<0.000000e+00> : vector<8xf32>
    %1400 = vector.multi_reduction <add>, %1399, %cst_497 [1] : vector<8x256xf32> to vector<8xf32>
    %1401 = vector.shape_cast %1400 : vector<8xf32> to vector<8x1xf32>
    %cst_498 = arith.constant dense<0.000000e+00> : vector<1xf32>
    %1402 = vector.multi_reduction <add>, %1401, %cst_498 [0] : vector<8x1xf32> to vector<1xf32>
    %1403 = vector.shape_cast %1402 : vector<1xf32> to vector<1x1xf32>
    %c2_499 = arith.constant 2 : index
    %c0_500 = arith.constant 0 : index
    %c0_501 = arith.constant 0 : index
    %1404 = vector.load %arg7[%c2_499, %c0_500, %c0_501] : memref<4x8x256xf32, #tpu.memory_space<vmem>>, vector<1x8x256xf32>
    %1405 = vector.shape_cast %1404 : vector<1x8x256xf32> to vector<8x256xf32>
    %1406 = arith.mulf %1389, %1405 : vector<8x256xf32>
    %cst_502 = arith.constant dense<0.000000e+00> : vector<8xf32>
    %1407 = vector.multi_reduction <add>, %1406, %cst_502 [1] : vector<8x256xf32> to vector<8xf32>
    %1408 = vector.shape_cast %1407 : vector<8xf32> to vector<8x1xf32>
    %cst_503 = arith.constant dense<0.000000e+00> : vector<1xf32>
    %1409 = vector.multi_reduction <add>, %1408, %cst_503 [0] : vector<8x1xf32> to vector<1xf32>
    %1410 = vector.shape_cast %1409 : vector<1xf32> to vector<1x1xf32>
    %c3_504 = arith.constant 3 : index
    %c0_505 = arith.constant 0 : index
    %c0_506 = arith.constant 0 : index
    %1411 = vector.load %arg7[%c3_504, %c0_505, %c0_506] : memref<4x8x256xf32, #tpu.memory_space<vmem>>, vector<1x8x256xf32>
    %1412 = vector.shape_cast %1411 : vector<1x8x256xf32> to vector<8x256xf32>
    %1413 = arith.mulf %1389, %1412 : vector<8x256xf32>
    %cst_507 = arith.constant dense<0.000000e+00> : vector<8xf32>
    %1414 = vector.multi_reduction <add>, %1413, %cst_507 [1] : vector<8x256xf32> to vector<8xf32>
    %1415 = vector.shape_cast %1414 : vector<8xf32> to vector<8x1xf32>
    %cst_508 = arith.constant dense<0.000000e+00> : vector<1xf32>
    %1416 = vector.multi_reduction <add>, %1415, %cst_508 [0] : vector<8x1xf32> to vector<1xf32>
    %1417 = vector.shape_cast %1416 : vector<1xf32> to vector<1x1xf32>
    %1418 = tpu.concatenate %1396, %1403, %1410, %1417 in 1 : vector<1x1xf32>, vector<1x1xf32>, vector<1x1xf32>, vector<1x1xf32> -> vector<1x4xf32>
    %c0_509 = arith.constant 0 : index
    %c0_510 = arith.constant 0 : index
    %1419 = vector.load %arg8[%c0_509, %c0_510] : memref<1x4xf32, #tpu.memory_space<vmem>>, vector<1x4xf32>
    %1420 = arith.addf %1418, %1419 : vector<1x4xf32>
    %1421 = vector.extract_strided_slice %478 {offsets = [8, 0], sizes = [8, 256], strides = [1, 1]} : vector<16x256xf32> to vector<8x256xf32>
    %c0_511 = arith.constant 0 : index
    %c0_512 = arith.constant 0 : index
    %c0_513 = arith.constant 0 : index
    %1422 = vector.load %arg7[%c0_511, %c0_512, %c0_513] : memref<4x8x256xf32, #tpu.memory_space<vmem>>, vector<1x8x256xf32>
    %1423 = vector.shape_cast %1422 : vector<1x8x256xf32> to vector<8x256xf32>
    %1424 = arith.mulf %1421, %1423 : vector<8x256xf32>
    %cst_514 = arith.constant dense<0.000000e+00> : vector<8xf32>
    %1425 = vector.multi_reduction <add>, %1424, %cst_514 [1] : vector<8x256xf32> to vector<8xf32>
    %1426 = vector.shape_cast %1425 : vector<8xf32> to vector<8x1xf32>
    %cst_515 = arith.constant dense<0.000000e+00> : vector<1xf32>
    %1427 = vector.multi_reduction <add>, %1426, %cst_515 [0] : vector<8x1xf32> to vector<1xf32>
    %1428 = vector.shape_cast %1427 : vector<1xf32> to vector<1x1xf32>
    %c1_516 = arith.constant 1 : index
    %c0_517 = arith.constant 0 : index
    %c0_518 = arith.constant 0 : index
    %1429 = vector.load %arg7[%c1_516, %c0_517, %c0_518] : memref<4x8x256xf32, #tpu.memory_space<vmem>>, vector<1x8x256xf32>
    %1430 = vector.shape_cast %1429 : vector<1x8x256xf32> to vector<8x256xf32>
    %1431 = arith.mulf %1421, %1430 : vector<8x256xf32>
    %cst_519 = arith.constant dense<0.000000e+00> : vector<8xf32>
    %1432 = vector.multi_reduction <add>, %1431, %cst_519 [1] : vector<8x256xf32> to vector<8xf32>
    %1433 = vector.shape_cast %1432 : vector<8xf32> to vector<8x1xf32>
    %cst_520 = arith.constant dense<0.000000e+00> : vector<1xf32>
    %1434 = vector.multi_reduction <add>, %1433, %cst_520 [0] : vector<8x1xf32> to vector<1xf32>
    %1435 = vector.shape_cast %1434 : vector<1xf32> to vector<1x1xf32>
    %c2_521 = arith.constant 2 : index
    %c0_522 = arith.constant 0 : index
    %c0_523 = arith.constant 0 : index
    %1436 = vector.load %arg7[%c2_521, %c0_522, %c0_523] : memref<4x8x256xf32, #tpu.memory_space<vmem>>, vector<1x8x256xf32>
    %1437 = vector.shape_cast %1436 : vector<1x8x256xf32> to vector<8x256xf32>
    %1438 = arith.mulf %1421, %1437 : vector<8x256xf32>
    %cst_524 = arith.constant dense<0.000000e+00> : vector<8xf32>
    %1439 = vector.multi_reduction <add>, %1438, %cst_524 [1] : vector<8x256xf32> to vector<8xf32>
    %1440 = vector.shape_cast %1439 : vector<8xf32> to vector<8x1xf32>
    %cst_525 = arith.constant dense<0.000000e+00> : vector<1xf32>
    %1441 = vector.multi_reduction <add>, %1440, %cst_525 [0] : vector<8x1xf32> to vector<1xf32>
    %1442 = vector.shape_cast %1441 : vector<1xf32> to vector<1x1xf32>
    %c3_526 = arith.constant 3 : index
    %c0_527 = arith.constant 0 : index
    %c0_528 = arith.constant 0 : index
    %1443 = vector.load %arg7[%c3_526, %c0_527, %c0_528] : memref<4x8x256xf32, #tpu.memory_space<vmem>>, vector<1x8x256xf32>
    %1444 = vector.shape_cast %1443 : vector<1x8x256xf32> to vector<8x256xf32>
    %1445 = arith.mulf %1421, %1444 : vector<8x256xf32>
    %cst_529 = arith.constant dense<0.000000e+00> : vector<8xf32>
    %1446 = vector.multi_reduction <add>, %1445, %cst_529 [1] : vector<8x256xf32> to vector<8xf32>
    %1447 = vector.shape_cast %1446 : vector<8xf32> to vector<8x1xf32>
    %cst_530 = arith.constant dense<0.000000e+00> : vector<1xf32>
    %1448 = vector.multi_reduction <add>, %1447, %cst_530 [0] : vector<8x1xf32> to vector<1xf32>
    %1449 = vector.shape_cast %1448 : vector<1xf32> to vector<1x1xf32>
    %1450 = tpu.concatenate %1428, %1435, %1442, %1449 in 1 : vector<1x1xf32>, vector<1x1xf32>, vector<1x1xf32>, vector<1x1xf32> -> vector<1x4xf32>
    %c0_531 = arith.constant 0 : index
    %c0_532 = arith.constant 0 : index
    %1451 = vector.load %arg8[%c0_531, %c0_532] : memref<1x4xf32, #tpu.memory_space<vmem>>, vector<1x4xf32>
    %1452 = arith.addf %1450, %1451 : vector<1x4xf32>
    %1453 = tpu.concatenate %1420, %1452 in 0 : vector<1x4xf32>, vector<1x4xf32> -> vector<2x4xf32>
    %c0_533 = arith.constant 0 : index
    %c0_534 = arith.constant 0 : index
    %1454 = vector.load %arg10[%c0_533, %c0_534] : memref<2x4xf32, #tpu.memory_space<vmem>>, vector<2x4xf32>
    tpu.vector_store %arg10[%c0_533, %c0_534], %1453 {strides = array<i32>} : memref<2x4xf32, #tpu.memory_space<vmem>>, vector<2x4xf32>,
    return
  }
  func.func @transform_0(%arg0: i32) -> (i32, i32) {
    %c0_i32 = arith.constant 0 : i32
    %c0_i32_0 = arith.constant 0 : i32
    %c0_i32_1 = arith.constant 0 : i32
    return %c0_i32, %c0_i32_0 : i32, i32
  }
  func.func @transform_1(%arg0: i32) -> (i32, i32, i32) {
    %c0_i32 = arith.constant 0 : i32
    %c0_i32_0 = arith.constant 0 : i32
    %c0_i32_1 = arith.constant 0 : i32
    %c0_i32_2 = arith.constant 0 : i32
    return %c0_i32, %c0_i32_0, %c0_i32_1 : i32, i32, i32
  }
  func.func @transform_2(%arg0: i32) -> (i32, i32, i32, i32) {
    %c0_i32 = arith.constant 0 : i32
    %c0_i32_0 = arith.constant 0 : i32
    %c0_i32_1 = arith.constant 0 : i32
    %c0_i32_2 = arith.constant 0 : i32
    %c0_i32_3 = arith.constant 0 : i32
    return %c0_i32, %c0_i32_0, %c0_i32_1, %c0_i32_2 : i32, i32, i32, i32
  }
  func.func @transform_3(%arg0: i32) -> (i32, i32) {
    %c0_i32 = arith.constant 0 : i32
    %c0_i32_0 = arith.constant 0 : i32
    %c0_i32_1 = arith.constant 0 : i32
    return %c0_i32, %c0_i32_0 : i32, i32
  }
  func.func @transform_4(%arg0: i32) -> (i32, i32, i32, i32) {
    %c0_i32 = arith.constant 0 : i32
    %c0_i32_0 = arith.constant 0 : i32
    %c0_i32_1 = arith.constant 0 : i32
    %c0_i32_2 = arith.constant 0 : i32
    %c0_i32_3 = arith.constant 0 : i32
    return %c0_i32, %c0_i32_0, %c0_i32_1, %c0_i32_2 : i32, i32, i32, i32
  }
  func.func @transform_5(%arg0: i32) -> (i32, i32) {
    %c0_i32 = arith.constant 0 : i32
    %c0_i32_0 = arith.constant 0 : i32
    %c0_i32_1 = arith.constant 0 : i32
    return %c0_i32, %c0_i32_0 : i32, i32
  }
  func.func @transform_6(%arg0: i32) -> (i32, i32, i32) {
    %c0_i32 = arith.constant 0 : i32
    %c0_i32_0 = arith.constant 0 : i32
    %c0_i32_1 = arith.constant 0 : i32
    %c0_i32_2 = arith.constant 0 : i32
    return %c0_i32, %c0_i32_0, %c0_i32_1 : i32, i32, i32
  }
  func.func @transform_7(%arg0: i32) -> (i32, i32) {
    %c0_i32 = arith.constant 0 : i32
    %c0_i32_0 = arith.constant 0 : i32
    %c0_i32_1 = arith.constant 0 : i32
    return %c0_i32, %c0_i32_0 : i32, i32
  }
  func.func @transform_8(%arg0: i32) -> (i32, i32) {
    %c0_i32 = arith.constant 0 : i32
    %c0_i32_0 = arith.constant 0 : i32
    %c0_i32_1 = arith.constant 0 : i32
    return %c0_i32, %c0_i32_0 : i32, i32
  }
  func.func @transform_9(%arg0: i32) -> (i32, i32) {
    %c0_i32 = arith.constant 0 : i32
    %c0_i32_0 = arith.constant 0 : i32
    %c0_i32_1 = arith.constant 0 : i32
    return %c0_i32, %c0_i32_0 : i32, i32
  }
  func.func @transform_10(%arg0: i32) -> (i32, i32) {
    %c0_i32 = arith.constant 0 : i32
    %c0_i32_0 = arith.constant 0 : i32
    %c0_i32_1 = arith.constant 0 : i32
    return %c0_i32, %c0_i32_0 : i32, i32
  }
}

</mosaic_0001>

<llo_original>
// kernel: meta_aec_forward.1
$region0: #{meta_aec_forward.1}
  #allocation0 [shape = 'u32[]', space=smem, size = 0x4, offset = 0x4, fixed_abs, tag = 'smem constant byte address 0x4 - core index']
  #allocation1 [shape = 'u32[72,128]{1,0:T(1,128)}', space=vmem, size = 0x9000, scoped, tag = 'internal scratch']
  %s0 = inlined_call_operand.vmem [shape: f32[8,256], index: 0, kind: input, shape index: {}]
  %s1 = inlined_call_operand.vmem [shape: f32[9,1,256], index: 1, kind: input, shape index: {}]
  %s2 = inlined_call_operand.vmem [shape: f32[9,4,8,1], index: 2, kind: input, shape index: {}]
  %s3 = inlined_call_operand.vmem [shape: f32[8,1], index: 3, kind: input, shape index: {}]
  %s4 = inlined_call_operand.vmem [shape: f32[9,8,4,1], index: 4, kind: input, shape index: {}]
  %s5 = inlined_call_operand.vmem [shape: f32[4,1], index: 5, kind: input, shape index: {}]
  %s6 = inlined_call_operand.vmem [shape: f32[4,8,256], index: 6, kind: input, shape index: {}]
  %s7 = inlined_call_operand.vmem [shape: f32[1,4], index: 7, kind: input, shape index: {}]
  %s8 = inlined_call_operand.vmem [shape: f32[8,256], index: 8, kind: output, shape index: {0}]
  %s9 = inlined_call_operand.hbm [shape: f32[2,4], index: 9, kind: output, shape index: {1}]
  %s10 = inlined_call_operand.vmem [shape: f32[16,256], index: 10, kind: output, shape index: {2}]
  %11 = xla_tuple %s8, %s9, %s10
  %s12 = sld [smem:[#allocation0]]
  $region58: #{meta_aec_forward.1} parent=0
    _
  %s14 = ssub.s32 1, %s12
  %s15 = scalar_select 0, %s14, %s12
  $region1: #{meta_aec_forward.1} parent=0
    #allocation2 [shape = 'u8[1024]{0}', space=vmem, size = 0x400, scoped, tag = 'output window, operand 1, single buffered']
    #allocation3 [shape = 's32[1]{0}', space=sflag, size = 0x4, scoped, tag = 'scoped memory for meta_aec_forward.1']
    %16 = vsyncpa [#allocation3], 0
    // Predicated region
    $region2: #{meta_aec_forward.1} parent=1 // pred_check
      _
    $region3: #{meta_aec_forward.1} parent=1 // pred_check_branch
      %18 = sbr.rel (0) target = $region5
    $region4: #{meta_aec_forward.1} parent=1 // pred_region
      _
    $region5: #{meta_aec_forward.1} parent=1 // pred_fallthru
      _
    // Predicated region
    $region6: #{meta_aec_forward.1} parent=1 // pred_check
      _
    $region7: #{meta_aec_forward.1} parent=1 // pred_check_branch
      %20 = sbr.rel (0) target = $region9
    $region8: #{meta_aec_forward.1} parent=1 // pred_region
      _
    $region9: #{meta_aec_forward.1} parent=1 // pred_fallthru
      _
    // Predicated region
    $region10: #{meta_aec_forward.1} parent=1 // pred_check
      _
    $region11: #{meta_aec_forward.1} parent=1 // pred_check_branch
      %22 = sbr.rel (0) target = $region13
    $region12: #{meta_aec_forward.1} parent=1 // pred_region
      _
    $region13: #{meta_aec_forward.1} parent=1 // pred_fallthru
      _
    // Predicated region
    $region14: #{meta_aec_forward.1} parent=1 // pred_check
      _
    $region15: #{meta_aec_forward.1} parent=1 // pred_check_branch
      %24 = sbr.rel (0) target = $region17
    $region16: #{meta_aec_forward.1} parent=1 // pred_region
      _
    $region17: #{meta_aec_forward.1} parent=1 // pred_fallthru
      _
    // Predicated region
    $region18: #{meta_aec_forward.1} parent=1 // pred_check
      _
    $region19: #{meta_aec_forward.1} parent=1 // pred_check_branch
      %26 = sbr.rel (0) target = $region21
    $region20: #{meta_aec_forward.1} parent=1 // pred_region
      _
    $region21: #{meta_aec_forward.1} parent=1 // pred_fallthru
      _
    // Predicated region
    $region22: #{meta_aec_forward.1} parent=1 // pred_check
      _
    $region23: #{meta_aec_forward.1} parent=1 // pred_check_branch
      %28 = sbr.rel (0) target = $region25
    $region24: #{meta_aec_forward.1} parent=1 // pred_region
      _
    $region25: #{meta_aec_forward.1} parent=1 // pred_fallthru
      _
    // Predicated region
    $region26: #{meta_aec_forward.1} parent=1 // pred_check
      _
    $region27: #{meta_aec_forward.1} parent=1 // pred_check_branch
      %30 = sbr.rel (0) target = $region29
    $region28: #{meta_aec_forward.1} parent=1 // pred_region
      _
    $region29: #{meta_aec_forward.1} parent=1 // pred_fallthru
      _
    // Predicated region
    $region30: #{meta_aec_forward.1} parent=1 // pred_check
      _
    $region31: #{meta_aec_forward.1} parent=1 // pred_check_branch
      %32 = sbr.rel (0) target = $region33
    $region32: #{meta_aec_forward.1} parent=1 // pred_region
      _
    $region33: #{meta_aec_forward.1} parent=1 // pred_fallthru
      _
    %v33 = vld [vmem:[%s0] sm:$0xff]
    %v34 = vld [vmem:[%s0 + $0x8] sm:$0xff]
    %v35 = vld [vmem:[%s3] sm:$0xff]
    %37 = vset.pattern.permute.xlu0 0
    %38 = vperm.xlu0 %37, %v35
    %v39 = vpop.permute.xlu0 %38
    %41 = vrot.lane.b32.xlu0 %v33, 17
    %v42 = vpop.permute.xlu0 %41
    %43 = vrot.lane.b32.xlu0 %v34, 17
    %v44 = vpop.permute.xlu0 %43
    %v45 = vlaneseq
    %v46 = vand.u32 %v45, 127
    %vm47 = vcmp.lt.s32.totalorder %v46, 17
    %v48 = vsel %vm47, %v42, %v44
    %v49 = vsel %vm47, %v44, %v42
    %v50 = vld [vmem:[%s1] sm:$0x3]
    %v52 = vperm.slane %v50, 0
    %v53 = vperm.slane %v50, 1
    %v56 = vmul.f32 %v49, %v52
    %v57 = vmul.f32 %v48, %v53
    %v58 = vld [vmem:[%s2] sm:$0xff]
    %60 = vset.pattern.permute.xlu0 0
    %61 = vperm.xlu0 %60, %v58
    %v62 = vpop.permute.xlu0 %61
    %v64 = vperm.slane %v56, 0
    %v65 = vperm.slane %v57, 0
    %v66 = vmul.f32 %v62, %v64
    %v67 = vmul.f32 %v62, %v65
    %v68 = vadd.f32 %v39, %v66
    %v69 = vadd.f32 %v39, %v67
    %v70 = vperm.slane %v56, 4
    %v71 = vperm.slane %v57, 4
    %v72 = vmul.f32 %v62, %v70
    %v73 = vmul.f32 %v62, %v71
    %v74 = vadd.f32 %v39, %v72
    %v75 = vadd.f32 %v39, %v73
    %s76 = scalar_lea.vmem %s2, 8
    %v77 = vld [vmem:[%s76] sm:$0xff]
    %79 = vset.pattern.permute.xlu0 0
    %80 = vperm.xlu0 %79, %v77
    %v81 = vpop.permute.xlu0 %80
    %v83 = vperm.slane %v56, 1
    %v84 = vperm.slane %v57, 1
    %v85 = vmul.f32 %v81, %v83
    %v86 = vmul.f32 %v81, %v84
    %v87 = vadd.f32 %v68, %v85
    %v88 = vadd.f32 %v69, %v86
    %v89 = vperm.slane %v56, 5
    %v90 = vperm.slane %v57, 5
    %v91 = vmul.f32 %v81, %v89
    %v92 = vmul.f32 %v81, %v90
    %v93 = vadd.f32 %v74, %v91
    %v94 = vadd.f32 %v75, %v92
    %s95 = scalar_lea.vmem %s2, 16
    %v96 = vld [vmem:[%s95] sm:$0xff]
    %98 = vset.pattern.permute.xlu0 0
    %99 = vperm.xlu0 %98, %v96
    %v100 = vpop.permute.xlu0 %99
    %v102 = vperm.slane %v56, 2
    %v103 = vperm.slane %v57, 2
    %v104 = vmul.f32 %v100, %v102
    %v105 = vmul.f32 %v100, %v103
    %v106 = vadd.f32 %v87, %v104
    %v107 = vadd.f32 %v88, %v105
    %v108 = vperm.slane %v56, 6
    %v109 = vperm.slane %v57, 6
    %v110 = vmul.f32 %v100, %v108
    %v111 = vmul.f32 %v100, %v109
    %v112 = vadd.f32 %v93, %v110
    %v113 = vadd.f32 %v94, %v111
    %s114 = scalar_lea.vmem %s2, 24
    %v115 = vld [vmem:[%s114] sm:$0xff]
    %117 = vset.pattern.permute.xlu0 0
    %118 = vperm.xlu0 %117, %v115
    %v119 = vpop.permute.xlu0 %118
    %v121 = vperm.slane %v56, 3
    %v122 = vperm.slane %v57, 3
    %v123 = vmul.f32 %v119, %v121
    %v124 = vmul.f32 %v119, %v122
    %v125 = vadd.f32 %v106, %v123
    %v126 = vadd.f32 %v107, %v124
    %v127 = vperm.slane %v56, 7
    %v128 = vperm.slane %v57, 7
    %v129 = vmul.f32 %v119, %v127
    %v130 = vmul.f32 %v119, %v128
    %v131 = vadd.f32 %v112, %v129
    %v132 = vadd.f32 %v113, %v130
    %133 = vrot.lane.b32.xlu0 %v33, 16
    %v134 = vpop.permute.xlu0 %133
    %135 = vrot.lane.b32.xlu0 %v34, 16
    %v136 = vpop.permute.xlu0 %135
    %vm137 = vcmp.lt.s32.totalorder %v46, 16
    %v138 = vsel %vm137, %v134, %v136
    %v139 = vsel %vm137, %v136, %v134
    %s140 = scalar_lea.vmem %s1, 2
    %v141 = vld [vmem:[%s140] sm:$0x3]
    %v143 = vperm.slane %v141, 0
    %v144 = vperm.slane %v141, 1
    %v147 = vmul.f32 %v139, %v143
    %v148 = vmul.f32 %v138, %v144
    %s149 = scalar_lea.vmem %s2, 32
    %v150 = vld [vmem:[%s149] sm:$0xff]
    %152 = vset.pattern.permute.xlu0 0
    %153 = vperm.xlu0 %152, %v150
    %v154 = vpop.permute.xlu0 %153
    %v156 = vperm.slane %v147, 0
    %v157 = vperm.slane %v148, 0
    %v158 = vmul.f32 %v154, %v156
    %v159 = vmul.f32 %v154, %v157
    %v160 = vadd.f32 %v125, %v158
    %v161 = vadd.f32 %v126, %v159
    %v162 = vperm.slane %v147, 4
    %v163 = vperm.slane %v148, 4
    %v164 = vmul.f32 %v154, %v162
    %v165 = vmul.f32 %v154, %v163
    %v166 = vadd.f32 %v131, %v164
    %v167 = vadd.f32 %v132, %v165
    %s168 = scalar_lea.vmem %s2, 40
    %v169 = vld [vmem:[%s168] sm:$0xff]
    %171 = vset.pattern.permute.xlu0 0
    %172 = vperm.xlu0 %171, %v169
    %v173 = vpop.permute.xlu0 %172
    %v175 = vperm.slane %v147, 1
    %v176 = vperm.slane %v148, 1
    %v177 = vmul.f32 %v173, %v175
    %v178 = vmul.f32 %v173, %v176
    %v179 = vadd.f32 %v160, %v177
    %v180 = vadd.f32 %v161, %v178
    %v181 = vperm.slane %v147, 5
    %v182 = vperm.slane %v148, 5
    %v183 = vmul.f32 %v173, %v181
    %v184 = vmul.f32 %v173, %v182
    %v185 = vadd.f32 %v166, %v183
    %v186 = vadd.f32 %v167, %v184
    %s187 = scalar_lea.vmem %s2, 48
    %v188 = vld [vmem:[%s187] sm:$0xff]
    %190 = vset.pattern.permute.xlu0 0
    %191 = vperm.xlu0 %190, %v188
    %v192 = vpop.permute.xlu0 %191
    %v194 = vperm.slane %v147, 2
    %v195 = vperm.slane %v148, 2
    %v196 = vmul.f32 %v192, %v194
    %v197 = vmul.f32 %v192, %v195
    %v198 = vadd.f32 %v179, %v196
    %v199 = vadd.f32 %v180, %v197
    %v200 = vperm.slane %v147, 6
    %v201 = vperm.slane %v148, 6
    %v202 = vmul.f32 %v192, %v200
    %v203 = vmul.f32 %v192, %v201
    %v204 = vadd.f32 %v185, %v202
    %v205 = vadd.f32 %v186, %v203
    %s206 = scalar_lea.vmem %s2, 56
    %v207 = vld [vmem:[%s206] sm:$0xff]
    %209 = vset.pattern.permute.xlu0 0
    %210 = vperm.xlu0 %209, %v207
    %v211 = vpop.permute.xlu0 %210
    %v213 = vperm.slane %v147, 3
    %v214 = vperm.slane %v148, 3
    %v215 = vmul.f32 %v211, %v213
    %v216 = vmul.f32 %v211, %v214
    %v217 = vadd.f32 %v198, %v215
    %v218 = vadd.f32 %v199, %v216
    %v219 = vperm.slane %v147, 7
    %v220 = vperm.slane %v148, 7
    %v221 = vmul.f32 %v211, %v219
    %v222 = vmul.f32 %v211, %v220
    %v223 = vadd.f32 %v204, %v221
    %v224 = vadd.f32 %v205, %v222
    %225 = vrot.lane.b32.xlu0 %v33, 15
    %v226 = vpop.permute.xlu0 %225
    %227 = vrot.lane.b32.xlu0 %v34, 15
    %v228 = vpop.permute.xlu0 %227
    %vm229 = vcmp.lt.s32.totalorder %v46, 15
    %v230 = vsel %vm229, %v226, %v228
    %v231 = vsel %vm229, %v228, %v226
    %s232 = scalar_lea.vmem %s1, 4
    %v233 = vld [vmem:[%s232] sm:$0x3]
    %v235 = vperm.slane %v233, 0
    %v236 = vperm.slane %v233, 1
    %v239 = vmul.f32 %v231, %v235
    %v240 = vmul.f32 %v230, %v236
    %s241 = scalar_lea.vmem %s2, 64
    %v242 = vld [vmem:[%s241] sm:$0xff]
    %244 = vset.pattern.permute.xlu0 0
    %245 = vperm.xlu0 %244, %v242
    %v246 = vpop.permute.xlu0 %245
    %v248 = vperm.slane %v239, 0
    %v249 = vperm.slane %v240, 0
    %v250 = vmul.f32 %v246, %v248
    %v251 = vmul.f32 %v246, %v249
    %v252 = vadd.f32 %v217, %v250
    %v253 = vadd.f32 %v218, %v251
    %v254 = vperm.slane %v239, 4
    %v255 = vperm.slane %v240, 4
    %v256 = vmul.f32 %v246, %v254
    %v257 = vmul.f32 %v246, %v255
    %v258 = vadd.f32 %v223, %v256
    %v259 = vadd.f32 %v224, %v257
    %s260 = scalar_lea.vmem %s2, 72
    %v261 = vld [vmem:[%s260] sm:$0xff]
    %263 = vset.pattern.permute.xlu0 0
    %264 = vperm.xlu0 %263, %v261
    %v265 = vpop.permute.xlu0 %264
    %v267 = vperm.slane %v239, 1
    %v268 = vperm.slane %v240, 1
    %v269 = vmul.f32 %v265, %v267
    %v270 = vmul.f32 %v265, %v268
    %v271 = vadd.f32 %v252, %v269
    %v272 = vadd.f32 %v253, %v270
    %v273 = vperm.slane %v239, 5
    %v274 = vperm.slane %v240, 5
    %v275 = vmul.f32 %v265, %v273
    %v276 = vmul.f32 %v265, %v274
    %v277 = vadd.f32 %v258, %v275
    %v278 = vadd.f32 %v259, %v276
    %s279 = scalar_lea.vmem %s2, 80
    %v280 = vld [vmem:[%s279] sm:$0xff]
    %282 = vset.pattern.permute.xlu0 0
    %283 = vperm.xlu0 %282, %v280
    %v284 = vpop.permute.xlu0 %283
    %v286 = vperm.slane %v239, 2
    %v287 = vperm.slane %v240, 2
    %v288 = vmul.f32 %v284, %v286
    %v289 = vmul.f32 %v284, %v287
    %v290 = vadd.f32 %v271, %v288
    %v291 = vadd.f32 %v272, %v289
    %v292 = vperm.slane %v239, 6
    %v293 = vperm.slane %v240, 6
    %v294 = vmul.f32 %v284, %v292
    %v295 = vmul.f32 %v284, %v293
    %v296 = vadd.f32 %v277, %v294
    %v297 = vadd.f32 %v278, %v295
    %s298 = scalar_lea.vmem %s2, 88
    %v299 = vld [vmem:[%s298] sm:$0xff]
    %301 = vset.pattern.permute.xlu0 0
    %302 = vperm.xlu0 %301, %v299
    %v303 = vpop.permute.xlu0 %302
    %v305 = vperm.slane %v239, 3
    %v306 = vperm.slane %v240, 3
    %v307 = vmul.f32 %v303, %v305
    %v308 = vmul.f32 %v303, %v306
    %v309 = vadd.f32 %v290, %v307
    %v310 = vadd.f32 %v291, %v308
    %v311 = vperm.slane %v239, 7
    %v312 = vperm.slane %v240, 7
    %v313 = vmul.f32 %v303, %v311
    %v314 = vmul.f32 %v303, %v312
    %v315 = vadd.f32 %v296, %v313
    %v316 = vadd.f32 %v297, %v314
    %317 = vrot.lane.b32.xlu0 %v33, 1
    %v318 = vpop.permute.xlu0 %317
    %319 = vrot.lane.b32.xlu0 %v34, 1
    %v320 = vpop.permute.xlu0 %319
    %vm321 = vcmp.lt.s32.totalorder %v46, 1
    %v322 = vsel %vm321, %v318, %v320
    %v323 = vsel %vm321, %v320, %v318
    %s324 = scalar_lea.vmem %s1, 6
    %v325 = vld [vmem:[%s324] sm:$0x3]
    %v327 = vperm.slane %v325, 0
    %v328 = vperm.slane %v325, 1
    %v331 = vmul.f32 %v323, %v327
    %v332 = vmul.f32 %v322, %v328
    %s333 = scalar_lea.vmem %s2, 96
    %v334 = vld [vmem:[%s333] sm:$0xff]
    %336 = vset.pattern.permute.xlu0 0
    %337 = vperm.xlu0 %336, %v334
    %v338 = vpop.permute.xlu0 %337
    %v340 = vperm.slane %v331, 0
    %v341 = vperm.slane %v332, 0
    %v342 = vmul.f32 %v338, %v340
    %v343 = vmul.f32 %v338, %v341
    %v344 = vadd.f32 %v309, %v342
    %v345 = vadd.f32 %v310, %v343
    %v346 = vperm.slane %v331, 4
    %v347 = vperm.slane %v332, 4
    %v348 = vmul.f32 %v338, %v346
    %v349 = vmul.f32 %v338, %v347
    %v350 = vadd.f32 %v315, %v348
    %v351 = vadd.f32 %v316, %v349
    %s352 = scalar_lea.vmem %s2, 104
    %v353 = vld [vmem:[%s352] sm:$0xff]
    %355 = vset.pattern.permute.xlu0 0
    %356 = vperm.xlu0 %355, %v353
    %v357 = vpop.permute.xlu0 %356
    %v359 = vperm.slane %v331, 1
    %v360 = vperm.slane %v332, 1
    %v361 = vmul.f32 %v357, %v359
    %v362 = vmul.f32 %v357, %v360
    %v363 = vadd.f32 %v344, %v361
    %v364 = vadd.f32 %v345, %v362
    %v365 = vperm.slane %v331, 5
    %v366 = vperm.slane %v332, 5
    %v367 = vmul.f32 %v357, %v365
    %v368 = vmul.f32 %v357, %v366
    %v369 = vadd.f32 %v350, %v367
    %v370 = vadd.f32 %v351, %v368
    %s371 = scalar_lea.vmem %s2, 112
    %v372 = vld [vmem:[%s371] sm:$0xff]
    %374 = vset.pattern.permute.xlu0 0
    %375 = vperm.xlu0 %374, %v372
    %v376 = vpop.permute.xlu0 %375
    %v378 = vperm.slane %v331, 2
    %v379 = vperm.slane %v332, 2
    %v380 = vmul.f32 %v376, %v378
    %v381 = vmul.f32 %v376, %v379
    %v382 = vadd.f32 %v363, %v380
    %v383 = vadd.f32 %v364, %v381
    %v384 = vperm.slane %v331, 6
    %v385 = vperm.slane %v332, 6
    %v386 = vmul.f32 %v376, %v384
    %v387 = vmul.f32 %v376, %v385
    %v388 = vadd.f32 %v369, %v386
    %v389 = vadd.f32 %v370, %v387
    %s390 = scalar_lea.vmem %s2, 120
    %v391 = vld [vmem:[%s390] sm:$0xff]
    %393 = vset.pattern.permute.xlu0 0
    %394 = vperm.xlu0 %393, %v391
    %v395 = vpop.permute.xlu0 %394
    %v397 = vperm.slane %v331, 3
    %v398 = vperm.slane %v332, 3
    %v399 = vmul.f32 %v395, %v397
    %v400 = vmul.f32 %v395, %v398
    %v401 = vadd.f32 %v382, %v399
    %v402 = vadd.f32 %v383, %v400
    %v403 = vperm.slane %v331, 7
    %v404 = vperm.slane %v332, 7
    %v405 = vmul.f32 %v395, %v403
    %v406 = vmul.f32 %v395, %v404
    %v407 = vadd.f32 %v388, %v405
    %v408 = vadd.f32 %v389, %v406
    %s409 = scalar_lea.vmem %s2, 128
    %v410 = vld [vmem:[%s409] sm:$0xff]
    %412 = vset.pattern.permute.xlu0 0
    %413 = vperm.xlu0 %412, %v410
    %v414 = vpop.permute.xlu0 %413
    %v416 = vperm.slane %v33, 0
    %v417 = vperm.slane %v34, 0
    %v418 = vmul.f32 %v414, %v416
    %v419 = vmul.f32 %v414, %v417
    %v420 = vadd.f32 %v401, %v418
    %v421 = vadd.f32 %v402, %v419
    %v422 = vperm.slane %v33, 4
    %v423 = vperm.slane %v34, 4
    %v424 = vmul.f32 %v414, %v422
    %v425 = vmul.f32 %v414, %v423
    %v426 = vadd.f32 %v407, %v424
    %v427 = vadd.f32 %v408, %v425
    %s428 = scalar_lea.vmem %s2, 136
    %v429 = vld [vmem:[%s428] sm:$0xff]
    %431 = vset.pattern.permute.xlu0 0
    %432 = vperm.xlu0 %431, %v429
    %v433 = vpop.permute.xlu0 %432
    %v435 = vperm.slane %v33, 1
    %v436 = vperm.slane %v34, 1
    %v437 = vmul.f32 %v433, %v435
    %v438 = vmul.f32 %v433, %v436
    %v439 = vadd.f32 %v420, %v437
    %v440 = vadd.f32 %v421, %v438
    %v441 = vperm.slane %v33, 5
    %v442 = vperm.slane %v34, 5
    %v443 = vmul.f32 %v433, %v441
    %v444 = vmul.f32 %v433, %v442
    %v445 = vadd.f32 %v426, %v443
    %v446 = vadd.f32 %v427, %v444
    %s447 = scalar_lea.vmem %s2, 144
    %v448 = vld [vmem:[%s447] sm:$0xff]
    %450 = vset.pattern.permute.xlu0 0
    %451 = vperm.xlu0 %450, %v448
    %v452 = vpop.permute.xlu0 %451
    %v454 = vperm.slane %v33, 2
    %v455 = vperm.slane %v34, 2
    %v456 = vmul.f32 %v452, %v454
    %v457 = vmul.f32 %v452, %v455
    %v458 = vadd.f32 %v439, %v456
    %v459 = vadd.f32 %v440, %v457
    %v460 = vperm.slane %v33, 6
    %v461 = vperm.slane %v34, 6
    %v462 = vmul.f32 %v452, %v460
    %v463 = vmul.f32 %v452, %v461
    %v464 = vadd.f32 %v445, %v462
    %v465 = vadd.f32 %v446, %v463
    %s466 = scalar_lea.vmem %s2, 152
    %v467 = vld [vmem:[%s466] sm:$0xff]
    %469 = vset.pattern.permute.xlu0 0
    %470 = vperm.xlu0 %469, %v467
    %v471 = vpop.permute.xlu0 %470
    %v473 = vperm.slane %v33, 3
    %v474 = vperm.slane %v34, 3
    %v475 = vmul.f32 %v471, %v473
    %v476 = vmul.f32 %v471, %v474
    %v477 = vadd.f32 %v458, %v475
    %v478 = vadd.f32 %v459, %v476
    %v479 = vperm.slane %v33, 7
    %v480 = vperm.slane %v34, 7
    %v481 = vmul.f32 %v471, %v479
    %v482 = vmul.f32 %v471, %v480
    %v483 = vadd.f32 %v464, %v481
    %v484 = vadd.f32 %v465, %v482
    %485 = vrot.lane.b32.xlu0 %v33, 127
    %v486 = vpop.permute.xlu0 %485
    %487 = vrot.lane.b32.xlu0 %v34, 127
    %v488 = vpop.permute.xlu0 %487
    %vm489 = vcmp.lt.s32.totalorder %v46, 127
    %v490 = vsel %vm489, %v486, %v488
    %v491 = vsel %vm489, %v488, %v486
    %s492 = scalar_lea.vmem %s1, 10
    %v493 = vld [vmem:[%s492] sm:$0x3]
    %v495 = vperm.slane %v493, 0
    %v496 = vperm.slane %v493, 1
    %v499 = vmul.f32 %v490, %v495
    %v500 = vmul.f32 %v491, %v496
    %s501 = scalar_lea.vmem %s2, 160
    %v502 = vld [vmem:[%s501] sm:$0xff]
    %504 = vset.pattern.permute.xlu0 0
    %505 = vperm.xlu0 %504, %v502
    %v506 = vpop.permute.xlu0 %505
    %v508 = vperm.slane %v499, 0
    %v509 = vperm.slane %v500, 0
    %v510 = vmul.f32 %v506, %v508
    %v511 = vmul.f32 %v506, %v509
    %v512 = vadd.f32 %v477, %v510
    %v513 = vadd.f32 %v478, %v511
    %v514 = vperm.slane %v499, 4
    %v515 = vperm.slane %v500, 4
    %v516 = vmul.f32 %v506, %v514
    %v517 = vmul.f32 %v506, %v515
    %v518 = vadd.f32 %v483, %v516
    %v519 = vadd.f32 %v484, %v517
    %s520 = scalar_lea.vmem %s2, 168
    %v521 = vld [vmem:[%s520] sm:$0xff]
    %523 = vset.pattern.permute.xlu0 0
    %524 = vperm.xlu0 %523, %v521
    %v525 = vpop.permute.xlu0 %524
    %v527 = vperm.slane %v499, 1
    %v528 = vperm.slane %v500, 1
    %v529 = vmul.f32 %v525, %v527
    %v530 = vmul.f32 %v525, %v528
    %v531 = vadd.f32 %v512, %v529
    %v532 = vadd.f32 %v513, %v530
    %v533 = vperm.slane %v499, 5
    %v534 = vperm.slane %v500, 5
    %v535 = vmul.f32 %v525, %v533
    %v536 = vmul.f32 %v525, %v534
    %v537 = vadd.f32 %v518, %v535
    %v538 = vadd.f32 %v519, %v536
    %s539 = scalar_lea.vmem %s2, 176
    %v540 = vld [vmem:[%s539] sm:$0xff]
    %542 = vset.pattern.permute.xlu0 0
    %543 = vperm.xlu0 %542, %v540
    %v544 = vpop.permute.xlu0 %543
    %v546 = vperm.slane %v499, 2
    %v547 = vperm.slane %v500, 2
    %v548 = vmul.f32 %v544, %v546
    %v549 = vmul.f32 %v544, %v547
    %v550 = vadd.f32 %v531, %v548
    %v551 = vadd.f32 %v532, %v549
    %v552 = vperm.slane %v499, 6
    %v553 = vperm.slane %v500, 6
    %v554 = vmul.f32 %v544, %v552
    %v555 = vmul.f32 %v544, %v553
    %v556 = vadd.f32 %v537, %v554
    %v557 = vadd.f32 %v538, %v555
    %s558 = scalar_lea.vmem %s2, 184
    %v559 = vld [vmem:[%s558] sm:$0xff]
    %561 = vset.pattern.permute.xlu0 0
    %562 = vperm.xlu0 %561, %v559
    %v563 = vpop.permute.xlu0 %562
    %v565 = vperm.slane %v499, 3
    %v566 = vperm.slane %v500, 3
    %v567 = vmul.f32 %v563, %v565
    %v568 = vmul.f32 %v563, %v566
    %v569 = vadd.f32 %v550, %v567
    %v570 = vadd.f32 %v551, %v568
    %v571 = vperm.slane %v499, 7
    %v572 = vperm.slane %v500, 7
    %v573 = vmul.f32 %v563, %v571
    %v574 = vmul.f32 %v563, %v572
    %v575 = vadd.f32 %v556, %v573
    %v576 = vadd.f32 %v557, %v574
    %577 = vrot.lane.b32.xlu0 %v33, 113
    %v578 = vpop.permute.xlu0 %577
    %579 = vrot.lane.b32.xlu0 %v34, 113
    %v580 = vpop.permute.xlu0 %579
    %vm581 = vcmp.lt.s32.totalorder %v46, 113
    %v582 = vsel %vm581, %v578, %v580
    %v583 = vsel %vm581, %v580, %v578
    %s584 = scalar_lea.vmem %s1, 12
    %v585 = vld [vmem:[%s584] sm:$0x3]
    %v587 = vperm.slane %v585, 0
    %v588 = vperm.slane %v585, 1
    %v591 = vmul.f32 %v582, %v587
    %v592 = vmul.f32 %v583, %v588
    %s593 = scalar_lea.vmem %s2, 192
    %v594 = vld [vmem:[%s593] sm:$0xff]
    %596 = vset.pattern.permute.xlu0 0
    %597 = vperm.xlu0 %596, %v594
    %v598 = vpop.permute.xlu0 %597
    %v600 = vperm.slane %v591, 0
    %v601 = vperm.slane %v592, 0
    %v602 = vmul.f32 %v598, %v600
    %v603 = vmul.f32 %v598, %v601
    %v604 = vadd.f32 %v569, %v602
    %v605 = vadd.f32 %v570, %v603
    %v606 = vperm.slane %v591, 4
    %v607 = vperm.slane %v592, 4
    %v608 = vmul.f32 %v598, %v606
    %v609 = vmul.f32 %v598, %v607
    %v610 = vadd.f32 %v575, %v608
    %v611 = vadd.f32 %v576, %v609
    %s612 = scalar_lea.vmem %s2, 200
    %v613 = vld [vmem:[%s612] sm:$0xff]
    %615 = vset.pattern.permute.xlu0 0
    %616 = vperm.xlu0 %615, %v613
    %v617 = vpop.permute.xlu0 %616
    %v619 = vperm.slane %v591, 1
    %v620 = vperm.slane %v592, 1
    %v621 = vmul.f32 %v617, %v619
    %v622 = vmul.f32 %v617, %v620
    %v623 = vadd.f32 %v604, %v621
    %v624 = vadd.f32 %v605, %v622
    %v625 = vperm.slane %v591, 5
    %v626 = vperm.slane %v592, 5
    %v627 = vmul.f32 %v617, %v625
    %v628 = vmul.f32 %v617, %v626
    %v629 = vadd.f32 %v610, %v627
    %v630 = vadd.f32 %v611, %v628
    %s631 = scalar_lea.vmem %s2, 208
    %v632 = vld [vmem:[%s631] sm:$0xff]
    %634 = vset.pattern.permute.xlu0 0
    %635 = vperm.xlu0 %634, %v632
    %v636 = vpop.permute.xlu0 %635
    %v638 = vperm.slane %v591, 2
    %v639 = vperm.slane %v592, 2
    %v640 = vmul.f32 %v636, %v638
    %v641 = vmul.f32 %v636, %v639
    %v642 = vadd.f32 %v623, %v640
    %v643 = vadd.f32 %v624, %v641
    %v644 = vperm.slane %v591, 6
    %v645 = vperm.slane %v592, 6
    %v646 = vmul.f32 %v636, %v644
    %v647 = vmul.f32 %v636, %v645
    %v648 = vadd.f32 %v629, %v646
    %v649 = vadd.f32 %v630, %v647
    %s650 = scalar_lea.vmem %s2, 216
    %v651 = vld [vmem:[%s650] sm:$0xff]
    %653 = vset.pattern.permute.xlu0 0
    %654 = vperm.xlu0 %653, %v651
    %v655 = vpop.permute.xlu0 %654
    %v657 = vperm.slane %v591, 3
    %v658 = vperm.slane %v592, 3
    %v659 = vmul.f32 %v655, %v657
    %v660 = vmul.f32 %v655, %v658
    %v661 = vadd.f32 %v642, %v659
    %v662 = vadd.f32 %v643, %v660
    %v663 = vperm.slane %v591, 7
    %v664 = vperm.slane %v592, 7
    %v665 = vmul.f32 %v655, %v663
    %v666 = vmul.f32 %v655, %v664
    %v667 = vadd.f32 %v648, %v665
    %v668 = vadd.f32 %v649, %v666
    %669 = vrot.lane.b32.xlu0 %v33, 112
    %v670 = vpop.permute.xlu0 %669
    %671 = vrot.lane.b32.xlu0 %v34, 112
    %v672 = vpop.permute.xlu0 %671
    %vm673 = vcmp.lt.s32.totalorder %v46, 112
    %v674 = vsel %vm673, %v670, %v672
    %v675 = vsel %vm673, %v672, %v670
    %s676 = scalar_lea.vmem %s1, 14
    %v677 = vld [vmem:[%s676] sm:$0x3]
    %v679 = vperm.slane %v677, 0
    %v680 = vperm.slane %v677, 1
    %v683 = vmul.f32 %v674, %v679
    %v684 = vmul.f32 %v675, %v680
    %s685 = scalar_lea.vmem %s2, 224
    %v686 = vld [vmem:[%s685] sm:$0xff]
    %688 = vset.pattern.permute.xlu0 0
    %689 = vperm.xlu0 %688, %v686
    %v690 = vpop.permute.xlu0 %689
    %v692 = vperm.slane %v683, 0
    %v693 = vperm.slane %v684, 0
    %v694 = vmul.f32 %v690, %v692
    %v695 = vmul.f32 %v690, %v693
    %v696 = vadd.f32 %v661, %v694
    %v697 = vadd.f32 %v662, %v695
    %v698 = vperm.slane %v683, 4
    %v699 = vperm.slane %v684, 4
    %v700 = vmul.f32 %v690, %v698
    %v701 = vmul.f32 %v690, %v699
    %v702 = vadd.f32 %v667, %v700
    %v703 = vadd.f32 %v668, %v701
    %s704 = scalar_lea.vmem %s2, 232
    %v705 = vld [vmem:[%s704] sm:$0xff]
    %707 = vset.pattern.permute.xlu0 0
    %708 = vperm.xlu0 %707, %v705
    %v709 = vpop.permute.xlu0 %708
    %v711 = vperm.slane %v683, 1
    %v712 = vperm.slane %v684, 1
    %v713 = vmul.f32 %v709, %v711
    %v714 = vmul.f32 %v709, %v712
    %v715 = vadd.f32 %v696, %v713
    %v716 = vadd.f32 %v697, %v714
    %v717 = vperm.slane %v683, 5
    %v718 = vperm.slane %v684, 5
    %v719 = vmul.f32 %v709, %v717
    %v720 = vmul.f32 %v709, %v718
    %v721 = vadd.f32 %v702, %v719
    %v722 = vadd.f32 %v703, %v720
    %s723 = scalar_lea.vmem %s2, 240
    %v724 = vld [vmem:[%s723] sm:$0xff]
    %726 = vset.pattern.permute.xlu0 0
    %727 = vperm.xlu0 %726, %v724
    %v728 = vpop.permute.xlu0 %727
    %v730 = vperm.slane %v683, 2
    %v731 = vperm.slane %v684, 2
    %v732 = vmul.f32 %v728, %v730
    %v733 = vmul.f32 %v728, %v731
    %v734 = vadd.f32 %v715, %v732
    %v735 = vadd.f32 %v716, %v733
    %v736 = vperm.slane %v683, 6
    %v737 = vperm.slane %v684, 6
    %v738 = vmul.f32 %v728, %v736
    %v739 = vmul.f32 %v728, %v737
    %v740 = vadd.f32 %v721, %v738
    %v741 = vadd.f32 %v722, %v739
    %s742 = scalar_lea.vmem %s2, 248
    %v743 = vld [vmem:[%s742] sm:$0xff]
    %745 = vset.pattern.permute.xlu0 0
    %746 = vperm.xlu0 %745, %v743
    %v747 = vpop.permute.xlu0 %746
    %v749 = vperm.slane %v683, 3
    %v750 = vperm.slane %v684, 3
    %v751 = vmul.f32 %v747, %v749
    %v752 = vmul.f32 %v747, %v750
    %v753 = vadd.f32 %v734, %v751
    %v754 = vadd.f32 %v735, %v752
    %v755 = vperm.slane %v683, 7
    %v756 = vperm.slane %v684, 7
    %v757 = vmul.f32 %v747, %v755
    %v758 = vmul.f32 %v747, %v756
    %v759 = vadd.f32 %v740, %v757
    %v760 = vadd.f32 %v741, %v758
    %761 = vrot.lane.b32.xlu0 %v33, 111
    %v762 = vpop.permute.xlu0 %761
    %763 = vrot.lane.b32.xlu0 %v34, 111
    %v764 = vpop.permute.xlu0 %763
    %vm765 = vcmp.lt.s32.totalorder %v46, 111
    %v766 = vsel %vm765, %v762, %v764
    %v767 = vsel %vm765, %v764, %v762
    %s768 = scalar_lea.vmem %s1, 16
    %v769 = vld [vmem:[%s768] sm:$0x3]
    %v771 = vperm.slane %v769, 0
    %v772 = vperm.slane %v769, 1
    %v775 = vmul.f32 %v766, %v771
    %v776 = vmul.f32 %v767, %v772
    %s777 = scalar_lea.vmem %s2, 256
    %v778 = vld [vmem:[%s777] sm:$0xff]
    %780 = vset.pattern.permute.xlu0 0
    %781 = vperm.xlu0 %780, %v778
    %v782 = vpop.permute.xlu0 %781
    %v784 = vperm.slane %v775, 0
    %v785 = vperm.slane %v776, 0
    %v786 = vmul.f32 %v782, %v784
    %v787 = vmul.f32 %v782, %v785
    %v788 = vadd.f32 %v753, %v786
    %v789 = vadd.f32 %v754, %v787
    %v790 = vperm.slane %v775, 4
    %v791 = vperm.slane %v776, 4
    %v792 = vmul.f32 %v782, %v790
    %v793 = vmul.f32 %v782, %v791
    %v794 = vadd.f32 %v759, %v792
    %v795 = vadd.f32 %v760, %v793
    %s796 = scalar_lea.vmem %s2, 264
    %v797 = vld [vmem:[%s796] sm:$0xff]
    %799 = vset.pattern.permute.xlu0 0
    %800 = vperm.xlu0 %799, %v797
    %v801 = vpop.permute.xlu0 %800
    %v803 = vperm.slane %v775, 1
    %v804 = vperm.slane %v776, 1
    %v805 = vmul.f32 %v801, %v803
    %v806 = vmul.f32 %v801, %v804
    %v807 = vadd.f32 %v788, %v805
    %v808 = vadd.f32 %v789, %v806
    %v809 = vperm.slane %v775, 5
    %v810 = vperm.slane %v776, 5
    %v811 = vmul.f32 %v801, %v809
    %v812 = vmul.f32 %v801, %v810
    %v813 = vadd.f32 %v794, %v811
    %v814 = vadd.f32 %v795, %v812
    %s815 = scalar_lea.vmem %s2, 272
    %v816 = vld [vmem:[%s815] sm:$0xff]
    %818 = vset.pattern.permute.xlu0 0
    %819 = vperm.xlu0 %818, %v816
    %v820 = vpop.permute.xlu0 %819
    %v822 = vperm.slane %v775, 2
    %v823 = vperm.slane %v776, 2
    %v824 = vmul.f32 %v820, %v822
    %v825 = vmul.f32 %v820, %v823
    %v826 = vadd.f32 %v807, %v824
    %v827 = vadd.f32 %v808, %v825
    %v828 = vperm.slane %v775, 6
    %v829 = vperm.slane %v776, 6
    %v830 = vmul.f32 %v820, %v828
    %v831 = vmul.f32 %v820, %v829
    %v832 = vadd.f32 %v813, %v830
    %v833 = vadd.f32 %v814, %v831
    %s834 = scalar_lea.vmem %s2, 280
    %v835 = vld [vmem:[%s834] sm:$0xff]
    %837 = vset.pattern.permute.xlu0 0
    %838 = vperm.xlu0 %837, %v835
    %v839 = vpop.permute.xlu0 %838
    %v841 = vperm.slane %v775, 3
    %v842 = vperm.slane %v776, 3
    %v843 = vmul.f32 %v839, %v841
    %v844 = vmul.f32 %v839, %v842
    %v845 = vadd.f32 %v826, %v843
    %v846 = vadd.f32 %v827, %v844
    %v847 = vperm.slane %v775, 7
    %v848 = vperm.slane %v776, 7
    %v849 = vmul.f32 %v839, %v847
    %v850 = vmul.f32 %v839, %v848
    %v851 = vadd.f32 %v832, %v849
    %v852 = vadd.f32 %v833, %v850
    %v853 = vmax.f32 %v845, 0.0
    %v854 = vmax.f32 %v846, 0.0
    %v855 = vmax.f32 %v851, 0.0
    %v856 = vmax.f32 %v852, 0.0
    %857 = vst [vmem:[%s10] sm:$0xff] %v853
    %858 = vst [vmem:[%s10 + $0x8] sm:$0xff] %v854
    %859 = vst [vmem:[%s10 + $0x10] sm:$0xff] %v855
    %860 = vst [vmem:[%s10 + $0x18] sm:$0xff] %v856
    %v861 = vld [vmem:[%s5] sm:$0xf]
    %863 = vset.pattern.permute.xlu0 0
    %864 = vperm.xlu0 %863, %v861
    %v865 = vpop.permute.xlu0 %864
    %867 = vrot.lane.b32.xlu0 %v853, 17
    %v868 = vpop.permute.xlu0 %867
    %869 = vrot.lane.b32.xlu0 %v855, 17
    %v870 = vpop.permute.xlu0 %869
    %871 = vrot.lane.b32.xlu0 %v854, 17
    %v872 = vpop.permute.xlu0 %871
    %873 = vrot.lane.b32.xlu0 %v856, 17
    %v874 = vpop.permute.xlu0 %873
    %v875 = vsel %vm47, %v868, %v872
    %v876 = vsel %vm47, %v870, %v874
    %v877 = vsel %vm47, %v872, %v868
    %v878 = vsel %vm47, %v874, %v870
    %v879 = vld [vmem:[%s1] sm:$0x3]
    %v881 = vperm.slane %v879, 0
    %v882 = vperm.slane %v879, 1
    %v885 = vmul.f32 %v877, %v881
    %v886 = vmul.f32 %v875, %v882
    %v887 = vmul.f32 %v878, %v881
    %v888 = vmul.f32 %v876, %v882
    %v889 = vld [vmem:[%s4] sm:$0xf]
    %891 = vset.pattern.permute.xlu0 0
    %892 = vperm.xlu0 %891, %v889
    %v893 = vpop.permute.xlu0 %892
    %v895 = vperm.slane %v885, 0
    %v896 = vperm.slane %v886, 0
    %v897 = vmul.f32 %v893, %v895
    %v898 = vmul.f32 %v893, %v896
    %v899 = vadd.f32 %v865, %v897
    %v900 = vadd.f32 %v865, %v898
    %v901 = vperm.slane %v887, 0
    %v902 = vperm.slane %v888, 0
    %v903 = vmul.f32 %v893, %v901
    %v904 = vmul.f32 %v893, %v902
    %v905 = vadd.f32 %v865, %v903
    %v906 = vadd.f32 %v865, %v904
    %s907 = scalar_lea.vmem %s4, 4
    %v908 = vld [vmem:[%s907] sm:$0xf]
    %910 = vset.pattern.permute.xlu0 0
    %911 = vperm.xlu0 %910, %v908
    %v912 = vpop.permute.xlu0 %911
    %v914 = vperm.slane %v885, 1
    %v915 = vperm.slane %v886, 1
    %v916 = vmul.f32 %v912, %v914
    %v917 = vmul.f32 %v912, %v915
    %v918 = vadd.f32 %v899, %v916
    %v919 = vadd.f32 %v900, %v917
    %v920 = vperm.slane %v887, 1
    %v921 = vperm.slane %v888, 1
    %v922 = vmul.f32 %v912, %v920
    %v923 = vmul.f32 %v912, %v921
    %v924 = vadd.f32 %v905, %v922
    %v925 = vadd.f32 %v906, %v923
    %s926 = scalar_lea.vmem %s4, 8
    %v927 = vld [vmem:[%s926] sm:$0xf]
    %929 = vset.pattern.permute.xlu0 0
    %930 = vperm.xlu0 %929, %v927
    %v931 = vpop.permute.xlu0 %930
    %v933 = vperm.slane %v885, 2
    %v934 = vperm.slane %v886, 2
    %v935 = vmul.f32 %v931, %v933
    %v936 = vmul.f32 %v931, %v934
    %v937 = vadd.f32 %v918, %v935
    %v938 = vadd.f32 %v919, %v936
    %v939 = vperm.slane %v887, 2
    %v940 = vperm.slane %v888, 2
    %v941 = vmul.f32 %v931, %v939
    %v942 = vmul.f32 %v931, %v940
    %v943 = vadd.f32 %v924, %v941
    %v944 = vadd.f32 %v925, %v942
    %s945 = scalar_lea.vmem %s4, 12
    %v946 = vld [vmem:[%s945] sm:$0xf]
    %948 = vset.pattern.permute.xlu0 0
    %949 = vperm.xlu0 %948, %v946
    %v950 = vpop.permute.xlu0 %949
    %v952 = vperm.slane %v885, 3
    %v953 = vperm.slane %v886, 3
    %v954 = vmul.f32 %v950, %v952
    %v955 = vmul.f32 %v950, %v953
    %v956 = vadd.f32 %v937, %v954
    %v957 = vadd.f32 %v938, %v955
    %v958 = vperm.slane %v887, 3
    %v959 = vperm.slane %v888, 3
    %v960 = vmul.f32 %v950, %v958
    %v961 = vmul.f32 %v950, %v959
    %v962 = vadd.f32 %v943, %v960
    %v963 = vadd.f32 %v944, %v961
    %s964 = scalar_lea.vmem %s4, 16
    %v965 = vld [vmem:[%s964] sm:$0xf]
    %967 = vset.pattern.permute.xlu0 0
    %968 = vperm.xlu0 %967, %v965
    %v969 = vpop.permute.xlu0 %968
    %v971 = vperm.slane %v885, 4
    %v972 = vperm.slane %v886, 4
    %v973 = vmul.f32 %v969, %v971
    %v974 = vmul.f32 %v969, %v972
    %v975 = vadd.f32 %v956, %v973
    %v976 = vadd.f32 %v957, %v974
    %v977 = vperm.slane %v887, 4
    %v978 = vperm.slane %v888, 4
    %v979 = vmul.f32 %v969, %v977
    %v980 = vmul.f32 %v969, %v978
    %v981 = vadd.f32 %v962, %v979
    %v982 = vadd.f32 %v963, %v980
    %s983 = scalar_lea.vmem %s4, 20
    %v984 = vld [vmem:[%s983] sm:$0xf]
    %986 = vset.pattern.permute.xlu0 0
    %987 = vperm.xlu0 %986, %v984
    %v988 = vpop.permute.xlu0 %987
    %v990 = vperm.slane %v885, 5
    %v991 = vperm.slane %v886, 5
    %v992 = vmul.f32 %v988, %v990
    %v993 = vmul.f32 %v988, %v991
    %v994 = vadd.f32 %v975, %v992
    %v995 = vadd.f32 %v976, %v993
    %v996 = vperm.slane %v887, 5
    %v997 = vperm.slane %v888, 5
    %v998 = vmul.f32 %v988, %v996
    %v999 = vmul.f32 %v988, %v997
    %v1000 = vadd.f32 %v981, %v998
    %v1001 = vadd.f32 %v982, %v999
    %s1002 = scalar_lea.vmem %s4, 24
    %v1003 = vld [vmem:[%s1002] sm:$0xf]
    %1005 = vset.pattern.permute.xlu0 0
    %1006 = vperm.xlu0 %1005, %v1003
    %v1007 = vpop.permute.xlu0 %1006
    %v1009 = vperm.slane %v885, 6
    %v1010 = vperm.slane %v886, 6
    %v1011 = vmul.f32 %v1007, %v1009
    %v1012 = vmul.f32 %v1007, %v1010
    %v1013 = vadd.f32 %v994, %v1011
    %v1014 = vadd.f32 %v995, %v1012
    %v1015 = vperm.slane %v887, 6
    %v1016 = vperm.slane %v888, 6
    %v1017 = vmul.f32 %v1007, %v1015
    %v1018 = vmul.f32 %v1007, %v1016
    %v1019 = vadd.f32 %v1000, %v1017
    %v1020 = vadd.f32 %v1001, %v1018
    %s1021 = scalar_lea.vmem %s4, 28
    %v1022 = vld [vmem:[%s1021] sm:$0xf]
    %1024 = vset.pattern.permute.xlu0 0
    %1025 = vperm.xlu0 %1024, %v1022
    %v1026 = vpop.permute.xlu0 %1025
    %v1028 = vperm.slane %v885, 7
    %v1029 = vperm.slane %v886, 7
    %v1030 = vmul.f32 %v1026, %v1028
    %v1031 = vmul.f32 %v1026, %v1029
    %v1032 = vadd.f32 %v1013, %v1030
    %v1033 = vadd.f32 %v1014, %v1031
    %v1034 = vperm.slane %v887, 7
    %v1035 = vperm.slane %v888, 7
    %v1036 = vmul.f32 %v1026, %v1034
    %v1037 = vmul.f32 %v1026, %v1035
    %v1038 = vadd.f32 %v1019, %v1036
    %v1039 = vadd.f32 %v1020, %v1037
    %1040 = vrot.lane.b32.xlu0 %v853, 16
    %v1041 = vpop.permute.xlu0 %1040
    %1042 = vrot.lane.b32.xlu0 %v855, 16
    %v1043 = vpop.permute.xlu0 %1042
    %1044 = vrot.lane.b32.xlu0 %v854, 16
    %v1045 = vpop.permute.xlu0 %1044
    %1046 = vrot.lane.b32.xlu0 %v856, 16
    %v1047 = vpop.permute.xlu0 %1046
    %v1048 = vsel %vm137, %v1041, %v1045
    %v1049 = vsel %vm137, %v1043, %v1047
    %v1050 = vsel %vm137, %v1045, %v1041
    %v1051 = vsel %vm137, %v1047, %v1043
    %v1052 = vld [vmem:[%s140] sm:$0x3]
    %v1054 = vperm.slane %v1052, 0
    %v1055 = vperm.slane %v1052, 1
    %v1058 = vmul.f32 %v1050, %v1054
    %v1059 = vmul.f32 %v1048, %v1055
    %v1060 = vmul.f32 %v1051, %v1054
    %v1061 = vmul.f32 %v1049, %v1055
    %s1062 = scalar_lea.vmem %s4, 32
    %v1063 = vld [vmem:[%s1062] sm:$0xf]
    %1065 = vset.pattern.permute.xlu0 0
    %1066 = vperm.xlu0 %1065, %v1063
    %v1067 = vpop.permute.xlu0 %1066
    %v1069 = vperm.slane %v1058, 0
    %v1070 = vperm.slane %v1059, 0
    %v1071 = vmul.f32 %v1067, %v1069
    %v1072 = vmul.f32 %v1067, %v1070
    %v1073 = vadd.f32 %v1032, %v1071
    %v1074 = vadd.f32 %v1033, %v1072
    %v1075 = vperm.slane %v1060, 0
    %v1076 = vperm.slane %v1061, 0
    %v1077 = vmul.f32 %v1067, %v1075
    %v1078 = vmul.f32 %v1067, %v1076
    %v1079 = vadd.f32 %v1038, %v1077
    %v1080 = vadd.f32 %v1039, %v1078
    %s1081 = scalar_lea.vmem %s4, 36
    %v1082 = vld [vmem:[%s1081] sm:$0xf]
    %1084 = vset.pattern.permute.xlu0 0
    %1085 = vperm.xlu0 %1084, %v1082
    %v1086 = vpop.permute.xlu0 %1085
    %v1088 = vperm.slane %v1058, 1
    %v1089 = vperm.slane %v1059, 1
    %v1090 = vmul.f32 %v1086, %v1088
    %v1091 = vmul.f32 %v1086, %v1089
    %v1092 = vadd.f32 %v1073, %v1090
    %v1093 = vadd.f32 %v1074, %v1091
    %v1094 = vperm.slane %v1060, 1
    %v1095 = vperm.slane %v1061, 1
    %v1096 = vmul.f32 %v1086, %v1094
    %v1097 = vmul.f32 %v1086, %v1095
    %v1098 = vadd.f32 %v1079, %v1096
    %v1099 = vadd.f32 %v1080, %v1097
    %s1100 = scalar_lea.vmem %s4, 40
    %v1101 = vld [vmem:[%s1100] sm:$0xf]
    %1103 = vset.pattern.permute.xlu0 0
    %1104 = vperm.xlu0 %1103, %v1101
    %v1105 = vpop.permute.xlu0 %1104
    %v1107 = vperm.slane %v1058, 2
    %v1108 = vperm.slane %v1059, 2
    %v1109 = vmul.f32 %v1105, %v1107
    %v1110 = vmul.f32 %v1105, %v1108
    %v1111 = vadd.f32 %v1092, %v1109
    %v1112 = vadd.f32 %v1093, %v1110
    %v1113 = vperm.slane %v1060, 2
    %v1114 = vperm.slane %v1061, 2
    %v1115 = vmul.f32 %v1105, %v1113
    %v1116 = vmul.f32 %v1105, %v1114
    %v1117 = vadd.f32 %v1098, %v1115
    %v1118 = vadd.f32 %v1099, %v1116
    %s1119 = scalar_lea.vmem %s4, 44
    %v1120 = vld [vmem:[%s1119] sm:$0xf]
    %1122 = vset.pattern.permute.xlu0 0
    %1123 = vperm.xlu0 %1122, %v1120
    %v1124 = vpop.permute.xlu0 %1123
    %v1126 = vperm.slane %v1058, 3
    %v1127 = vperm.slane %v1059, 3
    %v1128 = vmul.f32 %v1124, %v1126
    %v1129 = vmul.f32 %v1124, %v1127
    %v1130 = vadd.f32 %v1111, %v1128
    %v1131 = vadd.f32 %v1112, %v1129
    %v1132 = vperm.slane %v1060, 3
    %v1133 = vperm.slane %v1061, 3
    %v1134 = vmul.f32 %v1124, %v1132
    %v1135 = vmul.f32 %v1124, %v1133
    %v1136 = vadd.f32 %v1117, %v1134
    %v1137 = vadd.f32 %v1118, %v1135
    %s1138 = scalar_lea.vmem %s4, 48
    %v1139 = vld [vmem:[%s1138] sm:$0xf]
    %1141 = vset.pattern.permute.xlu0 0
    %1142 = vperm.xlu0 %1141, %v1139
    %v1143 = vpop.permute.xlu0 %1142
    %v1145 = vperm.slane %v1058, 4
    %v1146 = vperm.slane %v1059, 4
    %v1147 = vmul.f32 %v1143, %v1145
    %v1148 = vmul.f32 %v1143, %v1146
    %v1149 = vadd.f32 %v1130, %v1147
    %v1150 = vadd.f32 %v1131, %v1148
    %v1151 = vperm.slane %v1060, 4
    %v1152 = vperm.slane %v1061, 4
    %v1153 = vmul.f32 %v1143, %v1151
    %v1154 = vmul.f32 %v1143, %v1152
    %v1155 = vadd.f32 %v1136, %v1153
    %v1156 = vadd.f32 %v1137, %v1154
    %s1157 = scalar_lea.vmem %s4, 52
    %v1158 = vld [vmem:[%s1157] sm:$0xf]
    %1160 = vset.pattern.permute.xlu0 0
    %1161 = vperm.xlu0 %1160, %v1158
    %v1162 = vpop.permute.xlu0 %1161
    %v1164 = vperm.slane %v1058, 5
    %v1165 = vperm.slane %v1059, 5
    %v1166 = vmul.f32 %v1162, %v1164
    %v1167 = vmul.f32 %v1162, %v1165
    %v1168 = vadd.f32 %v1149, %v1166
    %v1169 = vadd.f32 %v1150, %v1167
    %v1170 = vperm.slane %v1060, 5
    %v1171 = vperm.slane %v1061, 5
    %v1172 = vmul.f32 %v1162, %v1170
    %v1173 = vmul.f32 %v1162, %v1171
    %v1174 = vadd.f32 %v1155, %v1172
    %v1175 = vadd.f32 %v1156, %v1173
    %s1176 = scalar_lea.vmem %s4, 56
    %v1177 = vld [vmem:[%s1176] sm:$0xf]
    %1179 = vset.pattern.permute.xlu0 0
    %1180 = vperm.xlu0 %1179, %v1177
    %v1181 = vpop.permute.xlu0 %1180
    %v1183 = vperm.slane %v1058, 6
    %v1184 = vperm.slane %v1059, 6
    %v1185 = vmul.f32 %v1181, %v1183
    %v1186 = vmul.f32 %v1181, %v1184
    %v1187 = vadd.f32 %v1168, %v1185
    %v1188 = vadd.f32 %v1169, %v1186
    %v1189 = vperm.slane %v1060, 6
    %v1190 = vperm.slane %v1061, 6
    %v1191 = vmul.f32 %v1181, %v1189
    %v1192 = vmul.f32 %v1181, %v1190
    %v1193 = vadd.f32 %v1174, %v1191
    %v1194 = vadd.f32 %v1175, %v1192
    %s1195 = scalar_lea.vmem %s4, 60
    %v1196 = vld [vmem:[%s1195] sm:$0xf]
    %1198 = vset.pattern.permute.xlu0 0
    %1199 = vperm.xlu0 %1198, %v1196
    %v1200 = vpop.permute.xlu0 %1199
    %v1202 = vperm.slane %v1058, 7
    %v1203 = vperm.slane %v1059, 7
    %v1204 = vmul.f32 %v1200, %v1202
    %v1205 = vmul.f32 %v1200, %v1203
    %v1206 = vadd.f32 %v1187, %v1204
    %v1207 = vadd.f32 %v1188, %v1205
    %v1208 = vperm.slane %v1060, 7
    %v1209 = vperm.slane %v1061, 7
    %v1210 = vmul.f32 %v1200, %v1208
    %v1211 = vmul.f32 %v1200, %v1209
    %v1212 = vadd.f32 %v1193, %v1210
    %v1213 = vadd.f32 %v1194, %v1211
    %1214 = vrot.lane.b32.xlu0 %v853, 15
    %v1215 = vpop.permute.xlu0 %1214
    %1216 = vrot.lane.b32.xlu0 %v855, 15
    %v1217 = vpop.permute.xlu0 %1216
    %1218 = vrot.lane.b32.xlu0 %v854, 15
    %v1219 = vpop.permute.xlu0 %1218
    %1220 = vrot.lane.b32.xlu0 %v856, 15
    %v1221 = vpop.permute.xlu0 %1220
    %v1222 = vsel %vm229, %v1215, %v1219
    %v1223 = vsel %vm229, %v1217, %v1221
    %v1224 = vsel %vm229, %v1219, %v1215
    %v1225 = vsel %vm229, %v1221, %v1217
    %v1226 = vld [vmem:[%s232] sm:$0x3]
    %v1228 = vperm.slane %v1226, 0
    %v1229 = vperm.slane %v1226, 1
    %v1232 = vmul.f32 %v1224, %v1228
    %v1233 = vmul.f32 %v1222, %v1229
    %v1234 = vmul.f32 %v1225, %v1228
    %v1235 = vmul.f32 %v1223, %v1229
    %s1236 = scalar_lea.vmem %s4, 64
    %v1237 = vld [vmem:[%s1236] sm:$0xf]
    %1239 = vset.pattern.permute.xlu0 0
    %1240 = vperm.xlu0 %1239, %v1237
    %v1241 = vpop.permute.xlu0 %1240
    %v1243 = vperm.slane %v1232, 0
    %v1244 = vperm.slane %v1233, 0
    %v1245 = vmul.f32 %v1241, %v1243
    %v1246 = vmul.f32 %v1241, %v1244
    %v1247 = vadd.f32 %v1206, %v1245
    %v1248 = vadd.f32 %v1207, %v1246
    %v1249 = vperm.slane %v1234, 0
    %v1250 = vperm.slane %v1235, 0
    %v1251 = vmul.f32 %v1241, %v1249
    %v1252 = vmul.f32 %v1241, %v1250
    %v1253 = vadd.f32 %v1212, %v1251
    %v1254 = vadd.f32 %v1213, %v1252
    %s1255 = scalar_lea.vmem %s4, 68
    %v1256 = vld [vmem:[%s1255] sm:$0xf]
    %1258 = vset.pattern.permute.xlu0 0
    %1259 = vperm.xlu0 %1258, %v1256
    %v1260 = vpop.permute.xlu0 %1259
    %v1262 = vperm.slane %v1232, 1
    %v1263 = vperm.slane %v1233, 1
    %v1264 = vmul.f32 %v1260, %v1262
    %v1265 = vmul.f32 %v1260, %v1263
    %v1266 = vadd.f32 %v1247, %v1264
    %v1267 = vadd.f32 %v1248, %v1265
    %v1268 = vperm.slane %v1234, 1
    %v1269 = vperm.slane %v1235, 1
    %v1270 = vmul.f32 %v1260, %v1268
    %v1271 = vmul.f32 %v1260, %v1269
    %v1272 = vadd.f32 %v1253, %v1270
    %v1273 = vadd.f32 %v1254, %v1271
    %s1274 = scalar_lea.vmem %s4, 72
    %v1275 = vld [vmem:[%s1274] sm:$0xf]
    %1277 = vset.pattern.permute.xlu0 0
    %1278 = vperm.xlu0 %1277, %v1275
    %v1279 = vpop.permute.xlu0 %1278
    %v1281 = vperm.slane %v1232, 2
    %v1282 = vperm.slane %v1233, 2
    %v1283 = vmul.f32 %v1279, %v1281
    %v1284 = vmul.f32 %v1279, %v1282
    %v1285 = vadd.f32 %v1266, %v1283
    %v1286 = vadd.f32 %v1267, %v1284
    %v1287 = vperm.slane %v1234, 2
    %v1288 = vperm.slane %v1235, 2
    %v1289 = vmul.f32 %v1279, %v1287
    %v1290 = vmul.f32 %v1279, %v1288
    %v1291 = vadd.f32 %v1272, %v1289
    %v1292 = vadd.f32 %v1273, %v1290
    %s1293 = scalar_lea.vmem %s4, 76
    %v1294 = vld [vmem:[%s1293] sm:$0xf]
    %1296 = vset.pattern.permute.xlu0 0
    %1297 = vperm.xlu0 %1296, %v1294
    %v1298 = vpop.permute.xlu0 %1297
    %v1300 = vperm.slane %v1232, 3
    %v1301 = vperm.slane %v1233, 3
    %v1302 = vmul.f32 %v1298, %v1300
    %v1303 = vmul.f32 %v1298, %v1301
    %v1304 = vadd.f32 %v1285, %v1302
    %v1305 = vadd.f32 %v1286, %v1303
    %v1306 = vperm.slane %v1234, 3
    %v1307 = vperm.slane %v1235, 3
    %v1308 = vmul.f32 %v1298, %v1306
    %v1309 = vmul.f32 %v1298, %v1307
    %v1310 = vadd.f32 %v1291, %v1308
    %v1311 = vadd.f32 %v1292, %v1309
    %s1312 = scalar_lea.vmem %s4, 80
    %v1313 = vld [vmem:[%s1312] sm:$0xf]
    %1315 = vset.pattern.permute.xlu0 0
    %1316 = vperm.xlu0 %1315, %v1313
    %v1317 = vpop.permute.xlu0 %1316
    %v1319 = vperm.slane %v1232, 4
    %v1320 = vperm.slane %v1233, 4
    %v1321 = vmul.f32 %v1317, %v1319
    %v1322 = vmul.f32 %v1317, %v1320
    %v1323 = vadd.f32 %v1304, %v1321
    %v1324 = vadd.f32 %v1305, %v1322
    %v1325 = vperm.slane %v1234, 4
    %v1326 = vperm.slane %v1235, 4
    %v1327 = vmul.f32 %v1317, %v1325
    %v1328 = vmul.f32 %v1317, %v1326
    %v1329 = vadd.f32 %v1310, %v1327
    %v1330 = vadd.f32 %v1311, %v1328
    %s1331 = scalar_lea.vmem %s4, 84
    %v1332 = vld [vmem:[%s1331] sm:$0xf]
    %1334 = vset.pattern.permute.xlu0 0
    %1335 = vperm.xlu0 %1334, %v1332
    %v1336 = vpop.permute.xlu0 %1335
    %v1338 = vperm.slane %v1232, 5
    %v1339 = vperm.slane %v1233, 5
    %v1340 = vmul.f32 %v1336, %v1338
    %v1341 = vmul.f32 %v1336, %v1339
    %v1342 = vadd.f32 %v1323, %v1340
    %v1343 = vadd.f32 %v1324, %v1341
    %v1344 = vperm.slane %v1234, 5
    %v1345 = vperm.slane %v1235, 5
    %v1346 = vmul.f32 %v1336, %v1344
    %v1347 = vmul.f32 %v1336, %v1345
    %v1348 = vadd.f32 %v1329, %v1346
    %v1349 = vadd.f32 %v1330, %v1347
    %s1350 = scalar_lea.vmem %s4, 88
    %v1351 = vld [vmem:[%s1350] sm:$0xf]
    %1353 = vset.pattern.permute.xlu0 0
    %1354 = vperm.xlu0 %1353, %v1351
    %v1355 = vpop.permute.xlu0 %1354
    %v1357 = vperm.slane %v1232, 6
    %v1358 = vperm.slane %v1233, 6
    %v1359 = vmul.f32 %v1355, %v1357
    %v1360 = vmul.f32 %v1355, %v1358
    %v1361 = vadd.f32 %v1342, %v1359
    %v1362 = vadd.f32 %v1343, %v1360
    %v1363 = vperm.slane %v1234, 6
    %v1364 = vperm.slane %v1235, 6
    %v1365 = vmul.f32 %v1355, %v1363
    %v1366 = vmul.f32 %v1355, %v1364
    %v1367 = vadd.f32 %v1348, %v1365
    %v1368 = vadd.f32 %v1349, %v1366
    %s1369 = scalar_lea.vmem %s4, 92
    %v1370 = vld [vmem:[%s1369] sm:$0xf]
    %1372 = vset.pattern.permute.xlu0 0
    %1373 = vperm.xlu0 %1372, %v1370
    %v1374 = vpop.permute.xlu0 %1373
    %v1376 = vperm.slane %v1232, 7
    %v1377 = vperm.slane %v1233, 7
    %v1378 = vmul.f32 %v1374, %v1376
    %v1379 = vmul.f32 %v1374, %v1377
    %v1380 = vadd.f32 %v1361, %v1378
    %v1381 = vadd.f32 %v1362, %v1379
    %v1382 = vperm.slane %v1234, 7
    %v1383 = vperm.slane %v1235, 7
    %v1384 = vmul.f32 %v1374, %v1382
    %v1385 = vmul.f32 %v1374, %v1383
    %v1386 = vadd.f32 %v1367, %v1384
    %v1387 = vadd.f32 %v1368, %v1385
    %1388 = vrot.lane.b32.xlu0 %v853, 1
    %v1389 = vpop.permute.xlu0 %1388
    %1390 = vrot.lane.b32.xlu0 %v855, 1
    %v1391 = vpop.permute.xlu0 %1390
    %1392 = vrot.lane.b32.xlu0 %v854, 1
    %v1393 = vpop.permute.xlu0 %1392
    %1394 = vrot.lane.b32.xlu0 %v856, 1
    %v1395 = vpop.permute.xlu0 %1394
    %v1396 = vsel %vm321, %v1389, %v1393
    %v1397 = vsel %vm321, %v1391, %v1395
    %v1398 = vsel %vm321, %v1393, %v1389
    %v1399 = vsel %vm321, %v1395, %v1391
    %v1400 = vld [vmem:[%s324] sm:$0x3]
    %v1402 = vperm.slane %v1400, 0
    %v1403 = vperm.slane %v1400, 1
    %v1406 = vmul.f32 %v1398, %v1402
    %v1407 = vmul.f32 %v1396, %v1403
    %v1408 = vmul.f32 %v1399, %v1402
    %v1409 = vmul.f32 %v1397, %v1403
    %s1410 = scalar_lea.vmem %s4, 96
    %v1411 = vld [vmem:[%s1410] sm:$0xf]
    %1413 = vset.pattern.permute.xlu0 0
    %1414 = vperm.xlu0 %1413, %v1411
    %v1415 = vpop.permute.xlu0 %1414
    %v1417 = vperm.slane %v1406, 0
    %v1418 = vperm.slane %v1407, 0
    %v1419 = vmul.f32 %v1415, %v1417
    %v1420 = vmul.f32 %v1415, %v1418
    %v1421 = vadd.f32 %v1380, %v1419
    %v1422 = vadd.f32 %v1381, %v1420
    %v1423 = vperm.slane %v1408, 0
    %v1424 = vperm.slane %v1409, 0
    %v1425 = vmul.f32 %v1415, %v1423
    %v1426 = vmul.f32 %v1415, %v1424
    %v1427 = vadd.f32 %v1386, %v1425
    %v1428 = vadd.f32 %v1387, %v1426
    %s1429 = scalar_lea.vmem %s4, 100
    %v1430 = vld [vmem:[%s1429] sm:$0xf]
    %1432 = vset.pattern.permute.xlu0 0
    %1433 = vperm.xlu0 %1432, %v1430
    %v1434 = vpop.permute.xlu0 %1433
    %v1436 = vperm.slane %v1406, 1
    %v1437 = vperm.slane %v1407, 1
    %v1438 = vmul.f32 %v1434, %v1436
    %v1439 = vmul.f32 %v1434, %v1437
    %v1440 = vadd.f32 %v1421, %v1438
    %v1441 = vadd.f32 %v1422, %v1439
    %v1442 = vperm.slane %v1408, 1
    %v1443 = vperm.slane %v1409, 1
    %v1444 = vmul.f32 %v1434, %v1442
    %v1445 = vmul.f32 %v1434, %v1443
    %v1446 = vadd.f32 %v1427, %v1444
    %v1447 = vadd.f32 %v1428, %v1445
    %s1448 = scalar_lea.vmem %s4, 104
    %v1449 = vld [vmem:[%s1448] sm:$0xf]
    %1451 = vset.pattern.permute.xlu0 0
    %1452 = vperm.xlu0 %1451, %v1449
    %v1453 = vpop.permute.xlu0 %1452
    %v1455 = vperm.slane %v1406, 2
    %v1456 = vperm.slane %v1407, 2
    %v1457 = vmul.f32 %v1453, %v1455
    %v1458 = vmul.f32 %v1453, %v1456
    %v1459 = vadd.f32 %v1440, %v1457
    %v1460 = vadd.f32 %v1441, %v1458
    %v1461 = vperm.slane %v1408, 2
    %v1462 = vperm.slane %v1409, 2
    %v1463 = vmul.f32 %v1453, %v1461
    %v1464 = vmul.f32 %v1453, %v1462
    %v1465 = vadd.f32 %v1446, %v1463
    %v1466 = vadd.f32 %v1447, %v1464
    %s1467 = scalar_lea.vmem %s4, 108
    %v1468 = vld [vmem:[%s1467] sm:$0xf]
    %1470 = vset.pattern.permute.xlu0 0
    %1471 = vperm.xlu0 %1470, %v1468
    %v1472 = vpop.permute.xlu0 %1471
    %v1474 = vperm.slane %v1406, 3
    %v1475 = vperm.slane %v1407, 3
    %v1476 = vmul.f32 %v1472, %v1474
    %v1477 = vmul.f32 %v1472, %v1475
    %v1478 = vadd.f32 %v1459, %v1476
    %v1479 = vadd.f32 %v1460, %v1477
    %v1480 = vperm.slane %v1408, 3
    %v1481 = vperm.slane %v1409, 3
    %v1482 = vmul.f32 %v1472, %v1480
    %v1483 = vmul.f32 %v1472, %v1481
    %v1484 = vadd.f32 %v1465, %v1482
    %v1485 = vadd.f32 %v1466, %v1483
    %s1486 = scalar_lea.vmem %s4, 112
    %v1487 = vld [vmem:[%s1486] sm:$0xf]
    %1489 = vset.pattern.permute.xlu0 0
    %1490 = vperm.xlu0 %1489, %v1487
    %v1491 = vpop.permute.xlu0 %1490
    %v1493 = vperm.slane %v1406, 4
    %v1494 = vperm.slane %v1407, 4
    %v1495 = vmul.f32 %v1491, %v1493
    %v1496 = vmul.f32 %v1491, %v1494
    %v1497 = vadd.f32 %v1478, %v1495
    %v1498 = vadd.f32 %v1479, %v1496
    %v1499 = vperm.slane %v1408, 4
    %v1500 = vperm.slane %v1409, 4
    %v1501 = vmul.f32 %v1491, %v1499
    %v1502 = vmul.f32 %v1491, %v1500
    %v1503 = vadd.f32 %v1484, %v1501
    %v1504 = vadd.f32 %v1485, %v1502
    %s1505 = scalar_lea.vmem %s4, 116
    %v1506 = vld [vmem:[%s1505] sm:$0xf]
    %1508 = vset.pattern.permute.xlu0 0
    %1509 = vperm.xlu0 %1508, %v1506
    %v1510 = vpop.permute.xlu0 %1509
    %v1512 = vperm.slane %v1406, 5
    %v1513 = vperm.slane %v1407, 5
    %v1514 = vmul.f32 %v1510, %v1512
    %v1515 = vmul.f32 %v1510, %v1513
    %v1516 = vadd.f32 %v1497, %v1514
    %v1517 = vadd.f32 %v1498, %v1515
    %v1518 = vperm.slane %v1408, 5
    %v1519 = vperm.slane %v1409, 5
    %v1520 = vmul.f32 %v1510, %v1518
    %v1521 = vmul.f32 %v1510, %v1519
    %v1522 = vadd.f32 %v1503, %v1520
    %v1523 = vadd.f32 %v1504, %v1521
    %s1524 = scalar_lea.vmem %s4, 120
    %v1525 = vld [vmem:[%s1524] sm:$0xf]
    %1527 = vset.pattern.permute.xlu0 0
    %1528 = vperm.xlu0 %1527, %v1525
    %v1529 = vpop.permute.xlu0 %1528
    %v1531 = vperm.slane %v1406, 6
    %v1532 = vperm.slane %v1407, 6
    %v1533 = vmul.f32 %v1529, %v1531
    %v1534 = vmul.f32 %v1529, %v1532
    %v1535 = vadd.f32 %v1516, %v1533
    %v1536 = vadd.f32 %v1517, %v1534
    %v1537 = vperm.slane %v1408, 6
    %v1538 = vperm.slane %v1409, 6
    %v1539 = vmul.f32 %v1529, %v1537
    %v1540 = vmul.f32 %v1529, %v1538
    %v1541 = vadd.f32 %v1522, %v1539
    %v1542 = vadd.f32 %v1523, %v1540
    %s1543 = scalar_lea.vmem %s4, 124
    %v1544 = vld [vmem:[%s1543] sm:$0xf]
    %1546 = vset.pattern.permute.xlu0 0
    %1547 = vperm.xlu0 %1546, %v1544
    %v1548 = vpop.permute.xlu0 %1547
    %v1550 = vperm.slane %v1406, 7
    %v1551 = vperm.slane %v1407, 7
    %v1552 = vmul.f32 %v1548, %v1550
    %v1553 = vmul.f32 %v1548, %v1551
    %v1554 = vadd.f32 %v1535, %v1552
    %v1555 = vadd.f32 %v1536, %v1553
    %v1556 = vperm.slane %v1408, 7
    %v1557 = vperm.slane %v1409, 7
    %v1558 = vmul.f32 %v1548, %v1556
    %v1559 = vmul.f32 %v1548, %v1557
    %v1560 = vadd.f32 %v1541, %v1558
    %v1561 = vadd.f32 %v1542, %v1559
    %s1562 = scalar_lea.vmem %s4, 128
    %v1563 = vld [vmem:[%s1562] sm:$0xf]
    %1565 = vset.pattern.permute.xlu0 0
    %1566 = vperm.xlu0 %1565, %v1563
    %v1567 = vpop.permute.xlu0 %1566
    %v1569 = vperm.slane %v853, 0
    %v1570 = vperm.slane %v854, 0
    %v1571 = vmul.f32 %v1567, %v1569
    %v1572 = vmul.f32 %v1567, %v1570
    %v1573 = vadd.f32 %v1554, %v1571
    %v1574 = vadd.f32 %v1555, %v1572
    %v1575 = vperm.slane %v855, 0
    %v1576 = vperm.slane %v856, 0
    %v1577 = vmul.f32 %v1567, %v1575
    %v1578 = vmul.f32 %v1567, %v1576
    %v1579 = vadd.f32 %v1560, %v1577
    %v1580 = vadd.f32 %v1561, %v1578
    %s1581 = scalar_lea.vmem %s4, 132
    %v1582 = vld [vmem:[%s1581] sm:$0xf]
    %1584 = vset.pattern.permute.xlu0 0
    %1585 = vperm.xlu0 %1584, %v1582
    %v1586 = vpop.permute.xlu0 %1585
    %v1588 = vperm.slane %v853, 1
    %v1589 = vperm.slane %v854, 1
    %v1590 = vmul.f32 %v1586, %v1588
    %v1591 = vmul.f32 %v1586, %v1589
    %v1592 = vadd.f32 %v1573, %v1590
    %v1593 = vadd.f32 %v1574, %v1591
    %v1594 = vperm.slane %v855, 1
    %v1595 = vperm.slane %v856, 1
    %v1596 = vmul.f32 %v1586, %v1594
    %v1597 = vmul.f32 %v1586, %v1595
    %v1598 = vadd.f32 %v1579, %v1596
    %v1599 = vadd.f32 %v1580, %v1597
    %s1600 = scalar_lea.vmem %s4, 136
    %v1601 = vld [vmem:[%s1600] sm:$0xf]
    %1603 = vset.pattern.permute.xlu0 0
    %1604 = vperm.xlu0 %1603, %v1601
    %v1605 = vpop.permute.xlu0 %1604
    %v1607 = vperm.slane %v853, 2
    %v1608 = vperm.slane %v854, 2
    %v1609 = vmul.f32 %v1605, %v1607
    %v1610 = vmul.f32 %v1605, %v1608
    %v1611 = vadd.f32 %v1592, %v1609
    %v1612 = vadd.f32 %v1593, %v1610
    %v1613 = vperm.slane %v855, 2
    %v1614 = vperm.slane %v856, 2
    %v1615 = vmul.f32 %v1605, %v1613
    %v1616 = vmul.f32 %v1605, %v1614
    %v1617 = vadd.f32 %v1598, %v1615
    %v1618 = vadd.f32 %v1599, %v1616
    %s1619 = scalar_lea.vmem %s4, 140
    %v1620 = vld [vmem:[%s1619] sm:$0xf]
    %1622 = vset.pattern.permute.xlu0 0
    %1623 = vperm.xlu0 %1622, %v1620
    %v1624 = vpop.permute.xlu0 %1623
    %v1626 = vperm.slane %v853, 3
    %v1627 = vperm.slane %v854, 3
    %v1628 = vmul.f32 %v1624, %v1626
    %v1629 = vmul.f32 %v1624, %v1627
    %v1630 = vadd.f32 %v1611, %v1628
    %v1631 = vadd.f32 %v1612, %v1629
    %v1632 = vperm.slane %v855, 3
    %v1633 = vperm.slane %v856, 3
    %v1634 = vmul.f32 %v1624, %v1632
    %v1635 = vmul.f32 %v1624, %v1633
    %v1636 = vadd.f32 %v1617, %v1634
    %v1637 = vadd.f32 %v1618, %v1635
    %s1638 = scalar_lea.vmem %s4, 144
    %v1639 = vld [vmem:[%s1638] sm:$0xf]
    %1641 = vset.pattern.permute.xlu0 0
    %1642 = vperm.xlu0 %1641, %v1639
    %v1643 = vpop.permute.xlu0 %1642
    %v1645 = vperm.slane %v853, 4
    %v1646 = vperm.slane %v854, 4
    %v1647 = vmul.f32 %v1643, %v1645
    %v1648 = vmul.f32 %v1643, %v1646
    %v1649 = vadd.f32 %v1630, %v1647
    %v1650 = vadd.f32 %v1631, %v1648
    %v1651 = vperm.slane %v855, 4
    %v1652 = vperm.slane %v856, 4
    %v1653 = vmul.f32 %v1643, %v1651
    %v1654 = vmul.f32 %v1643, %v1652
    %v1655 = vadd.f32 %v1636, %v1653
    %v1656 = vadd.f32 %v1637, %v1654
    %s1657 = scalar_lea.vmem %s4, 148
    %v1658 = vld [vmem:[%s1657] sm:$0xf]
    %1660 = vset.pattern.permute.xlu0 0
    %1661 = vperm.xlu0 %1660, %v1658
    %v1662 = vpop.permute.xlu0 %1661
    %v1664 = vperm.slane %v853, 5
    %v1665 = vperm.slane %v854, 5
    %v1666 = vmul.f32 %v1662, %v1664
    %v1667 = vmul.f32 %v1662, %v1665
    %v1668 = vadd.f32 %v1649, %v1666
    %v1669 = vadd.f32 %v1650, %v1667
    %v1670 = vperm.slane %v855, 5
    %v1671 = vperm.slane %v856, 5
    %v1672 = vmul.f32 %v1662, %v1670
    %v1673 = vmul.f32 %v1662, %v1671
    %v1674 = vadd.f32 %v1655, %v1672
    %v1675 = vadd.f32 %v1656, %v1673
    %s1676 = scalar_lea.vmem %s4, 152
    %v1677 = vld [vmem:[%s1676] sm:$0xf]
    %1679 = vset.pattern.permute.xlu0 0
    %1680 = vperm.xlu0 %1679, %v1677
    %v1681 = vpop.permute.xlu0 %1680
    %v1683 = vperm.slane %v853, 6
    %v1684 = vperm.slane %v854, 6
    %v1685 = vmul.f32 %v1681, %v1683
    %v1686 = vmul.f32 %v1681, %v1684
    %v1687 = vadd.f32 %v1668, %v1685
    %v1688 = vadd.f32 %v1669, %v1686
    %v1689 = vperm.slane %v855, 6
    %v1690 = vperm.slane %v856, 6
    %v1691 = vmul.f32 %v1681, %v1689
    %v1692 = vmul.f32 %v1681, %v1690
    %v1693 = vadd.f32 %v1674, %v1691
    %v1694 = vadd.f32 %v1675, %v1692
    %s1695 = scalar_lea.vmem %s4, 156
    %v1696 = vld [vmem:[%s1695] sm:$0xf]
    %1698 = vset.pattern.permute.xlu0 0
    %1699 = vperm.xlu0 %1698, %v1696
    %v1700 = vpop.permute.xlu0 %1699
    %v1702 = vperm.slane %v853, 7
    %v1703 = vperm.slane %v854, 7
    %v1704 = vmul.f32 %v1700, %v1702
    %v1705 = vmul.f32 %v1700, %v1703
    %v1706 = vadd.f32 %v1687, %v1704
    %v1707 = vadd.f32 %v1688, %v1705
    %v1708 = vperm.slane %v855, 7
    %v1709 = vperm.slane %v856, 7
    %v1710 = vmul.f32 %v1700, %v1708
    %v1711 = vmul.f32 %v1700, %v1709
    %v1712 = vadd.f32 %v1693, %v1710
    %v1713 = vadd.f32 %v1694, %v1711
    %1714 = vrot.lane.b32.xlu0 %v853, 127
    %v1715 = vpop.permute.xlu0 %1714
    %1716 = vrot.lane.b32.xlu0 %v855, 127
    %v1717 = vpop.permute.xlu0 %1716
    %1718 = vrot.lane.b32.xlu0 %v854, 127
    %v1719 = vpop.permute.xlu0 %1718
    %1720 = vrot.lane.b32.xlu0 %v856, 127
    %v1721 = vpop.permute.xlu0 %1720
    %v1722 = vsel %vm489, %v1715, %v1719
    %v1723 = vsel %vm489, %v1717, %v1721
    %v1724 = vsel %vm489, %v1719, %v1715
    %v1725 = vsel %vm489, %v1721, %v1717
    %v1726 = vld [vmem:[%s492] sm:$0x3]
    %v1728 = vperm.slane %v1726, 0
    %v1729 = vperm.slane %v1726, 1
    %v1732 = vmul.f32 %v1722, %v1728
    %v1733 = vmul.f32 %v1724, %v1729
    %v1734 = vmul.f32 %v1723, %v1728
    %v1735 = vmul.f32 %v1725, %v1729
    %s1736 = scalar_lea.vmem %s4, 160
    %v1737 = vld [vmem:[%s1736] sm:$0xf]
    %1739 = vset.pattern.permute.xlu0 0
    %1740 = vperm.xlu0 %1739, %v1737
    %v1741 = vpop.permute.xlu0 %1740
    %v1743 = vperm.slane %v1732, 0
    %v1744 = vperm.slane %v1733, 0
    %v1745 = vmul.f32 %v1741, %v1743
    %v1746 = vmul.f32 %v1741, %v1744
    %v1747 = vadd.f32 %v1706, %v1745
    %v1748 = vadd.f32 %v1707, %v1746
    %v1749 = vperm.slane %v1734, 0
    %v1750 = vperm.slane %v1735, 0
    %v1751 = vmul.f32 %v1741, %v1749
    %v1752 = vmul.f32 %v1741, %v1750
    %v1753 = vadd.f32 %v1712, %v1751
    %v1754 = vadd.f32 %v1713, %v1752
    %s1755 = scalar_lea.vmem %s4, 164
    %v1756 = vld [vmem:[%s1755] sm:$0xf]
    %1758 = vset.pattern.permute.xlu0 0
    %1759 = vperm.xlu0 %1758, %v1756
    %v1760 = vpop.permute.xlu0 %1759
    %v1762 = vperm.slane %v1732, 1
    %v1763 = vperm.slane %v1733, 1
    %v1764 = vmul.f32 %v1760, %v1762
    %v1765 = vmul.f32 %v1760, %v1763
    %v1766 = vadd.f32 %v1747, %v1764
    %v1767 = vadd.f32 %v1748, %v1765
    %v1768 = vperm.slane %v1734, 1
    %v1769 = vperm.slane %v1735, 1
    %v1770 = vmul.f32 %v1760, %v1768
    %v1771 = vmul.f32 %v1760, %v1769
    %v1772 = vadd.f32 %v1753, %v1770
    %v1773 = vadd.f32 %v1754, %v1771
    %s1774 = scalar_lea.vmem %s4, 168
    %v1775 = vld [vmem:[%s1774] sm:$0xf]
    %1777 = vset.pattern.permute.xlu0 0
    %1778 = vperm.xlu0 %1777, %v1775
    %v1779 = vpop.permute.xlu0 %1778
    %v1781 = vperm.slane %v1732, 2
    %v1782 = vperm.slane %v1733, 2
    %v1783 = vmul.f32 %v1779, %v1781
    %v1784 = vmul.f32 %v1779, %v1782
    %v1785 = vadd.f32 %v1766, %v1783
    %v1786 = vadd.f32 %v1767, %v1784
    %v1787 = vperm.slane %v1734, 2
    %v1788 = vperm.slane %v1735, 2
    %v1789 = vmul.f32 %v1779, %v1787
    %v1790 = vmul.f32 %v1779, %v1788
    %v1791 = vadd.f32 %v1772, %v1789
    %v1792 = vadd.f32 %v1773, %v1790
    %s1793 = scalar_lea.vmem %s4, 172
    %v1794 = vld [vmem:[%s1793] sm:$0xf]
    %1796 = vset.pattern.permute.xlu0 0
    %1797 = vperm.xlu0 %1796, %v1794
    %v1798 = vpop.permute.xlu0 %1797
    %v1800 = vperm.slane %v1732, 3
    %v1801 = vperm.slane %v1733, 3
    %v1802 = vmul.f32 %v1798, %v1800
    %v1803 = vmul.f32 %v1798, %v1801
    %v1804 = vadd.f32 %v1785, %v1802
    %v1805 = vadd.f32 %v1786, %v1803
    %v1806 = vperm.slane %v1734, 3
    %v1807 = vperm.slane %v1735, 3
    %v1808 = vmul.f32 %v1798, %v1806
    %v1809 = vmul.f32 %v1798, %v1807
    %v1810 = vadd.f32 %v1791, %v1808
    %v1811 = vadd.f32 %v1792, %v1809
    %s1812 = scalar_lea.vmem %s4, 176
    %v1813 = vld [vmem:[%s1812] sm:$0xf]
    %1815 = vset.pattern.permute.xlu0 0
    %1816 = vperm.xlu0 %1815, %v1813
    %v1817 = vpop.permute.xlu0 %1816
    %v1819 = vperm.slane %v1732, 4
    %v1820 = vperm.slane %v1733, 4
    %v1821 = vmul.f32 %v1817, %v1819
    %v1822 = vmul.f32 %v1817, %v1820
    %v1823 = vadd.f32 %v1804, %v1821
    %v1824 = vadd.f32 %v1805, %v1822
    %v1825 = vperm.slane %v1734, 4
    %v1826 = vperm.slane %v1735, 4
    %v1827 = vmul.f32 %v1817, %v1825
    %v1828 = vmul.f32 %v1817, %v1826
    %v1829 = vadd.f32 %v1810, %v1827
    %v1830 = vadd.f32 %v1811, %v1828
    %s1831 = scalar_lea.vmem %s4, 180
    %v1832 = vld [vmem:[%s1831] sm:$0xf]
    %1834 = vset.pattern.permute.xlu0 0
    %1835 = vperm.xlu0 %1834, %v1832
    %v1836 = vpop.permute.xlu0 %1835
    %v1838 = vperm.slane %v1732, 5
    %v1839 = vperm.slane %v1733, 5
    %v1840 = vmul.f32 %v1836, %v1838
    %v1841 = vmul.f32 %v1836, %v1839
    %v1842 = vadd.f32 %v1823, %v1840
    %v1843 = vadd.f32 %v1824, %v1841
    %v1844 = vperm.slane %v1734, 5
    %v1845 = vperm.slane %v1735, 5
    %v1846 = vmul.f32 %v1836, %v1844
    %v1847 = vmul.f32 %v1836, %v1845
    %v1848 = vadd.f32 %v1829, %v1846
    %v1849 = vadd.f32 %v1830, %v1847
    %s1850 = scalar_lea.vmem %s4, 184
    %v1851 = vld [vmem:[%s1850] sm:$0xf]
    %1853 = vset.pattern.permute.xlu0 0
    %1854 = vperm.xlu0 %1853, %v1851
    %v1855 = vpop.permute.xlu0 %1854
    %v1857 = vperm.slane %v1732, 6
    %v1858 = vperm.slane %v1733, 6
    %v1859 = vmul.f32 %v1855, %v1857
    %v1860 = vmul.f32 %v1855, %v1858
    %v1861 = vadd.f32 %v1842, %v1859
    %v1862 = vadd.f32 %v1843, %v1860
    %v1863 = vperm.slane %v1734, 6
    %v1864 = vperm.slane %v1735, 6
    %v1865 = vmul.f32 %v1855, %v1863
    %v1866 = vmul.f32 %v1855, %v1864
    %v1867 = vadd.f32 %v1848, %v1865
    %v1868 = vadd.f32 %v1849, %v1866
    %s1869 = scalar_lea.vmem %s4, 188
    %v1870 = vld [vmem:[%s1869] sm:$0xf]
    %1872 = vset.pattern.permute.xlu0 0
    %1873 = vperm.xlu0 %1872, %v1870
    %v1874 = vpop.permute.xlu0 %1873
    %v1876 = vperm.slane %v1732, 7
    %v1877 = vperm.slane %v1733, 7
    %v1878 = vmul.f32 %v1874, %v1876
    %v1879 = vmul.f32 %v1874, %v1877
    %v1880 = vadd.f32 %v1861, %v1878
    %v1881 = vadd.f32 %v1862, %v1879
    %v1882 = vperm.slane %v1734, 7
    %v1883 = vperm.slane %v1735, 7
    %v1884 = vmul.f32 %v1874, %v1882
    %v1885 = vmul.f32 %v1874, %v1883
    %v1886 = vadd.f32 %v1867, %v1884
    %v1887 = vadd.f32 %v1868, %v1885
    %1888 = vrot.lane.b32.xlu0 %v853, 113
    %v1889 = vpop.permute.xlu0 %1888
    %1890 = vrot.lane.b32.xlu0 %v855, 113
    %v1891 = vpop.permute.xlu0 %1890
    %1892 = vrot.lane.b32.xlu0 %v854, 113
    %v1893 = vpop.permute.xlu0 %1892
    %1894 = vrot.lane.b32.xlu0 %v856, 113
    %v1895 = vpop.permute.xlu0 %1894
    %v1896 = vsel %vm581, %v1889, %v1893
    %v1897 = vsel %vm581, %v1891, %v1895
    %v1898 = vsel %vm581, %v1893, %v1889
    %v1899 = vsel %vm581, %v1895, %v1891
    %v1900 = vld [vmem:[%s584] sm:$0x3]
    %v1902 = vperm.slane %v1900, 0
    %v1903 = vperm.slane %v1900, 1
    %v1906 = vmul.f32 %v1896, %v1902
    %v1907 = vmul.f32 %v1898, %v1903
    %v1908 = vmul.f32 %v1897, %v1902
    %v1909 = vmul.f32 %v1899, %v1903
    %s1910 = scalar_lea.vmem %s4, 192
    %v1911 = vld [vmem:[%s1910] sm:$0xf]
    %1913 = vset.pattern.permute.xlu0 0
    %1914 = vperm.xlu0 %1913, %v1911
    %v1915 = vpop.permute.xlu0 %1914
    %v1917 = vperm.slane %v1906, 0
    %v1918 = vperm.slane %v1907, 0
    %v1919 = vmul.f32 %v1915, %v1917
    %v1920 = vmul.f32 %v1915, %v1918
    %v1921 = vadd.f32 %v1880, %v1919
    %v1922 = vadd.f32 %v1881, %v1920
    %v1923 = vperm.slane %v1908, 0
    %v1924 = vperm.slane %v1909, 0
    %v1925 = vmul.f32 %v1915, %v1923
    %v1926 = vmul.f32 %v1915, %v1924
    %v1927 = vadd.f32 %v1886, %v1925
    %v1928 = vadd.f32 %v1887, %v1926
    %s1929 = scalar_lea.vmem %s4, 196
    %v1930 = vld [vmem:[%s1929] sm:$0xf]
    %1932 = vset.pattern.permute.xlu0 0
    %1933 = vperm.xlu0 %1932, %v1930
    %v1934 = vpop.permute.xlu0 %1933
    %v1936 = vperm.slane %v1906, 1
    %v1937 = vperm.slane %v1907, 1
    %v1938 = vmul.f32 %v1934, %v1936
    %v1939 = vmul.f32 %v1934, %v1937
    %v1940 = vadd.f32 %v1921, %v1938
    %v1941 = vadd.f32 %v1922, %v1939
    %v1942 = vperm.slane %v1908, 1
    %v1943 = vperm.slane %v1909, 1
    %v1944 = vmul.f32 %v1934, %v1942
    %v1945 = vmul.f32 %v1934, %v1943
    %v1946 = vadd.f32 %v1927, %v1944
    %v1947 = vadd.f32 %v1928, %v1945
    %s1948 = scalar_lea.vmem %s4, 200
    %v1949 = vld [vmem:[%s1948] sm:$0xf]
    %1951 = vset.pattern.permute.xlu0 0
    %1952 = vperm.xlu0 %1951, %v1949
    %v1953 = vpop.permute.xlu0 %1952
    %v1955 = vperm.slane %v1906, 2
    %v1956 = vperm.slane %v1907, 2
    %v1957 = vmul.f32 %v1953, %v1955
    %v1958 = vmul.f32 %v1953, %v1956
    %v1959 = vadd.f32 %v1940, %v1957
    %v1960 = vadd.f32 %v1941, %v1958
    %v1961 = vperm.slane %v1908, 2
    %v1962 = vperm.slane %v1909, 2
    %v1963 = vmul.f32 %v1953, %v1961
    %v1964 = vmul.f32 %v1953, %v1962
    %v1965 = vadd.f32 %v1946, %v1963
    %v1966 = vadd.f32 %v1947, %v1964
    %s1967 = scalar_lea.vmem %s4, 204
    %v1968 = vld [vmem:[%s1967] sm:$0xf]
    %1970 = vset.pattern.permute.xlu0 0
    %1971 = vperm.xlu0 %1970, %v1968
    %v1972 = vpop.permute.xlu0 %1971
    %v1974 = vperm.slane %v1906, 3
    %v1975 = vperm.slane %v1907, 3
    %v1976 = vmul.f32 %v1972, %v1974
    %v1977 = vmul.f32 %v1972, %v1975
    %v1978 = vadd.f32 %v1959, %v1976
    %v1979 = vadd.f32 %v1960, %v1977
    %v1980 = vperm.slane %v1908, 3
    %v1981 = vperm.slane %v1909, 3
    %v1982 = vmul.f32 %v1972, %v1980
    %v1983 = vmul.f32 %v1972, %v1981
    %v1984 = vadd.f32 %v1965, %v1982
    %v1985 = vadd.f32 %v1966, %v1983
    %s1986 = scalar_lea.vmem %s4, 208
    %v1987 = vld [vmem:[%s1986] sm:$0xf]
    %1989 = vset.pattern.permute.xlu0 0
    %1990 = vperm.xlu0 %1989, %v1987
    %v1991 = vpop.permute.xlu0 %1990
    %v1993 = vperm.slane %v1906, 4
    %v1994 = vperm.slane %v1907, 4
    %v1995 = vmul.f32 %v1991, %v1993
    %v1996 = vmul.f32 %v1991, %v1994
    %v1997 = vadd.f32 %v1978, %v1995
    %v1998 = vadd.f32 %v1979, %v1996
    %v1999 = vperm.slane %v1908, 4
    %v2000 = vperm.slane %v1909, 4
    %v2001 = vmul.f32 %v1991, %v1999
    %v2002 = vmul.f32 %v1991, %v2000
    %v2003 = vadd.f32 %v1984, %v2001
    %v2004 = vadd.f32 %v1985, %v2002
    %s2005 = scalar_lea.vmem %s4, 212
    %v2006 = vld [vmem:[%s2005] sm:$0xf]
    %2008 = vset.pattern.permute.xlu0 0
    %2009 = vperm.xlu0 %2008, %v2006
    %v2010 = vpop.permute.xlu0 %2009
    %v2012 = vperm.slane %v1906, 5
    %v2013 = vperm.slane %v1907, 5
    %v2014 = vmul.f32 %v2010, %v2012
    %v2015 = vmul.f32 %v2010, %v2013
    %v2016 = vadd.f32 %v1997, %v2014
    %v2017 = vadd.f32 %v1998, %v2015
    %v2018 = vperm.slane %v1908, 5
    %v2019 = vperm.slane %v1909, 5
    %v2020 = vmul.f32 %v2010, %v2018
    %v2021 = vmul.f32 %v2010, %v2019
    %v2022 = vadd.f32 %v2003, %v2020
    %v2023 = vadd.f32 %v2004, %v2021
    %s2024 = scalar_lea.vmem %s4, 216
    %v2025 = vld [vmem:[%s2024] sm:$0xf]
    %2027 = vset.pattern.permute.xlu0 0
    %2028 = vperm.xlu0 %2027, %v2025
    %v2029 = vpop.permute.xlu0 %2028
    %v2031 = vperm.slane %v1906, 6
    %v2032 = vperm.slane %v1907, 6
    %v2033 = vmul.f32 %v2029, %v2031
    %v2034 = vmul.f32 %v2029, %v2032
    %v2035 = vadd.f32 %v2016, %v2033
    %v2036 = vadd.f32 %v2017, %v2034
    %v2037 = vperm.slane %v1908, 6
    %v2038 = vperm.slane %v1909, 6
    %v2039 = vmul.f32 %v2029, %v2037
    %v2040 = vmul.f32 %v2029, %v2038
    %v2041 = vadd.f32 %v2022, %v2039
    %v2042 = vadd.f32 %v2023, %v2040
    %s2043 = scalar_lea.vmem %s4, 220
    %v2044 = vld [vmem:[%s2043] sm:$0xf]
    %2046 = vset.pattern.permute.xlu0 0
    %2047 = vperm.xlu0 %2046, %v2044
    %v2048 = vpop.permute.xlu0 %2047
    %v2050 = vperm.slane %v1906, 7
    %v2051 = vperm.slane %v1907, 7
    %v2052 = vmul.f32 %v2048, %v2050
    %v2053 = vmul.f32 %v2048, %v2051
    %v2054 = vadd.f32 %v2035, %v2052
    %v2055 = vadd.f32 %v2036, %v2053
    %v2056 = vperm.slane %v1908, 7
    %v2057 = vperm.slane %v1909, 7
    %v2058 = vmul.f32 %v2048, %v2056
    %v2059 = vmul.f32 %v2048, %v2057
    %v2060 = vadd.f32 %v2041, %v2058
    %v2061 = vadd.f32 %v2042, %v2059
    %2062 = vrot.lane.b32.xlu0 %v853, 112
    %v2063 = vpop.permute.xlu0 %2062
    %2064 = vrot.lane.b32.xlu0 %v855, 112
    %v2065 = vpop.permute.xlu0 %2064
    %2066 = vrot.lane.b32.xlu0 %v854, 112
    %v2067 = vpop.permute.xlu0 %2066
    %2068 = vrot.lane.b32.xlu0 %v856, 112
    %v2069 = vpop.permute.xlu0 %2068
    %v2070 = vsel %vm673, %v2063, %v2067
    %v2071 = vsel %vm673, %v2065, %v2069
    %v2072 = vsel %vm673, %v2067, %v2063
    %v2073 = vsel %vm673, %v2069, %v2065
    %v2074 = vld [vmem:[%s676] sm:$0x3]
    %v2076 = vperm.slane %v2074, 0
    %v2077 = vperm.slane %v2074, 1
    %v2080 = vmul.f32 %v2070, %v2076
    %v2081 = vmul.f32 %v2072, %v2077
    %v2082 = vmul.f32 %v2071, %v2076
    %v2083 = vmul.f32 %v2073, %v2077
    %s2084 = scalar_lea.vmem %s4, 224
    %v2085 = vld [vmem:[%s2084] sm:$0xf]
    %2087 = vset.pattern.permute.xlu0 0
    %2088 = vperm.xlu0 %2087, %v2085
    %v2089 = vpop.permute.xlu0 %2088
    %v2091 = vperm.slane %v2080, 0
    %v2092 = vperm.slane %v2081, 0
    %v2093 = vmul.f32 %v2089, %v2091
    %v2094 = vmul.f32 %v2089, %v2092
    %v2095 = vadd.f32 %v2054, %v2093
    %v2096 = vadd.f32 %v2055, %v2094
    %v2097 = vperm.slane %v2082, 0
    %v2098 = vperm.slane %v2083, 0
    %v2099 = vmul.f32 %v2089, %v2097
    %v2100 = vmul.f32 %v2089, %v2098
    %v2101 = vadd.f32 %v2060, %v2099
    %v2102 = vadd.f32 %v2061, %v2100
    %s2103 = scalar_lea.vmem %s4, 228
    %v2104 = vld [vmem:[%s2103] sm:$0xf]
    %2106 = vset.pattern.permute.xlu0 0
    %2107 = vperm.xlu0 %2106, %v2104
    %v2108 = vpop.permute.xlu0 %2107
    %v2110 = vperm.slane %v2080, 1
    %v2111 = vperm.slane %v2081, 1
    %v2112 = vmul.f32 %v2108, %v2110
    %v2113 = vmul.f32 %v2108, %v2111
    %v2114 = vadd.f32 %v2095, %v2112
    %v2115 = vadd.f32 %v2096, %v2113
    %v2116 = vperm.slane %v2082, 1
    %v2117 = vperm.slane %v2083, 1
    %v2118 = vmul.f32 %v2108, %v2116
    %v2119 = vmul.f32 %v2108, %v2117
    %v2120 = vadd.f32 %v2101, %v2118
    %v2121 = vadd.f32 %v2102, %v2119
    %s2122 = scalar_lea.vmem %s4, 232
    %v2123 = vld [vmem:[%s2122] sm:$0xf]
    %2125 = vset.pattern.permute.xlu0 0
    %2126 = vperm.xlu0 %2125, %v2123
    %v2127 = vpop.permute.xlu0 %2126
    %v2129 = vperm.slane %v2080, 2
    %v2130 = vperm.slane %v2081, 2
    %v2131 = vmul.f32 %v2127, %v2129
    %v2132 = vmul.f32 %v2127, %v2130
    %v2133 = vadd.f32 %v2114, %v2131
    %v2134 = vadd.f32 %v2115, %v2132
    %v2135 = vperm.slane %v2082, 2
    %v2136 = vperm.slane %v2083, 2
    %v2137 = vmul.f32 %v2127, %v2135
    %v2138 = vmul.f32 %v2127, %v2136
    %v2139 = vadd.f32 %v2120, %v2137
    %v2140 = vadd.f32 %v2121, %v2138
    %s2141 = scalar_lea.vmem %s4, 236
    %v2142 = vld [vmem:[%s2141] sm:$0xf]
    %2144 = vset.pattern.permute.xlu0 0
    %2145 = vperm.xlu0 %2144, %v2142
    %v2146 = vpop.permute.xlu0 %2145
    %v2148 = vperm.slane %v2080, 3
    %v2149 = vperm.slane %v2081, 3
    %v2150 = vmul.f32 %v2146, %v2148
    %v2151 = vmul.f32 %v2146, %v2149
    %v2152 = vadd.f32 %v2133, %v2150
    %v2153 = vadd.f32 %v2134, %v2151
    %v2154 = vperm.slane %v2082, 3
    %v2155 = vperm.slane %v2083, 3
    %v2156 = vmul.f32 %v2146, %v2154
    %v2157 = vmul.f32 %v2146, %v2155
    %v2158 = vadd.f32 %v2139, %v2156
    %v2159 = vadd.f32 %v2140, %v2157
    %s2160 = scalar_lea.vmem %s4, 240
    %v2161 = vld [vmem:[%s2160] sm:$0xf]
    %2163 = vset.pattern.permute.xlu0 0
    %2164 = vperm.xlu0 %2163, %v2161
    %v2165 = vpop.permute.xlu0 %2164
    %v2167 = vperm.slane %v2080, 4
    %v2168 = vperm.slane %v2081, 4
    %v2169 = vmul.f32 %v2165, %v2167
    %v2170 = vmul.f32 %v2165, %v2168
    %v2171 = vadd.f32 %v2152, %v2169
    %v2172 = vadd.f32 %v2153, %v2170
    %v2173 = vperm.slane %v2082, 4
    %v2174 = vperm.slane %v2083, 4
    %v2175 = vmul.f32 %v2165, %v2173
    %v2176 = vmul.f32 %v2165, %v2174
    %v2177 = vadd.f32 %v2158, %v2175
    %v2178 = vadd.f32 %v2159, %v2176
    %s2179 = scalar_lea.vmem %s4, 244
    %v2180 = vld [vmem:[%s2179] sm:$0xf]
    %2182 = vset.pattern.permute.xlu0 0
    %2183 = vperm.xlu0 %2182, %v2180
    %v2184 = vpop.permute.xlu0 %2183
    %v2186 = vperm.slane %v2080, 5
    %v2187 = vperm.slane %v2081, 5
    %v2188 = vmul.f32 %v2184, %v2186
    %v2189 = vmul.f32 %v2184, %v2187
    %v2190 = vadd.f32 %v2171, %v2188
    %v2191 = vadd.f32 %v2172, %v2189
    %v2192 = vperm.slane %v2082, 5
    %v2193 = vperm.slane %v2083, 5
    %v2194 = vmul.f32 %v2184, %v2192
    %v2195 = vmul.f32 %v2184, %v2193
    %v2196 = vadd.f32 %v2177, %v2194
    %v2197 = vadd.f32 %v2178, %v2195
    %s2198 = scalar_lea.vmem %s4, 248
    %v2199 = vld [vmem:[%s2198] sm:$0xf]
    %2201 = vset.pattern.permute.xlu0 0
    %2202 = vperm.xlu0 %2201, %v2199
    %v2203 = vpop.permute.xlu0 %2202
    %v2205 = vperm.slane %v2080, 6
    %v2206 = vperm.slane %v2081, 6
    %v2207 = vmul.f32 %v2203, %v2205
    %v2208 = vmul.f32 %v2203, %v2206
    %v2209 = vadd.f32 %v2190, %v2207
    %v2210 = vadd.f32 %v2191, %v2208
    %v2211 = vperm.slane %v2082, 6
    %v2212 = vperm.slane %v2083, 6
    %v2213 = vmul.f32 %v2203, %v2211
    %v2214 = vmul.f32 %v2203, %v2212
    %v2215 = vadd.f32 %v2196, %v2213
    %v2216 = vadd.f32 %v2197, %v2214
    %s2217 = scalar_lea.vmem %s4, 252
    %v2218 = vld [vmem:[%s2217] sm:$0xf]
    %2220 = vset.pattern.permute.xlu0 0
    %2221 = vperm.xlu0 %2220, %v2218
    %v2222 = vpop.permute.xlu0 %2221
    %v2224 = vperm.slane %v2080, 7
    %v2225 = vperm.slane %v2081, 7
    %v2226 = vmul.f32 %v2222, %v2224
    %v2227 = vmul.f32 %v2222, %v2225
    %v2228 = vadd.f32 %v2209, %v2226
    %v2229 = vadd.f32 %v2210, %v2227
    %v2230 = vperm.slane %v2082, 7
    %v2231 = vperm.slane %v2083, 7
    %v2232 = vmul.f32 %v2222, %v2230
    %v2233 = vmul.f32 %v2222, %v2231
    %v2234 = vadd.f32 %v2215, %v2232
    %v2235 = vadd.f32 %v2216, %v2233
    %2236 = vrot.lane.b32.xlu0 %v853, 111
    %v2237 = vpop.permute.xlu0 %2236
    %2238 = vrot.lane.b32.xlu0 %v855, 111
    %v2239 = vpop.permute.xlu0 %2238
    %2240 = vrot.lane.b32.xlu0 %v854, 111
    %v2241 = vpop.permute.xlu0 %2240
    %2242 = vrot.lane.b32.xlu0 %v856, 111
    %v2243 = vpop.permute.xlu0 %2242
    %v2244 = vsel %vm765, %v2237, %v2241
    %v2245 = vsel %vm765, %v2239, %v2243
    %v2246 = vsel %vm765, %v2241, %v2237
    %v2247 = vsel %vm765, %v2243, %v2239
    %v2248 = vld [vmem:[%s768] sm:$0x3]
    %v2250 = vperm.slane %v2248, 0
    %v2251 = vperm.slane %v2248, 1
    %v2254 = vmul.f32 %v2244, %v2250
    %v2255 = vmul.f32 %v2246, %v2251
    %v2256 = vmul.f32 %v2245, %v2250
    %v2257 = vmul.f32 %v2247, %v2251
    %s2258 = scalar_lea.vmem %s4, 256
    %v2259 = vld [vmem:[%s2258] sm:$0xf]
    %2261 = vset.pattern.permute.xlu0 0
    %2262 = vperm.xlu0 %2261, %v2259
    %v2263 = vpop.permute.xlu0 %2262
    %v2265 = vperm.slane %v2254, 0
    %v2266 = vperm.slane %v2255, 0
    %v2267 = vmul.f32 %v2263, %v2265
    %v2268 = vmul.f32 %v2263, %v2266
    %v2269 = vadd.f32 %v2228, %v2267
    %v2270 = vadd.f32 %v2229, %v2268
    %v2271 = vperm.slane %v2256, 0
    %v2272 = vperm.slane %v2257, 0
    %v2273 = vmul.f32 %v2263, %v2271
    %v2274 = vmul.f32 %v2263, %v2272
    %v2275 = vadd.f32 %v2234, %v2273
    %v2276 = vadd.f32 %v2235, %v2274
    %s2277 = scalar_lea.vmem %s4, 260
    %v2278 = vld [vmem:[%s2277] sm:$0xf]
    %2280 = vset.pattern.permute.xlu0 0
    %2281 = vperm.xlu0 %2280, %v2278
    %v2282 = vpop.permute.xlu0 %2281
    %v2284 = vperm.slane %v2254, 1
    %v2285 = vperm.slane %v2255, 1
    %v2286 = vmul.f32 %v2282, %v2284
    %v2287 = vmul.f32 %v2282, %v2285
    %v2288 = vadd.f32 %v2269, %v2286
    %v2289 = vadd.f32 %v2270, %v2287
    %v2290 = vperm.slane %v2256, 1
    %v2291 = vperm.slane %v2257, 1
    %v2292 = vmul.f32 %v2282, %v2290
    %v2293 = vmul.f32 %v2282, %v2291
    %v2294 = vadd.f32 %v2275, %v2292
    %v2295 = vadd.f32 %v2276, %v2293
    %s2296 = scalar_lea.vmem %s4, 264
    %v2297 = vld [vmem:[%s2296] sm:$0xf]
    %2299 = vset.pattern.permute.xlu0 0
    %2300 = vperm.xlu0 %2299, %v2297
    %v2301 = vpop.permute.xlu0 %2300
    %v2303 = vperm.slane %v2254, 2
    %v2304 = vperm.slane %v2255, 2
    %v2305 = vmul.f32 %v2301, %v2303
    %v2306 = vmul.f32 %v2301, %v2304
    %v2307 = vadd.f32 %v2288, %v2305
    %v2308 = vadd.f32 %v2289, %v2306
    %v2309 = vperm.slane %v2256, 2
    %v2310 = vperm.slane %v2257, 2
    %v2311 = vmul.f32 %v2301, %v2309
    %v2312 = vmul.f32 %v2301, %v2310
    %v2313 = vadd.f32 %v2294, %v2311
    %v2314 = vadd.f32 %v2295, %v2312
    %s2315 = scalar_lea.vmem %s4, 268
    %v2316 = vld [vmem:[%s2315] sm:$0xf]
    %2318 = vset.pattern.permute.xlu0 0
    %2319 = vperm.xlu0 %2318, %v2316
    %v2320 = vpop.permute.xlu0 %2319
    %v2322 = vperm.slane %v2254, 3
    %v2323 = vperm.slane %v2255, 3
    %v2324 = vmul.f32 %v2320, %v2322
    %v2325 = vmul.f32 %v2320, %v2323
    %v2326 = vadd.f32 %v2307, %v2324
    %v2327 = vadd.f32 %v2308, %v2325
    %v2328 = vperm.slane %v2256, 3
    %v2329 = vperm.slane %v2257, 3
    %v2330 = vmul.f32 %v2320, %v2328
    %v2331 = vmul.f32 %v2320, %v2329
    %v2332 = vadd.f32 %v2313, %v2330
    %v2333 = vadd.f32 %v2314, %v2331
    %s2334 = scalar_lea.vmem %s4, 272
    %v2335 = vld [vmem:[%s2334] sm:$0xf]
    %2337 = vset.pattern.permute.xlu0 0
    %2338 = vperm.xlu0 %2337, %v2335
    %v2339 = vpop.permute.xlu0 %2338
    %v2341 = vperm.slane %v2254, 4
    %v2342 = vperm.slane %v2255, 4
    %v2343 = vmul.f32 %v2339, %v2341
    %v2344 = vmul.f32 %v2339, %v2342
    %v2345 = vadd.f32 %v2326, %v2343
    %v2346 = vadd.f32 %v2327, %v2344
    %v2347 = vperm.slane %v2256, 4
    %v2348 = vperm.slane %v2257, 4
    %v2349 = vmul.f32 %v2339, %v2347
    %v2350 = vmul.f32 %v2339, %v2348
    %v2351 = vadd.f32 %v2332, %v2349
    %v2352 = vadd.f32 %v2333, %v2350
    %s2353 = scalar_lea.vmem %s4, 276
    %v2354 = vld [vmem:[%s2353] sm:$0xf]
    %2356 = vset.pattern.permute.xlu0 0
    %2357 = vperm.xlu0 %2356, %v2354
    %v2358 = vpop.permute.xlu0 %2357
    %v2360 = vperm.slane %v2254, 5
    %v2361 = vperm.slane %v2255, 5
    %v2362 = vmul.f32 %v2358, %v2360
    %v2363 = vmul.f32 %v2358, %v2361
    %v2364 = vadd.f32 %v2345, %v2362
    %v2365 = vadd.f32 %v2346, %v2363
    %v2366 = vperm.slane %v2256, 5
    %v2367 = vperm.slane %v2257, 5
    %v2368 = vmul.f32 %v2358, %v2366
    %v2369 = vmul.f32 %v2358, %v2367
    %v2370 = vadd.f32 %v2351, %v2368
    %v2371 = vadd.f32 %v2352, %v2369
    %s2372 = scalar_lea.vmem %s4, 280
    %v2373 = vld [vmem:[%s2372] sm:$0xf]
    %2375 = vset.pattern.permute.xlu0 0
    %2376 = vperm.xlu0 %2375, %v2373
    %v2377 = vpop.permute.xlu0 %2376
    %v2379 = vperm.slane %v2254, 6
    %v2380 = vperm.slane %v2255, 6
    %v2381 = vmul.f32 %v2377, %v2379
    %v2382 = vmul.f32 %v2377, %v2380
    %v2383 = vadd.f32 %v2364, %v2381
    %v2384 = vadd.f32 %v2365, %v2382
    %v2385 = vperm.slane %v2256, 6
    %v2386 = vperm.slane %v2257, 6
    %v2387 = vmul.f32 %v2377, %v2385
    %v2388 = vmul.f32 %v2377, %v2386
    %v2389 = vadd.f32 %v2370, %v2387
    %v2390 = vadd.f32 %v2371, %v2388
    %s2391 = scalar_lea.vmem %s4, 284
    %v2392 = vld [vmem:[%s2391] sm:$0xf]
    %2394 = vset.pattern.permute.xlu0 0
    %2395 = vperm.xlu0 %2394, %v2392
    %v2396 = vpop.permute.xlu0 %2395
    %v2398 = vperm.slane %v2254, 7
    %v2399 = vperm.slane %v2255, 7
    %v2400 = vmul.f32 %v2396, %v2398
    %v2401 = vmul.f32 %v2396, %v2399
    %v2402 = vadd.f32 %v2383, %v2400
    %v2403 = vadd.f32 %v2384, %v2401
    %v2404 = vperm.slane %v2256, 7
    %v2405 = vperm.slane %v2257, 7
    %v2406 = vmul.f32 %v2396, %v2404
    %v2407 = vmul.f32 %v2396, %v2405
    %v2408 = vadd.f32 %v2389, %v2406
    %v2409 = vadd.f32 %v2390, %v2407
    %v2412 = vrot.slane %v2408, 4
    %v2413 = vrot.slane %v2409, 4
    %vm2416 = vcmask 1043456
    %v2417 = vsel %vm2416, %v2402, %v2412
    %v2418 = vsel %vm2416, %v2403, %v2413
    %2419 = vst [vmem:[%s8] sm:$0xff] %v2417
    %2420 = vst [vmem:[%s8 + $0x8] sm:$0xff] %v2418
    %v2421 = vld [vmem:[%s6] sm:$0xff]
    %v2422 = vld [vmem:[%s6 + $0x8] sm:$0xff]
    %v2423 = vmul.f32 %v853, %v2421
    %v2424 = vmul.f32 %v854, %v2422
    %v2425 = vadd.f32 %v2423, %v2424
    %2426 = vadd.xlane.f32.xlu0 %v2425
    %v2427 = vpop.xlane.xlu0 %2426
    %v2428 = vrot.slane %v2427, 4
    %v2429 = vadd.f32 %v2427, %v2428
    %v2430 = vrot.slane %v2429, 2
    %v2431 = vadd.f32 %v2429, %v2430
    %v2432 = vrot.slane %v2431, 1
    %v2433 = vadd.f32 %v2431, %v2432
    %s2434 = scalar_lea.vmem %s6, 16
    %v2435 = vld [vmem:[%s2434] sm:$0xff]
    %v2436 = vld [vmem:[%s2434 + $0x8] sm:$0xff]
    %v2437 = vmul.f32 %v853, %v2435
    %v2438 = vmul.f32 %v854, %v2436
    %v2439 = vadd.f32 %v2437, %v2438
    %2440 = vadd.xlane.f32.xlu0 %v2439
    %v2441 = vpop.xlane.xlu0 %2440
    %v2442 = vrot.slane %v2441, 4
    %v2443 = vadd.f32 %v2441, %v2442
    %v2444 = vrot.slane %v2443, 2
    %v2445 = vadd.f32 %v2443, %v2444
    %v2446 = vrot.slane %v2445, 1
    %v2447 = vadd.f32 %v2445, %v2446
    %s2448 = scalar_lea.vmem %s6, 32
    %v2449 = vld [vmem:[%s2448] sm:$0xff]
    %v2450 = vld [vmem:[%s2448 + $0x8] sm:$0xff]
    %v2451 = vmul.f32 %v853, %v2449
    %v2452 = vmul.f32 %v854, %v2450
    %v2453 = vadd.f32 %v2451, %v2452
    %2454 = vadd.xlane.f32.xlu0 %v2453
    %v2455 = vpop.xlane.xlu0 %2454
    %v2456 = vrot.slane %v2455, 4
    %v2457 = vadd.f32 %v2455, %v2456
    %v2458 = vrot.slane %v2457, 2
    %v2459 = vadd.f32 %v2457, %v2458
    %v2460 = vrot.slane %v2459, 1
    %v2461 = vadd.f32 %v2459, %v2460
    %s2462 = scalar_lea.vmem %s6, 48
    %v2463 = vld [vmem:[%s2462] sm:$0xff]
    %v2464 = vld [vmem:[%s2462 + $0x8] sm:$0xff]
    %v2465 = vmul.f32 %v853, %v2463
    %v2466 = vmul.f32 %v854, %v2464
    %v2467 = vadd.f32 %v2465, %v2466
    %2468 = vadd.xlane.f32.xlu0 %v2467
    %v2469 = vpop.xlane.xlu0 %2468
    %v2470 = vrot.slane %v2469, 4
    %v2471 = vadd.f32 %v2469, %v2470
    %v2472 = vrot.slane %v2471, 2
    %v2473 = vadd.f32 %v2471, %v2472
    %v2474 = vrot.slane %v2473, 1
    %v2475 = vadd.f32 %v2473, %v2474
    %vm2476 = vcmask 7168
    %v2477 = vsel %vm2476, %v2433, %v2447
    %vm2478 = vcmask 15360
    %v2479 = vsel %vm2478, %v2477, %v2461
    %vm2480 = vcmask 23552
    %v2481 = vsel %vm2480, %v2479, %v2475
    %v2482 = vld [vmem:[%s7] sm:$0x1]
    %v2483 = vadd.f32 %v2481, %v2482
    %v2484 = vmul.f32 %v855, %v2421
    %v2485 = vmul.f32 %v856, %v2422
    %v2486 = vadd.f32 %v2484, %v2485
    %2487 = vadd.xlane.f32.xlu0 %v2486
    %v2488 = vpop.xlane.xlu0 %2487
    %v2489 = vrot.slane %v2488, 4
    %v2490 = vadd.f32 %v2488, %v2489
    %v2491 = vrot.slane %v2490, 2
    %v2492 = vadd.f32 %v2490, %v2491
    %v2493 = vrot.slane %v2492, 1
    %v2494 = vadd.f32 %v2492, %v2493
    %v2495 = vmul.f32 %v855, %v2435
    %v2496 = vmul.f32 %v856, %v2436
    %v2497 = vadd.f32 %v2495, %v2496
    %2498 = vadd.xlane.f32.xlu0 %v2497
    %v2499 = vpop.xlane.xlu0 %2498
    %v2500 = vrot.slane %v2499, 4
    %v2501 = vadd.f32 %v2499, %v2500
    %v2502 = vrot.slane %v2501, 2
    %v2503 = vadd.f32 %v2501, %v2502
    %v2504 = vrot.slane %v2503, 1
    %v2505 = vadd.f32 %v2503, %v2504
    %v2506 = vmul.f32 %v855, %v2449
    %v2507 = vmul.f32 %v856, %v2450
    %v2508 = vadd.f32 %v2506, %v2507
    %2509 = vadd.xlane.f32.xlu0 %v2508
    %v2510 = vpop.xlane.xlu0 %2509
    %v2511 = vrot.slane %v2510, 4
    %v2512 = vadd.f32 %v2510, %v2511
    %v2513 = vrot.slane %v2512, 2
    %v2514 = vadd.f32 %v2512, %v2513
    %v2515 = vrot.slane %v2514, 1
    %v2516 = vadd.f32 %v2514, %v2515
    %v2517 = vmul.f32 %v855, %v2463
    %v2518 = vmul.f32 %v856, %v2464
    %v2519 = vadd.f32 %v2517, %v2518
    %2520 = vadd.xlane.f32.xlu0 %v2519
    %v2521 = vpop.xlane.xlu0 %2520
    %v2522 = vrot.slane %v2521, 4
    %v2523 = vadd.f32 %v2521, %v2522
    %v2524 = vrot.slane %v2523, 2
    %v2525 = vadd.f32 %v2523, %v2524
    %v2526 = vrot.slane %v2525, 1
    %v2527 = vadd.f32 %v2525, %v2526
    %v2528 = vsel %vm2476, %v2494, %v2505
    %v2529 = vsel %vm2478, %v2528, %v2516
    %v2530 = vsel %vm2480, %v2529, %v2527
    %v2531 = vadd.f32 %v2530, %v2482
    %v2533 = vrot.slane %v2531, 7
    %vm2535 = vcmask 1040384
    %v2536 = vsel %vm2535, %v2483, %v2533
    %vm2537 = vcmask 25600
    %2538 = vst.msk [vmem:[#allocation2] sm:$0x3] %vm2537, %v2536
    // Predicated region
    $region34: #{meta_aec_forward.1} parent=1 // pred_check
      _
    $region35: #{meta_aec_forward.1} parent=1 // pred_check_branch
      %2540 = sbr.rel (0) target = $region37
    $region36: #{meta_aec_forward.1} parent=1 // pred_region
      _
    $region37: #{meta_aec_forward.1} parent=1 // pred_fallthru
      _
    // Predicated region
    $region38: #{meta_aec_forward.1} parent=1 // pred_check
      _
    $region39: #{meta_aec_forward.1} parent=1 // pred_check_branch
      %2542 = sbr.rel (0) target = $region41
    $region40: #{meta_aec_forward.1} parent=1 // pred_region
      %2544 = vsyncadd [#allocation3], 0
      %s2546 = sshll.u32 [#allocation2], 4
      %s2547 = int_to_ptr.vmem [resolvable:$true] %s2546
      %s2548 = sshll.u32 %s9, 4
      %s2549 = int_to_ptr.hbm [resolvable:$true] %s2548
      %2551 = dma.vmem_to_hbm [thread:$0]  %s2547, 32, %s2549, [#allocation3]
    $region41: #{meta_aec_forward.1} parent=1 // pred_fallthru
      _
    // Predicated region
    $region42: #{meta_aec_forward.1} parent=1 // pred_check
      _
    $region43: #{meta_aec_forward.1} parent=1 // pred_check_branch
      %2553 = sbr.rel (0) target = $region45
    $region44: #{meta_aec_forward.1} parent=1 // pred_region
      _
    $region45: #{meta_aec_forward.1} parent=1 // pred_fallthru
      _
    // Predicated region
    $region46: #{meta_aec_forward.1} parent=1 // pred_check
      _
    $region47: #{meta_aec_forward.1} parent=1 // pred_check_branch
      %2555 = sbr.rel (0) target = $region49
    $region48: #{meta_aec_forward.1} parent=1 // pred_region
      _
    $region49: #{meta_aec_forward.1} parent=1 // pred_fallthru
      _
    // Predicated region
    $region50: #{meta_aec_forward.1} parent=1 // pred_check
      _
    $region51: #{meta_aec_forward.1} parent=1 // pred_check_branch
      %2557 = sbr.rel (0) target = $region53
    $region52: #{meta_aec_forward.1} parent=1 // pred_region
      %2559 = dma.done [#allocation3], 32
    $region53: #{meta_aec_forward.1} parent=1 // pred_fallthru
      _
    // Predicated region
    $region54: #{meta_aec_forward.1} parent=1 // pred_check
      _
    $region55: #{meta_aec_forward.1} parent=1 // pred_check_branch
      %2561 = sbr.rel (0) target = $region57
    $region56: #{meta_aec_forward.1} parent=1 // pred_region
      _
    $region57: #{meta_aec_forward.1} parent=1 // pred_fallthru
      _
    %2562 = vsyncpa [#allocation3], 1

</llo_original>
